<compile_context>
chip_gen: v7x
topology: tpu7x:2x2x1
jax: 0.10.0
libtpu: 0.0.40
codegen_flags: <defaults>
</compile_context>

<pallas_src>
import functools

import jax
import jax.numpy as jnp
from jax.experimental import pallas as pl
from jax.experimental.pallas import tpu as pltpu

BN_EPS = 1e-5
LANE = 128

# Per-generation VMEM budget: ~half of physical (64 MiB v5e/v6e, 32 MiB v7x).
try:
    _VMEM_PHYS = int(getattr(pltpu.get_tpu_info(), "vmem_capacity_bytes",
                             64 * 1024 * 1024))
except Exception:  # pragma: no cover - conservative default (v7x-sized)
    _VMEM_PHYS = 64 * 1024 * 1024
_VMEM_LIMIT = min(max(_VMEM_PHYS // 2, 32 * 1024 * 1024), 96 * 1024 * 1024)
TM_MAX = 512 if _VMEM_LIMIT <= 32 * 1024 * 1024 else 1024


def _round_up(x, m):
    return (x + m - 1) // m * m


def _pick_k_tiling(k):
    """Return (k_pad, tk).  Small K runs as a single full-K step."""
    k_pad = _round_up(k, LANE)
    if k_pad <= 1536:
        return k_pad, k_pad
    for tk in (512, 384, 256, 128):
        if k_pad % tk == 0:
            return k_pad, tk
    return k_pad, LANE


# --------------------------------------------------------------------------
# Fused kernel: conv-as-matmul + training-mode BN + residual + ReLU
# (used whenever the full M x K problem fits the VMEM budget)
# --------------------------------------------------------------------------
def _conv_bn_fused_kernel(p_ref, w_ref, g_ref, b_ref, *rest,
                          inv_m, pad_rows, has_residual, apply_relu):
    if has_residual:
        r_ref, o_ref = rest
    else:
        (o_ref,) = rest

    # bf16 x bf16 -> f32 MXU matmul over the full (padded) K.
    y = jnp.dot(p_ref[...], w_ref[...], preferred_element_type=jnp.float32)

    # Batch statistics over M (padded rows are exactly zero -> sums unaffected).
    mean = jnp.sum(y, axis=0, keepdims=True) * inv_m
    d = y - mean
    ssq = jnp.sum(d * d, axis=0, keepdims=True)
    # Each zero-padded row contributed mean^2 to ssq; remove it exactly.
    var = jnp.maximum((ssq - pad_rows * (mean * mean)) * inv_m, 0.0)

    # Folded BN FMA (gamma is zero in padded lanes -> scale = shift = 0 there).
    scale = g_ref[...] * jax.lax.rsqrt(var + BN_EPS)
    shift = b_ref[...] - mean * scale
    out = y * scale + shift
    if has_residual:
        out = out + r_ref[...].astype(jnp.float32)
    if apply_relu:
        out = jnp.maximum(out, 0.0)
    o_ref[...] = out.astype(o_ref.dtype)


@functools.lru_cache(maxsize=None)
def _conv_bn_fused_call(m_pad, k_pad, cp, tn, m_true, has_residual, apply_relu):
    kernel = functools.partial(
        _conv_bn_fused_kernel,
        inv_m=1.0 / float(m_true),
        pad_rows=float(m_pad - m_true),
        has_residual=has_residual,
        apply_relu=apply_relu)
    in_specs = [
        pl.BlockSpec((m_pad, k_pad), lambda j: (0, 0)),   # patches, resident
        pl.BlockSpec((k_pad, tn), lambda j: (0, j)),      # weight channel tile
        pl.BlockSpec((1, tn), lambda j: (0, j)),          # gamma
        pl.BlockSpec((1, tn), lambda j: (0, j)),          # beta
    ]
    if has_residual:
        in_specs.append(pl.BlockSpec((m_pad, tn), lambda j: (0, j)))
    call = pl.pallas_call(
        kernel,
        grid=(cp // tn,),
        in_specs=in_specs,
        out_specs=pl.BlockSpec((m_pad, tn), lambda j: (0, j)),
        out_shape=jax.ShapeDtypeStruct((m_pad, cp), jnp.bfloat16),
        compiler_params=pltpu.CompilerParams(
            dimension_semantics=("parallel",),
            vmem_limit_bytes=_VMEM_LIMIT),
    )
    return jax.jit(call)


# --------------------------------------------------------------------------
# Fallback path (large M): two-pass M/K-tiled matmul + stats, then BN apply
# --------------------------------------------------------------------------
def _matmul_stats_kernel(p_ref, w_ref, y_ref, ssum_ref, ssq_ref, acc_ref):
    k = pl.program_id(1)

    @pl.when(k == 0)
    def _init():
        acc_ref[...] = jnp.zeros_like(acc_ref)

    acc_ref[...] += jnp.dot(p_ref[...], w_ref[...],
                            preferred_element_type=jnp.float32)

    @pl.when(k == pl.num_programs(1) - 1)
    def _finalize():
        acc = acc_ref[...]
        y_ref[...] = acc.astype(y_ref.dtype)
        ssum_ref[...] = jnp.sum(acc, axis=0, keepdims=True)[None]
        ssq_ref[...] = jnp.sum(acc * acc, axis=0, keepdims=True)[None]


@functools.lru_cache(maxsize=None)
def _matmul_stats_call(m_pad, k_pad, cp, tm, tk):
    grid_m = m_pad // tm
    grid_k = k_pad // tk
    # TODO(synk): for wide real-ResNet channel counts add an output-channel
    #             grid axis so weight tiles are not re-streamed per M tile.
    call = pl.pallas_call(
        _matmul_stats_kernel,
        grid=(grid_m, grid_k),
        in_specs=[
            pl.BlockSpec((tm, tk), lambda i, k: (i, k)),
            pl.BlockSpec((tk, cp), lambda i, k: (k, 0)),
        ],
        out_specs=(
            pl.BlockSpec((tm, cp), lambda i, k: (i, 0)),
            pl.BlockSpec((1, 1, cp), lambda i, k: (i, 0, 0)),
            pl.BlockSpec((1, 1, cp), lambda i, k: (i, 0, 0)),
        ),
        out_shape=(
            jax.ShapeDtypeStruct((m_pad, cp), jnp.bfloat16),
            jax.ShapeDtypeStruct((grid_m, 1, cp), jnp.float32),
            jax.ShapeDtypeStruct((grid_m, 1, cp), jnp.float32),
        ),
        scratch_shapes=[pltpu.VMEM((tm, cp), jnp.float32)],
        compiler_params=pltpu.CompilerParams(
            dimension_semantics=("parallel", "arbitrary"),
            vmem_limit_bytes=_VMEM_LIMIT),
    )
    return jax.jit(call)


def _bn_apply_kernel(y_ref, scale_ref, shift_ref, *rest, has_residual, apply_relu):
    if has_residual:
        res_ref, o_ref = rest
    else:
        (o_ref,) = rest
    out = y_ref[...].astype(jnp.float32) * scale_ref[...] + shift_ref[...]
    if has_residual:
        out = out + res_ref[...].astype(jnp.float32)
    if apply_relu:
        out = jnp.maximum(out, 0.0)
    o_ref[...] = out.astype(o_ref.dtype)


@functools.lru_cache(maxsize=None)
def _bn_apply_call(m_pad, cp, tm, has_residual, apply_relu):
    grid_m = m_pad // tm
    kernel = functools.partial(_bn_apply_kernel,
                               has_residual=has_residual,
                               apply_relu=apply_relu)
    in_specs = [
        pl.BlockSpec((tm, cp), lambda i: (i, 0)),
        pl.BlockSpec((1, cp), lambda i: (0, 0)),
        pl.BlockSpec((1, cp), lambda i: (0, 0)),
    ]
    if has_residual:
        in_specs.append(pl.BlockSpec((tm, cp), lambda i: (i, 0)))
    call = pl.pallas_call(
        kernel,
        grid=(grid_m,),
        in_specs=in_specs,
        out_specs=pl.BlockSpec((tm, cp), lambda i: (i, 0)),
        out_shape=jax.ShapeDtypeStruct((m_pad, cp), jnp.bfloat16),
        compiler_params=pltpu.CompilerParams(
            dimension_semantics=("parallel",),
            vmem_limit_bytes=_VMEM_LIMIT),
    )
    return jax.jit(call)


# --------------------------------------------------------------------------
# Final Linear layer (matmul + bias), single small lane-dense tile
# --------------------------------------------------------------------------
def _linear_kernel(x_ref, w_ref, b_ref, o_ref):
    o_ref[...] = (jnp.dot(x_ref[...], w_ref[...],
                          preferred_element_type=jnp.float32)
                  + b_ref[...]).astype(o_ref.dtype)


@functools.lru_cache(maxsize=None)
def _linear_call(m_pad, k_pad, cp):
    call = pl.pallas_call(
        _linear_kernel,
        grid=(1,),
        in_specs=[pl.BlockSpec((m_pad, k_pad), lambda i: (0, 0)),
                  pl.BlockSpec((k_pad, cp), lambda i: (0, 0)),
                  pl.BlockSpec((1, cp), lambda i: (0, 0))],
        out_specs=pl.BlockSpec((m_pad, cp), lambda i: (0, 0)),
        out_shape=jax.ShapeDtypeStruct((m_pad, cp), jnp.float32),
        compiler_params=pltpu.CompilerParams(vmem_limit_bytes=_VMEM_LIMIT),
    )
    return jax.jit(call)


def linear(x, w, b):
    m, k = x.shape
    cout = w.shape[1]
    m_pad = _round_up(m, 8)
    k_pad = _round_up(k, LANE)
    cp = _round_up(cout, LANE)
    xp = jnp.pad(x.astype(jnp.float32), ((0, m_pad - m), (0, k_pad - k)))
    wp = jnp.pad(w.astype(jnp.float32), ((0, k_pad - k), (0, cp - cout)))
    bp = jnp.pad(b.astype(jnp.float32), (0, cp - cout)).reshape(1, cp)
    out = _linear_call(m_pad, k_pad, cp)(xp, wp, bp)
    return out[:m, :cout]


# --------------------------------------------------------------------------
# Plain-JAX glue: im2col (bf16) for 3x3 conv, padding=1, stride s
# --------------------------------------------------------------------------
def _im2col_3x3(x_nhwc, stride):
    n, h, w, c = x_nhwc.shape
    ho = (h - 1) // stride + 1
    wo = (w - 1) // stride + 1
    xp = jnp.pad(x_nhwc, ((0, 0), (1, 1), (1, 1), (0, 0)))
    cols = []
    for dy in range(3):
        for dx in range(3):
            cols.append(jax.lax.slice(
                xp, (0, dy, dx, 0),
                (n, dy + (ho - 1) * stride + 1, dx + (wo - 1) * stride + 1, c),
                (1, stride, stride, 1)))
    patches = jnp.concatenate(cols, axis=-1)          # (N, Ho, Wo, 9*C)
    return patches.reshape(n * ho * wo, 9 * c), (ho, wo)


# --------------------------------------------------------------------------
# Conv (as matmul) + training-mode BatchNorm (+ residual) (+ ReLU)
# --------------------------------------------------------------------------
def conv_bn(x_nhwc, w_hwio, gamma, beta, *, stride, residual=None, relu=True):
    n, h, w, cin = x_nhwc.shape
    kh, kw, _, cout = w_hwio.shape

    xb = x_nhwc.astype(jnp.bfloat16)                  # bf16 matmul inputs
    if kh == 3:
        patches, (ho, wo) = _im2col_3x3(xb, stride)
    else:                                             # 1x1 shortcut conv
        xs = xb[:, ::stride, ::stride, :]
        ho, wo = xs.shape[1], xs.shape[2]
        patches = xs.reshape(n * ho * wo, cin)

    m, k = patches.shape
    cp = _round_up(cout, LANE)
    k_pad, tk = _pick_k_tiling(k)

    wmat = jnp.pad(w_hwio.reshape(kh * kw * cin, cout).astype(jnp.bfloat16),
                   ((0, k_pad - k), (0, cp - cout)))
    # gamma zero-padded -> scale/shift exactly 0 in padded lanes.
    g_p = jnp.pad(gamma.astype(jnp.float32), (0, cp - cout)).reshape(1, cp)
    b_p = jnp.pad(beta.astype(jnp.float32), (0, cp - cout)).reshape(1, cp)

    # ---------------- fully fused single-call path ----------------
    m_pad = _round_up(m, 16)
    tn = 256 if cp % 256 == 0 else cp                 # 256-wide MXU tiles when possible
    fused_bytes = (2 * m_pad * k_pad * 2              # patches (double-buffered)
                   + 2 * k_pad * tn * 2               # weight tile
                   + 2 * m_pad * tn * 2               # bf16 output tile
                   + (2 * m_pad * tn * 2 if residual is not None else 0)
                   + 3 * m_pad * tn * 4)              # f32 temporaries headroom
    if fused_bytes <= int(0.6 * _VMEM_LIMIT):
        patches_p = jnp.pad(patches, ((0, m_pad - m), (0, k_pad - k)))
        args = [patches_p, wmat, g_p, b_p]
        if residual is not None:
            r = residual.reshape(m, cout).astype(jnp.bfloat16)
            args.append(jnp.pad(r, ((0, m_pad - m), (0, cp - cout))))
        out_pad = _conv_bn_fused_call(m_pad, k_pad, cp, tn, m,
                                      residual is not None, relu)(*args)
        return out_pad[:m, :cout].reshape(n, ho, wo, cout)

    # ---------------- two-pass fallback (large M) ----------------
    tm = min(TM_MAX, _round_up(m, 16))
    m_pad = _round_up(m, tm)
    patches_p = jnp.pad(patches, ((0, m_pad - m), (0, k_pad - k)))

    y_pad, ssum, ssq = _matmul_stats_call(m_pad, k_pad, cp, tm, tk)(patches_p, wmat)
    ssum = jnp.sum(ssum, axis=(0, 1))                 # (Cp,)
    ssq = jnp.sum(ssq, axis=(0, 1))                   # (Cp,)
    mean = ssum / m
    # TODO(synk): E[x^2]-E[x]^2 in f32 can cancel for large-mean activations;
    #             a Chan/Welford merge of per-tile centered stats is safer.
    var = jnp.maximum(ssq / m - mean * mean, 0.0)
    scale_v = (g_p.reshape(cp) * jax.lax.rsqrt(var + BN_EPS)).reshape(1, cp)
    shift_v = b_p - mean.reshape(1, cp) * scale_v

    args = [y_pad, scale_v, shift_v]
    if residual is not None:
        r = residual.reshape(m, cout).astype(jnp.bfloat16)
        args.append(jnp.pad(r, ((0, m_pad - m), (0, cp - cout))))
    out_pad = _bn_apply_call(m_pad, cp, tm, residual is not None, relu)(*args)
    return out_pad[:m, :cout].reshape(n, ho, wo, cout)


# --------------------------------------------------------------------------
# BasicBlock and full ResNet forward
# --------------------------------------------------------------------------
def basic_block(x_nhwc, p):
    stride = p["stride"]
    cin, cout = x_nhwc.shape[-1], p["w1"].shape[-1]
    out1 = conv_bn(x_nhwc, p["w1"], p["g1"], p["b1"], stride=stride, relu=True)
    if stride != 1 or cin != cout:
        shortcut = conv_bn(x_nhwc, p["wsc"], p["gsc"], p["bsc"],
                           stride=stride, relu=False)
    else:
        shortcut = x_nhwc
    return conv_bn(out1, p["w2"], p["g2"], p["b2"], stride=1,
                   residual=shortcut, relu=True)


def resnet_forward(x_nchw, params):
    x = jnp.transpose(x_nchw, (0, 2, 3, 1)).astype(jnp.float32)   # NCHW -> NHWC
    x = conv_bn(x, params["conv1_w"], params["conv1_g"], params["conv1_b"],
                stride=1, relu=True)
    for layer in params["layers"]:
        for blk in layer:
            x = basic_block(x, blk)
    # F.avg_pool2d(out, 4)  (pool in f32; activations are stored bf16)
    n, h, w, c = x.shape
    x = x.astype(jnp.float32).reshape(n, h // 4, 4, w // 4, 4, c).mean(axis=(2, 4))
    # out.view(N, -1) in PyTorch's NCHW order
    x = jnp.transpose(x, (0, 3, 1, 2)).reshape(n, -1)
    return linear(x, params["fc_w"], params["fc_b"])


# --------------------------------------------------------------------------
# Deterministic parameter init (shapes mirroring ResNet.__init__)
# --------------------------------------------------------------------------
def _conv_w(key, kh, kw, cin, cout):
    std = 1.0 / float(jnp.sqrt(kh * kw * cin))
    return jax.random.normal(key, (kh, kw, cin, cout), jnp.float32) * std


def init_params(key, num_blocks=(1, 1, 1, 1), num_classes=10):
    keys = iter(jax.random.split(key, 64))
    params = {
        "conv1_w": _conv_w(next(keys), 3, 3, 1, 64),
        "conv1_g": jnp.ones((64,), jnp.float32),
        "conv1_b": jnp.zeros((64,), jnp.float32),
        "layers": [],
    }
    in_planes = 64
    for out_planes, nb, stride0 in zip((64, 128, 256, 512), num_blocks, (1, 2, 2, 2)):
        layer = []
        for bi in range(nb):
            stride = stride0 if bi == 0 else 1
            blk = {
                "stride": stride,
                "w1": _conv_w(next(keys), 3, 3, in_planes, out_planes),
                "g1": jnp.ones((out_planes,), jnp.float32),
                "b1": jnp.zeros((out_planes,), jnp.float32),
                "w2": _conv_w(next(keys), 3, 3, out_planes, out_planes),
                "g2": jnp.ones((out_planes,), jnp.float32),
                "b2": jnp.zeros((out_planes,), jnp.float32),
            }
            if stride != 1 or in_planes != out_planes:
                blk["wsc"] = _conv_w(next(keys), 1, 1, in_planes, out_planes)
                blk["gsc"] = jnp.ones((out_planes,), jnp.float32)
                blk["bsc"] = jnp.zeros((out_planes,), jnp.float32)
            layer.append(blk)
            in_planes = out_planes
        params["layers"].append(layer)
    params["fc_w"] = (jax.random.normal(next(keys), (512, num_classes), jnp.float32)
                      / float(jnp.sqrt(512.0)))
    params["fc_b"] = jnp.zeros((num_classes,), jnp.float32)
    return params


# --------------------------------------------------------------------------
# Pure-JAX reference (bf16 conv inputs, f32 activations) — self-check
# --------------------------------------------------------------------------
def _ref_conv(x, w, stride, pad):
    return jax.lax.conv_general_dilated(
        x.astype(jnp.bfloat16), w.astype(jnp.bfloat16),
        window_strides=(stride, stride), padding=pad,
        dimension_numbers=("NHWC", "HWIO", "NHWC"),
        preferred_element_type=jnp.float32)


def _ref_bn(y, g, b):
    mean = jnp.mean(y, axis=(0, 1, 2), keepdims=True)
    var = jnp.mean((y - mean) ** 2, axis=(0, 1, 2), keepdims=True)
    return (y - mean) * jax.lax.rsqrt(var + BN_EPS) * g + b


def ref_forward(x_nchw, params):
    x = jnp.transpose(x_nchw, (0, 2, 3, 1)).astype(jnp.float32)
    x = jax.nn.relu(_ref_bn(_ref_conv(x, params["conv1_w"], 1, ((1, 1), (1, 1))),
                            params["conv1_g"], params["conv1_b"]))
    for layer in params["layers"]:
        for p in layer:
            s = p["stride"]
            y1 = jax.nn.relu(_ref_bn(_ref_conv(x, p["w1"], s, ((1, 1), (1, 1))),
                                     p["g1"], p["b1"]))
            y2 = _ref_bn(_ref_conv(y1, p["w2"], 1, ((1, 1), (1, 1))),
                         p["g2"], p["b2"])
            if "wsc" in p:
                sc = _ref_bn(_ref_conv(x, p["wsc"], s, ((0, 0), (0, 0))),
                             p["gsc"], p["bsc"])
            else:
                sc = x
            x = jax.nn.relu(y2 + sc)
    n, h, w, c = x.shape
    x = x.reshape(n, h // 4, 4, w // 4, 4, c).mean(axis=(2, 4))
    x = jnp.transpose(x, (0, 3, 1, 2)).reshape(n, -1)
    return x @ params["fc_w"] + params["fc_b"]


if __name__ == "__main__":
    key = jax.random.PRNGKey(0)
    kx, kp = jax.random.split(key)

    # conv1 expects 1 input channel; 32x32 spatial so the final F.avg_pool2d(4)
    # (layer4 output is 4x4) is well-defined.
    x = jax.random.normal(kx, (2, 1, 32, 32), jnp.float32)
    params = init_params(kp, num_blocks=(1, 1, 1, 1), num_classes=10)

    out = resnet_forward(x, params)
    out = jax.block_until_ready(out)
    assert out.shape == (2, 10), out.shape

    ref = jax.block_until_ready(ref_forward(x, params))
    # Tolerance reflects bf16 MXU inputs + bf16-stored inter-layer activations.
    if not jnp.allclose(out, ref, atol=5e-2, rtol=5e-2):
        err = float(jnp.max(jnp.abs(out - ref)))
        raise AssertionError(
            f"Pallas ResNet output mismatch vs JAX reference (max |diff|={err:.4e})")

    print("KERNEL_OK")
</pallas_src>

<mosaic_0001>
module attributes {stable_mosaic.version = 11 : i64} {
  func.func @_conv_bn_fused_kernel(%arg0: i32, %arg1: memref<2048x128xbf16, #tpu.memory_space<vmem>>, %arg2: memref<128x128xbf16, #tpu.memory_space<vmem>>, %arg3: memref<1x128xf32, #tpu.memory_space<vmem>>, %arg4: memref<1x128xf32, #tpu.memory_space<vmem>>, %arg5: memref<2048x128xbf16, #tpu.memory_space<vmem>>) attributes {dimension_semantics = [#tpu.dimension_semantics<parallel>], iteration_bounds = array<i64: 1>, scalar_prefetch = 0 : i64, scratch_operands = 0 : i64, tpu.core_type = #tpu.core_type<tc>, window_params = [{pipeline_mode = #tpu.pipeline_mode<synchronous>, transform_indices = @transform_0, window_bounds = array<i64: 2048, 128>}, {transform_indices = @transform_1, window_bounds = array<i64: 128, 128>}, {transform_indices = @transform_2, window_bounds = array<i64: 1, 128>}, {transform_indices = @transform_3, window_bounds = array<i64: 1, 128>}, {transform_indices = @transform_4, window_bounds = array<i64: 2048, 128>}]} {
    %c0 = arith.constant 0 : index
    %c0_0 = arith.constant 0 : index
    %0 = vector.load %arg1[%c0, %c0_0] : memref<2048x128xbf16, #tpu.memory_space<vmem>>, vector<2048x128xbf16>
    %c0_1 = arith.constant 0 : index
    %c0_2 = arith.constant 0 : index
    %1 = vector.load %arg2[%c0_1, %c0_2] : memref<128x128xbf16, #tpu.memory_space<vmem>>, vector<128x128xbf16>
    %cst = arith.constant dense<0.000000e+00> : vector<2048x128xf32>
    %2 = tpu.matmul %0, %1, %cst {dimension_numbers = #tpu.dot_dimension_numbers<[1], [0], [0], [1], [0, 0, 1, 1], [], []>} : vector<2048x128xbf16>, vector<128x128xbf16>, vector<2048x128xf32> -> vector<2048x128xf32>
    %cst_3 = arith.constant dense<0.000000e+00> : vector<128xf32>
    %3 = vector.multi_reduction <add>, %2, %cst_3 [0] : vector<2048x128xf32> to vector<128xf32>
    %4 = vector.shape_cast %3 : vector<128xf32> to vector<1x128xf32>
    %cst_4 = arith.constant 4.8828125E-4 : f32
    %5 = vector.broadcast %cst_4 : f32 to vector<1x128xf32>
    %6 = arith.mulf %4, %5 : vector<1x128xf32>
    %7 = vector.broadcast %6 : vector<1x128xf32> to vector<2048x128xf32>
    %8 = arith.subf %2, %7 : vector<2048x128xf32>
    %9 = arith.mulf %8, %8 : vector<2048x128xf32>
    %cst_5 = arith.constant dense<0.000000e+00> : vector<128xf32>
    %10 = vector.multi_reduction <add>, %9, %cst_5 [0] : vector<2048x128xf32> to vector<128xf32>
    %11 = vector.shape_cast %10 : vector<128xf32> to vector<1x128xf32>
    %12 = arith.mulf %6, %6 : vector<1x128xf32>
    %cst_6 = arith.constant 0.000000e+00 : f32
    %13 = vector.broadcast %cst_6 : f32 to vector<1x128xf32>
    %14 = arith.mulf %13, %12 : vector<1x128xf32>
    %15 = arith.subf %11, %14 : vector<1x128xf32>
    %cst_7 = arith.constant 4.8828125E-4 : f32
    %16 = vector.broadcast %cst_7 : f32 to vector<1x128xf32>
    %17 = arith.mulf %15, %16 : vector<1x128xf32>
    %cst_8 = arith.constant 0.000000e+00 : f32
    %18 = vector.broadcast %cst_8 : f32 to vector<1x128xf32>
    %19 = arith.maximumf %17, %18 : vector<1x128xf32>
    %c0_9 = arith.constant 0 : index
    %c0_10 = arith.constant 0 : index
    %20 = vector.load %arg3[%c0_9, %c0_10] : memref<1x128xf32, #tpu.memory_space<vmem>>, vector<1x128xf32>
    %cst_11 = arith.constant 9.99999974E-6 : f32
    %21 = vector.broadcast %cst_11 : f32 to vector<1x128xf32>
    %22 = arith.addf %19, %21 : vector<1x128xf32>
    %23 = math.rsqrt %22 : vector<1x128xf32>
    %24 = arith.mulf %20, %23 : vector<1x128xf32>
    %c0_12 = arith.constant 0 : index
    %c0_13 = arith.constant 0 : index
    %25 = vector.load %arg4[%c0_12, %c0_13] : memref<1x128xf32, #tpu.memory_space<vmem>>, vector<1x128xf32>
    %26 = arith.mulf %6, %24 : vector<1x128xf32>
    %27 = arith.subf %25, %26 : vector<1x128xf32>
    %28 = vector.broadcast %24 : vector<1x128xf32> to vector<2048x128xf32>
    %29 = arith.mulf %2, %28 : vector<2048x128xf32>
    %30 = vector.broadcast %27 : vector<1x128xf32> to vector<2048x128xf32>
    %31 = arith.addf %29, %30 : vector<2048x128xf32>
    %cst_14 = arith.constant 0.000000e+00 : f32
    %32 = vector.broadcast %cst_14 : f32 to vector<2048x128xf32>
    %33 = arith.maximumf %31, %32 : vector<2048x128xf32>
    %34 = arith.truncf %33 : vector<2048x128xf32> to vector<2048x128xbf16>
    %c0_15 = arith.constant 0 : index
    %c0_16 = arith.constant 0 : index
    %35 = vector.load %arg5[%c0_15, %c0_16] : memref<2048x128xbf16, #tpu.memory_space<vmem>>, vector<2048x128xbf16>
    tpu.vector_store %arg5[%c0_15, %c0_16], %34 {strides = array<i32>} : memref<2048x128xbf16, #tpu.memory_space<vmem>>, vector<2048x128xbf16>,
    return
  }
  func.func @transform_0(%arg0: i32) -> (i32, i32) {
    %c0_i32 = arith.constant 0 : i32
    %c0_i32_0 = arith.constant 0 : i32
    %c0_i32_1 = arith.constant 0 : i32
    return %c0_i32, %c0_i32_0 : i32, i32
  }
  func.func @transform_1(%arg0: i32) -> (i32, i32) {
    %c0_i32 = arith.constant 0 : i32
    %c0_i32_0 = arith.constant 0 : i32
    return %c0_i32, %arg0 : i32, i32
  }
  func.func @transform_2(%arg0: i32) -> (i32, i32) {
    %c0_i32 = arith.constant 0 : i32
    %c0_i32_0 = arith.constant 0 : i32
    return %c0_i32, %arg0 : i32, i32
  }
  func.func @transform_3(%arg0: i32) -> (i32, i32) {
    %c0_i32 = arith.constant 0 : i32
    %c0_i32_0 = arith.constant 0 : i32
    return %c0_i32, %arg0 : i32, i32
  }
  func.func @transform_4(%arg0: i32) -> (i32, i32) {
    %c0_i32 = arith.constant 0 : i32
    %c0_i32_0 = arith.constant 0 : i32
    return %c0_i32, %arg0 : i32, i32
  }
}

</mosaic_0001>

<llo_original>
// kernel: tpu_custom_call.1
$region0: #{tpu_custom_call.1}
  #allocation0 [shape = 'u32[]', space=smem, size = 0x4, offset = 0x4, fixed_abs, tag = 'smem constant byte address 0x4 - core index']
  #allocation1 [shape = 'u32[144,128]{1,0:T(1,128)}', space=vmem, size = 0x12000, scoped, tag = 'internal scratch']
  %s0 = inlined_call_operand.hbm [shape: bf16[2048,128], index: 0, kind: input, shape index: {}]
  %s1 = inlined_call_operand.hbm [shape: bf16[128,128], index: 1, kind: input, shape index: {}]
  %s2 = inlined_call_operand.vmem [shape: f32[1,128], index: 2, kind: input, shape index: {}]
  %s3 = inlined_call_operand.vmem [shape: f32[1,128], index: 3, kind: input, shape index: {}]
  %s4 = inlined_call_operand.hbm [shape: bf16[2048,128], index: 4, kind: output, shape index: {}]
  %s5 = sld [smem:[#allocation0]]
  $region34: #{tpu_custom_call.1} parent=0
    _
  %s7 = ssub.s32 1, %s5
  %s8 = scalar_select 0, %s7, %s5
  $region1: #{tpu_custom_call.1} parent=0
    #allocation2 [shape = 'u8[524288]{0}', space=vmem, size = 0x80000, scoped, tag = 'input window, operand 0, single buffered']
    #allocation3 [shape = 's32[1]{0}', space=sflag, size = 0x4, scoped, tag = 'scoped memory for tpu_custom_call.1']
    #allocation4 [shape = 's32[1]{0}', space=sflag, size = 0x4, scoped, tag = 'scoped memory for tpu_custom_call.1']
    #allocation5 [shape = 'u8[32768]{0}', space=vmem, size = 0x8000, scoped, tag = 'input window, operand 1, single buffered']
    #allocation6 [shape = 's32[1]{0}', space=sflag, size = 0x4, scoped, tag = 'scoped memory for tpu_custom_call.1']
    #allocation7 [shape = 'u8[524288]{0}', space=vmem, size = 0x80000, scoped, tag = 'output window, operand 0, single buffered']
    %9 = vsyncpa [#allocation3], 0
    %10 = vsyncpa [#allocation6], 0
    %11 = vsyncpa [#allocation4], 0
    // Predicated region
    $region2: #{tpu_custom_call.1} parent=1 // pred_check
      _
    $region3: #{tpu_custom_call.1} parent=1 // pred_check_branch
      %13 = sbr.rel (0) target = $region5
    $region4: #{tpu_custom_call.1} parent=1 // pred_region
      %s15 = ssub.s32 16384, 16384
      %16 = vsyncadd [#allocation3], %s15
      %s17 = sshll.u32 [#allocation2], 4
      %s18 = int_to_ptr.vmem [resolvable:$true] %s17
      %23 = dma.hbm_to_vmem [thread:$0]  %s0, 16384, %s18, [#allocation3], 64, 64, 4
    $region5: #{tpu_custom_call.1} parent=1 // pred_fallthru
      _
    // Predicated region
    $region6: #{tpu_custom_call.1} parent=1 // pred_check
      _
    $region7: #{tpu_custom_call.1} parent=1 // pred_check_branch
      %25 = sbr.rel (0) target = $region9
    $region8: #{tpu_custom_call.1} parent=1 // pred_region
      %s27 = ssub.s32 1024, 1024
      %28 = vsyncadd [#allocation6], %s27
      %s29 = sshll.u32 [#allocation5], 4
      %s30 = int_to_ptr.vmem [resolvable:$true] %s29
      %35 = dma.hbm_to_vmem [thread:$0]  %s1, 1024, %s30, [#allocation6], 64, 64, 4
    $region9: #{tpu_custom_call.1} parent=1 // pred_fallthru
      _
    // Predicated region
    $region10: #{tpu_custom_call.1} parent=1 // pred_check
      _
    $region11: #{tpu_custom_call.1} parent=1 // pred_check_branch
      %37 = sbr.rel (0) target = $region13
    $region12: #{tpu_custom_call.1} parent=1 // pred_region
      _
    $region13: #{tpu_custom_call.1} parent=1 // pred_fallthru
      _
    // Predicated region
    $region14: #{tpu_custom_call.1} parent=1 // pred_check
      _
    $region15: #{tpu_custom_call.1} parent=1 // pred_check_branch
      %39 = sbr.rel (0) target = $region17
    $region16: #{tpu_custom_call.1} parent=1 // pred_region
      _
    $region17: #{tpu_custom_call.1} parent=1 // pred_fallthru
      _
    // Predicated region
    $region18: #{tpu_custom_call.1} parent=1 // pred_check
      _
    $region19: #{tpu_custom_call.1} parent=1 // pred_check_branch
      %41 = sbr.rel (0) target = $region21
    $region20: #{tpu_custom_call.1} parent=1 // pred_region
      %42 = dma.done [#allocation3], 16384
    $region21: #{tpu_custom_call.1} parent=1 // pred_fallthru
      _
    // Predicated region
    $region22: #{tpu_custom_call.1} parent=1 // pred_check
      _
    $region23: #{tpu_custom_call.1} parent=1 // pred_check_branch
      %44 = sbr.rel (0) target = $region25
    $region24: #{tpu_custom_call.1} parent=1 // pred_region
      %45 = dma.done [#allocation6], 1024
    $region25: #{tpu_custom_call.1} parent=1 // pred_fallthru
      _
    %v47 = vld [vmem:[#allocation2] sm:$0xf]
    %v48 = vld [vmem:[#allocation2 + $0x4] sm:$0xf]
    %v49 = vld [vmem:[#allocation2 + $0x8] sm:$0xf]
    %v50 = vld [vmem:[#allocation2 + $0xc] sm:$0xf]
    %v51 = vld [vmem:[#allocation2 + $0x10] sm:$0xf]
    %v52 = vld [vmem:[#allocation2 + $0x14] sm:$0xf]
    %v53 = vld [vmem:[#allocation2 + $0x18] sm:$0xf]
    %v54 = vld [vmem:[#allocation2 + $0x1c] sm:$0xf]
    %v55 = vld [vmem:[#allocation2 + $0x20] sm:$0xf]
    %v56 = vld [vmem:[#allocation2 + $0x24] sm:$0xf]
    %v57 = vld [vmem:[#allocation2 + $0x28] sm:$0xf]
    %v58 = vld [vmem:[#allocation2 + $0x2c] sm:$0xf]
    %v59 = vld [vmem:[#allocation2 + $0x30] sm:$0xf]
    %v60 = vld [vmem:[#allocation2 + $0x34] sm:$0xf]
    %v61 = vld [vmem:[#allocation2 + $0x38] sm:$0xf]
    %v62 = vld [vmem:[#allocation2 + $0x3c] sm:$0xf]
    %v63 = vld [vmem:[#allocation2 + $0x40] sm:$0xf]
    %v64 = vld [vmem:[#allocation2 + $0x44] sm:$0xf]
    %v65 = vld [vmem:[#allocation2 + $0x48] sm:$0xf]
    %v66 = vld [vmem:[#allocation2 + $0x4c] sm:$0xf]
    %v67 = vld [vmem:[#allocation2 + $0x50] sm:$0xf]
    %v68 = vld [vmem:[#allocation2 + $0x54] sm:$0xf]
    %v69 = vld [vmem:[#allocation2 + $0x58] sm:$0xf]
    %v70 = vld [vmem:[#allocation2 + $0x5c] sm:$0xf]
    %v71 = vld [vmem:[#allocation2 + $0x60] sm:$0xf]
    %v72 = vld [vmem:[#allocation2 + $0x64] sm:$0xf]
    %v73 = vld [vmem:[#allocation2 + $0x68] sm:$0xf]
    %v74 = vld [vmem:[#allocation2 + $0x6c] sm:$0xf]
    %v75 = vld [vmem:[#allocation2 + $0x70] sm:$0xf]
    %v76 = vld [vmem:[#allocation2 + $0x74] sm:$0xf]
    %v77 = vld [vmem:[#allocation2 + $0x78] sm:$0xf]
    %v78 = vld [vmem:[#allocation2 + $0x7c] sm:$0xf]
    %v79 = vld [vmem:[#allocation2 + $0x80] sm:$0xf]
    %v80 = vld [vmem:[#allocation2 + $0x84] sm:$0xf]
    %v81 = vld [vmem:[#allocation2 + $0x88] sm:$0xf]
    %v82 = vld [vmem:[#allocation2 + $0x8c] sm:$0xf]
    %v83 = vld [vmem:[#allocation2 + $0x90] sm:$0xf]
    %v84 = vld [vmem:[#allocation2 + $0x94] sm:$0xf]
    %v85 = vld [vmem:[#allocation2 + $0x98] sm:$0xf]
    %v86 = vld [vmem:[#allocation2 + $0x9c] sm:$0xf]
    %v87 = vld [vmem:[#allocation2 + $0xa0] sm:$0xf]
    %v88 = vld [vmem:[#allocation2 + $0xa4] sm:$0xf]
    %v89 = vld [vmem:[#allocation2 + $0xa8] sm:$0xf]
    %v90 = vld [vmem:[#allocation2 + $0xac] sm:$0xf]
    %v91 = vld [vmem:[#allocation2 + $0xb0] sm:$0xf]
    %v92 = vld [vmem:[#allocation2 + $0xb4] sm:$0xf]
    %v93 = vld [vmem:[#allocation2 + $0xb8] sm:$0xf]
    %v94 = vld [vmem:[#allocation2 + $0xbc] sm:$0xf]
    %v95 = vld [vmem:[#allocation2 + $0xc0] sm:$0xf]
    %v96 = vld [vmem:[#allocation2 + $0xc4] sm:$0xf]
    %v97 = vld [vmem:[#allocation2 + $0xc8] sm:$0xf]
    %v98 = vld [vmem:[#allocation2 + $0xcc] sm:$0xf]
    %v99 = vld [vmem:[#allocation2 + $0xd0] sm:$0xf]
    %v100 = vld [vmem:[#allocation2 + $0xd4] sm:$0xf]
    %v101 = vld [vmem:[#allocation2 + $0xd8] sm:$0xf]
    %v102 = vld [vmem:[#allocation2 + $0xdc] sm:$0xf]
    %v103 = vld [vmem:[#allocation2 + $0xe0] sm:$0xf]
    %v104 = vld [vmem:[#allocation2 + $0xe4] sm:$0xf]
    %v105 = vld [vmem:[#allocation2 + $0xe8] sm:$0xf]
    %v106 = vld [vmem:[#allocation2 + $0xec] sm:$0xf]
    %v107 = vld [vmem:[#allocation2 + $0xf0] sm:$0xf]
    %v108 = vld [vmem:[#allocation2 + $0xf4] sm:$0xf]
    %v109 = vld [vmem:[#allocation2 + $0xf8] sm:$0xf]
    %v110 = vld [vmem:[#allocation2 + $0xfc] sm:$0xf]
    %v111 = vld [vmem:[#allocation2 + $0x100] sm:$0xf]
    %v112 = vld [vmem:[#allocation2 + $0x104] sm:$0xf]
    %v113 = vld [vmem:[#allocation2 + $0x108] sm:$0xf]
    %v114 = vld [vmem:[#allocation2 + $0x10c] sm:$0xf]
    %v115 = vld [vmem:[#allocation2 + $0x110] sm:$0xf]
    %v116 = vld [vmem:[#allocation2 + $0x114] sm:$0xf]
    %v117 = vld [vmem:[#allocation2 + $0x118] sm:$0xf]
    %v118 = vld [vmem:[#allocation2 + $0x11c] sm:$0xf]
    %v119 = vld [vmem:[#allocation2 + $0x120] sm:$0xf]
    %v120 = vld [vmem:[#allocation2 + $0x124] sm:$0xf]
    %v121 = vld [vmem:[#allocation2 + $0x128] sm:$0xf]
    %v122 = vld [vmem:[#allocation2 + $0x12c] sm:$0xf]
    %v123 = vld [vmem:[#allocation2 + $0x130] sm:$0xf]
    %v124 = vld [vmem:[#allocation2 + $0x134] sm:$0xf]
    %v125 = vld [vmem:[#allocation2 + $0x138] sm:$0xf]
    %v126 = vld [vmem:[#allocation2 + $0x13c] sm:$0xf]
    %v127 = vld [vmem:[#allocation2 + $0x140] sm:$0xf]
    %v128 = vld [vmem:[#allocation2 + $0x144] sm:$0xf]
    %v129 = vld [vmem:[#allocation2 + $0x148] sm:$0xf]
    %v130 = vld [vmem:[#allocation2 + $0x14c] sm:$0xf]
    %v131 = vld [vmem:[#allocation2 + $0x150] sm:$0xf]
    %v132 = vld [vmem:[#allocation2 + $0x154] sm:$0xf]
    %v133 = vld [vmem:[#allocation2 + $0x158] sm:$0xf]
    %v134 = vld [vmem:[#allocation2 + $0x15c] sm:$0xf]
    %v135 = vld [vmem:[#allocation2 + $0x160] sm:$0xf]
    %v136 = vld [vmem:[#allocation2 + $0x164] sm:$0xf]
    %v137 = vld [vmem:[#allocation2 + $0x168] sm:$0xf]
    %v138 = vld [vmem:[#allocation2 + $0x16c] sm:$0xf]
    %v139 = vld [vmem:[#allocation2 + $0x170] sm:$0xf]
    %v140 = vld [vmem:[#allocation2 + $0x174] sm:$0xf]
    %v141 = vld [vmem:[#allocation2 + $0x178] sm:$0xf]
    %v142 = vld [vmem:[#allocation2 + $0x17c] sm:$0xf]
    %v143 = vld [vmem:[#allocation2 + $0x180] sm:$0xf]
    %v144 = vld [vmem:[#allocation2 + $0x184] sm:$0xf]
    %v145 = vld [vmem:[#allocation2 + $0x188] sm:$0xf]
    %v146 = vld [vmem:[#allocation2 + $0x18c] sm:$0xf]
    %v147 = vld [vmem:[#allocation2 + $0x190] sm:$0xf]
    %v148 = vld [vmem:[#allocation2 + $0x194] sm:$0xf]
    %v149 = vld [vmem:[#allocation2 + $0x198] sm:$0xf]
    %v150 = vld [vmem:[#allocation2 + $0x19c] sm:$0xf]
    %v151 = vld [vmem:[#allocation2 + $0x1a0] sm:$0xf]
    %v152 = vld [vmem:[#allocation2 + $0x1a4] sm:$0xf]
    %v153 = vld [vmem:[#allocation2 + $0x1a8] sm:$0xf]
    %v154 = vld [vmem:[#allocation2 + $0x1ac] sm:$0xf]
    %v155 = vld [vmem:[#allocation2 + $0x1b0] sm:$0xf]
    %v156 = vld [vmem:[#allocation2 + $0x1b4] sm:$0xf]
    %v157 = vld [vmem:[#allocation2 + $0x1b8] sm:$0xf]
    %v158 = vld [vmem:[#allocation2 + $0x1bc] sm:$0xf]
    %v159 = vld [vmem:[#allocation2 + $0x1c0] sm:$0xf]
    %v160 = vld [vmem:[#allocation2 + $0x1c4] sm:$0xf]
    %v161 = vld [vmem:[#allocation2 + $0x1c8] sm:$0xf]
    %v162 = vld [vmem:[#allocation2 + $0x1cc] sm:$0xf]
    %v163 = vld [vmem:[#allocation2 + $0x1d0] sm:$0xf]
    %v164 = vld [vmem:[#allocation2 + $0x1d4] sm:$0xf]
    %v165 = vld [vmem:[#allocation2 + $0x1d8] sm:$0xf]
    %v166 = vld [vmem:[#allocation2 + $0x1dc] sm:$0xf]
    %v167 = vld [vmem:[#allocation2 + $0x1e0] sm:$0xf]
    %v168 = vld [vmem:[#allocation2 + $0x1e4] sm:$0xf]
    %v169 = vld [vmem:[#allocation2 + $0x1e8] sm:$0xf]
    %v170 = vld [vmem:[#allocation2 + $0x1ec] sm:$0xf]
    %v171 = vld [vmem:[#allocation2 + $0x1f0] sm:$0xf]
    %v172 = vld [vmem:[#allocation2 + $0x1f4] sm:$0xf]
    %v173 = vld [vmem:[#allocation2 + $0x1f8] sm:$0xf]
    %v174 = vld [vmem:[#allocation2 + $0x1fc] sm:$0xf]
    %v175 = vld [vmem:[#allocation2 + $0x200] sm:$0xf]
    %v176 = vld [vmem:[#allocation2 + $0x204] sm:$0xf]
    %v177 = vld [vmem:[#allocation2 + $0x208] sm:$0xf]
    %v178 = vld [vmem:[#allocation2 + $0x20c] sm:$0xf]
    %v179 = vld [vmem:[#allocation2 + $0x210] sm:$0xf]
    %v180 = vld [vmem:[#allocation2 + $0x214] sm:$0xf]
    %v181 = vld [vmem:[#allocation2 + $0x218] sm:$0xf]
    %v182 = vld [vmem:[#allocation2 + $0x21c] sm:$0xf]
    %v183 = vld [vmem:[#allocation2 + $0x220] sm:$0xf]
    %v184 = vld [vmem:[#allocation2 + $0x224] sm:$0xf]
    %v185 = vld [vmem:[#allocation2 + $0x228] sm:$0xf]
    %v186 = vld [vmem:[#allocation2 + $0x22c] sm:$0xf]
    %v187 = vld [vmem:[#allocation2 + $0x230] sm:$0xf]
    %v188 = vld [vmem:[#allocation2 + $0x234] sm:$0xf]
    %v189 = vld [vmem:[#allocation2 + $0x238] sm:$0xf]
    %v190 = vld [vmem:[#allocation2 + $0x23c] sm:$0xf]
    %v191 = vld [vmem:[#allocation2 + $0x240] sm:$0xf]
    %v192 = vld [vmem:[#allocation2 + $0x244] sm:$0xf]
    %v193 = vld [vmem:[#allocation2 + $0x248] sm:$0xf]
    %v194 = vld [vmem:[#allocation2 + $0x24c] sm:$0xf]
    %v195 = vld [vmem:[#allocation2 + $0x250] sm:$0xf]
    %v196 = vld [vmem:[#allocation2 + $0x254] sm:$0xf]
    %v197 = vld [vmem:[#allocation2 + $0x258] sm:$0xf]
    %v198 = vld [vmem:[#allocation2 + $0x25c] sm:$0xf]
    %v199 = vld [vmem:[#allocation2 + $0x260] sm:$0xf]
    %v200 = vld [vmem:[#allocation2 + $0x264] sm:$0xf]
    %v201 = vld [vmem:[#allocation2 + $0x268] sm:$0xf]
    %v202 = vld [vmem:[#allocation2 + $0x26c] sm:$0xf]
    %v203 = vld [vmem:[#allocation2 + $0x270] sm:$0xf]
    %v204 = vld [vmem:[#allocation2 + $0x274] sm:$0xf]
    %v205 = vld [vmem:[#allocation2 + $0x278] sm:$0xf]
    %v206 = vld [vmem:[#allocation2 + $0x27c] sm:$0xf]
    %v207 = vld [vmem:[#allocation2 + $0x280] sm:$0xf]
    %v208 = vld [vmem:[#allocation2 + $0x284] sm:$0xf]
    %v209 = vld [vmem:[#allocation2 + $0x288] sm:$0xf]
    %v210 = vld [vmem:[#allocation2 + $0x28c] sm:$0xf]
    %v211 = vld [vmem:[#allocation2 + $0x290] sm:$0xf]
    %v212 = vld [vmem:[#allocation2 + $0x294] sm:$0xf]
    %v213 = vld [vmem:[#allocation2 + $0x298] sm:$0xf]
    %v214 = vld [vmem:[#allocation2 + $0x29c] sm:$0xf]
    %v215 = vld [vmem:[#allocation2 + $0x2a0] sm:$0xf]
    %v216 = vld [vmem:[#allocation2 + $0x2a4] sm:$0xf]
    %v217 = vld [vmem:[#allocation2 + $0x2a8] sm:$0xf]
    %v218 = vld [vmem:[#allocation2 + $0x2ac] sm:$0xf]
    %v219 = vld [vmem:[#allocation2 + $0x2b0] sm:$0xf]
    %v220 = vld [vmem:[#allocation2 + $0x2b4] sm:$0xf]
    %v221 = vld [vmem:[#allocation2 + $0x2b8] sm:$0xf]
    %v222 = vld [vmem:[#allocation2 + $0x2bc] sm:$0xf]
    %v223 = vld [vmem:[#allocation2 + $0x2c0] sm:$0xf]
    %v224 = vld [vmem:[#allocation2 + $0x2c4] sm:$0xf]
    %v225 = vld [vmem:[#allocation2 + $0x2c8] sm:$0xf]
    %v226 = vld [vmem:[#allocation2 + $0x2cc] sm:$0xf]
    %v227 = vld [vmem:[#allocation2 + $0x2d0] sm:$0xf]
    %v228 = vld [vmem:[#allocation2 + $0x2d4] sm:$0xf]
    %v229 = vld [vmem:[#allocation2 + $0x2d8] sm:$0xf]
    %v230 = vld [vmem:[#allocation2 + $0x2dc] sm:$0xf]
    %v231 = vld [vmem:[#allocation2 + $0x2e0] sm:$0xf]
    %v232 = vld [vmem:[#allocation2 + $0x2e4] sm:$0xf]
    %v233 = vld [vmem:[#allocation2 + $0x2e8] sm:$0xf]
    %v234 = vld [vmem:[#allocation2 + $0x2ec] sm:$0xf]
    %v235 = vld [vmem:[#allocation2 + $0x2f0] sm:$0xf]
    %v236 = vld [vmem:[#allocation2 + $0x2f4] sm:$0xf]
    %v237 = vld [vmem:[#allocation2 + $0x2f8] sm:$0xf]
    %v238 = vld [vmem:[#allocation2 + $0x2fc] sm:$0xf]
    %v239 = vld [vmem:[#allocation2 + $0x300] sm:$0xf]
    %v240 = vld [vmem:[#allocation2 + $0x304] sm:$0xf]
    %v241 = vld [vmem:[#allocation2 + $0x308] sm:$0xf]
    %v242 = vld [vmem:[#allocation2 + $0x30c] sm:$0xf]
    %v243 = vld [vmem:[#allocation2 + $0x310] sm:$0xf]
    %v244 = vld [vmem:[#allocation2 + $0x314] sm:$0xf]
    %v245 = vld [vmem:[#allocation2 + $0x318] sm:$0xf]
    %v246 = vld [vmem:[#allocation2 + $0x31c] sm:$0xf]
    %v247 = vld [vmem:[#allocation2 + $0x320] sm:$0xf]
    %v248 = vld [vmem:[#allocation2 + $0x324] sm:$0xf]
    %v249 = vld [vmem:[#allocation2 + $0x328] sm:$0xf]
    %v250 = vld [vmem:[#allocation2 + $0x32c] sm:$0xf]
    %v251 = vld [vmem:[#allocation2 + $0x330] sm:$0xf]
    %v252 = vld [vmem:[#allocation2 + $0x334] sm:$0xf]
    %v253 = vld [vmem:[#allocation2 + $0x338] sm:$0xf]
    %v254 = vld [vmem:[#allocation2 + $0x33c] sm:$0xf]
    %v255 = vld [vmem:[#allocation2 + $0x340] sm:$0xf]
    %v256 = vld [vmem:[#allocation2 + $0x344] sm:$0xf]
    %v257 = vld [vmem:[#allocation2 + $0x348] sm:$0xf]
    %v258 = vld [vmem:[#allocation2 + $0x34c] sm:$0xf]
    %v259 = vld [vmem:[#allocation2 + $0x350] sm:$0xf]
    %v260 = vld [vmem:[#allocation2 + $0x354] sm:$0xf]
    %v261 = vld [vmem:[#allocation2 + $0x358] sm:$0xf]
    %v262 = vld [vmem:[#allocation2 + $0x35c] sm:$0xf]
    %v263 = vld [vmem:[#allocation2 + $0x360] sm:$0xf]
    %v264 = vld [vmem:[#allocation2 + $0x364] sm:$0xf]
    %v265 = vld [vmem:[#allocation2 + $0x368] sm:$0xf]
    %v266 = vld [vmem:[#allocation2 + $0x36c] sm:$0xf]
    %v267 = vld [vmem:[#allocation2 + $0x370] sm:$0xf]
    %v268 = vld [vmem:[#allocation2 + $0x374] sm:$0xf]
    %v269 = vld [vmem:[#allocation2 + $0x378] sm:$0xf]
    %v270 = vld [vmem:[#allocation2 + $0x37c] sm:$0xf]
    %v271 = vld [vmem:[#allocation2 + $0x380] sm:$0xf]
    %v272 = vld [vmem:[#allocation2 + $0x384] sm:$0xf]
    %v273 = vld [vmem:[#allocation2 + $0x388] sm:$0xf]
    %v274 = vld [vmem:[#allocation2 + $0x38c] sm:$0xf]
    %v275 = vld [vmem:[#allocation2 + $0x390] sm:$0xf]
    %v276 = vld [vmem:[#allocation2 + $0x394] sm:$0xf]
    %v277 = vld [vmem:[#allocation2 + $0x398] sm:$0xf]
    %v278 = vld [vmem:[#allocation2 + $0x39c] sm:$0xf]
    %v279 = vld [vmem:[#allocation2 + $0x3a0] sm:$0xf]
    %v280 = vld [vmem:[#allocation2 + $0x3a4] sm:$0xf]
    %v281 = vld [vmem:[#allocation2 + $0x3a8] sm:$0xf]
    %v282 = vld [vmem:[#allocation2 + $0x3ac] sm:$0xf]
    %v283 = vld [vmem:[#allocation2 + $0x3b0] sm:$0xf]
    %v284 = vld [vmem:[#allocation2 + $0x3b4] sm:$0xf]
    %v285 = vld [vmem:[#allocation2 + $0x3b8] sm:$0xf]
    %v286 = vld [vmem:[#allocation2 + $0x3bc] sm:$0xf]
    %v287 = vld [vmem:[#allocation2 + $0x3c0] sm:$0xf]
    %v288 = vld [vmem:[#allocation2 + $0x3c4] sm:$0xf]
    %v289 = vld [vmem:[#allocation2 + $0x3c8] sm:$0xf]
    %v290 = vld [vmem:[#allocation2 + $0x3cc] sm:$0xf]
    %v291 = vld [vmem:[#allocation2 + $0x3d0] sm:$0xf]
    %v292 = vld [vmem:[#allocation2 + $0x3d4] sm:$0xf]
    %v293 = vld [vmem:[#allocation2 + $0x3d8] sm:$0xf]
    %v294 = vld [vmem:[#allocation2 + $0x3dc] sm:$0xf]
    %v295 = vld [vmem:[#allocation2 + $0x3e0] sm:$0xf]
    %v296 = vld [vmem:[#allocation2 + $0x3e4] sm:$0xf]
    %v297 = vld [vmem:[#allocation2 + $0x3e8] sm:$0xf]
    %v298 = vld [vmem:[#allocation2 + $0x3ec] sm:$0xf]
    %v299 = vld [vmem:[#allocation2 + $0x3f0] sm:$0xf]
    %v300 = vld [vmem:[#allocation2 + $0x3f4] sm:$0xf]
    %v301 = vld [vmem:[#allocation2 + $0x3f8] sm:$0xf]
    %v302 = vld [vmem:[#allocation2 + $0x3fc] sm:$0xf]
    %v303 = vld [vmem:[#allocation5] sm:$0xf]
    %v304 = vld [vmem:[#allocation5 + $0x4] sm:$0xf]
    %v305 = vld [vmem:[#allocation5 + $0x8] sm:$0xf]
    %v306 = vld [vmem:[#allocation5 + $0xc] sm:$0xf]
    %v307 = vld [vmem:[#allocation5 + $0x10] sm:$0xf]
    %v308 = vld [vmem:[#allocation5 + $0x14] sm:$0xf]
    %v309 = vld [vmem:[#allocation5 + $0x18] sm:$0xf]
    %v310 = vld [vmem:[#allocation5 + $0x1c] sm:$0xf]
    %v311 = vld [vmem:[#allocation5 + $0x20] sm:$0xf]
    %v312 = vld [vmem:[#allocation5 + $0x24] sm:$0xf]
    %v313 = vld [vmem:[#allocation5 + $0x28] sm:$0xf]
    %v314 = vld [vmem:[#allocation5 + $0x2c] sm:$0xf]
    %v315 = vld [vmem:[#allocation5 + $0x30] sm:$0xf]
    %v316 = vld [vmem:[#allocation5 + $0x34] sm:$0xf]
    %v317 = vld [vmem:[#allocation5 + $0x38] sm:$0xf]
    %v318 = vld [vmem:[#allocation5 + $0x3c] sm:$0xf]
    %v575 = vunpack.c.l.b16 %v47
    %v576 = vunpack.c.l.b16 %v48
    %v577 = vunpack.c.l.b16 %v49
    %v578 = vunpack.c.l.b16 %v50
    %v579 = vunpack.c.l.b16 %v51
    %v580 = vunpack.c.l.b16 %v52
    %v581 = vunpack.c.l.b16 %v53
    %v582 = vunpack.c.l.b16 %v54
    %v583 = vunpack.c.l.b16 %v55
    %v584 = vunpack.c.l.b16 %v56
    %v585 = vunpack.c.l.b16 %v57
    %v586 = vunpack.c.l.b16 %v58
    %v587 = vunpack.c.l.b16 %v59
    %v588 = vunpack.c.l.b16 %v60
    %v589 = vunpack.c.l.b16 %v61
    %v590 = vunpack.c.l.b16 %v62
    %v591 = vunpack.c.l.b16 %v63
    %v592 = vunpack.c.l.b16 %v64
    %v593 = vunpack.c.l.b16 %v65
    %v594 = vunpack.c.l.b16 %v66
    %v595 = vunpack.c.l.b16 %v67
    %v596 = vunpack.c.l.b16 %v68
    %v597 = vunpack.c.l.b16 %v69
    %v598 = vunpack.c.l.b16 %v70
    %v599 = vunpack.c.l.b16 %v71
    %v600 = vunpack.c.l.b16 %v72
    %v601 = vunpack.c.l.b16 %v73
    %v602 = vunpack.c.l.b16 %v74
    %v603 = vunpack.c.l.b16 %v75
    %v604 = vunpack.c.l.b16 %v76
    %v605 = vunpack.c.l.b16 %v77
    %v606 = vunpack.c.l.b16 %v78
    %v607 = vunpack.c.l.b16 %v79
    %v608 = vunpack.c.l.b16 %v80
    %v609 = vunpack.c.l.b16 %v81
    %v610 = vunpack.c.l.b16 %v82
    %v611 = vunpack.c.l.b16 %v83
    %v612 = vunpack.c.l.b16 %v84
    %v613 = vunpack.c.l.b16 %v85
    %v614 = vunpack.c.l.b16 %v86
    %v615 = vunpack.c.l.b16 %v87
    %v616 = vunpack.c.l.b16 %v88
    %v617 = vunpack.c.l.b16 %v89
    %v618 = vunpack.c.l.b16 %v90
    %v619 = vunpack.c.l.b16 %v91
    %v620 = vunpack.c.l.b16 %v92
    %v621 = vunpack.c.l.b16 %v93
    %v622 = vunpack.c.l.b16 %v94
    %v623 = vunpack.c.l.b16 %v95
    %v624 = vunpack.c.l.b16 %v96
    %v625 = vunpack.c.l.b16 %v97
    %v626 = vunpack.c.l.b16 %v98
    %v627 = vunpack.c.l.b16 %v99
    %v628 = vunpack.c.l.b16 %v100
    %v629 = vunpack.c.l.b16 %v101
    %v630 = vunpack.c.l.b16 %v102
    %v631 = vunpack.c.l.b16 %v103
    %v632 = vunpack.c.l.b16 %v104
    %v633 = vunpack.c.l.b16 %v105
    %v634 = vunpack.c.l.b16 %v106
    %v635 = vunpack.c.l.b16 %v107
    %v636 = vunpack.c.l.b16 %v108
    %v637 = vunpack.c.l.b16 %v109
    %v638 = vunpack.c.l.b16 %v110
    %v639 = vunpack.c.l.b16 %v111
    %v640 = vunpack.c.l.b16 %v112
    %v641 = vunpack.c.l.b16 %v113
    %v642 = vunpack.c.l.b16 %v114
    %v643 = vunpack.c.l.b16 %v115
    %v644 = vunpack.c.l.b16 %v116
    %v645 = vunpack.c.l.b16 %v117
    %v646 = vunpack.c.l.b16 %v118
    %v647 = vunpack.c.l.b16 %v119
    %v648 = vunpack.c.l.b16 %v120
    %v649 = vunpack.c.l.b16 %v121
    %v650 = vunpack.c.l.b16 %v122
    %v651 = vunpack.c.l.b16 %v123
    %v652 = vunpack.c.l.b16 %v124
    %v653 = vunpack.c.l.b16 %v125
    %v654 = vunpack.c.l.b16 %v126
    %v655 = vunpack.c.l.b16 %v127
    %v656 = vunpack.c.l.b16 %v128
    %v657 = vunpack.c.l.b16 %v129
    %v658 = vunpack.c.l.b16 %v130
    %v659 = vunpack.c.l.b16 %v131
    %v660 = vunpack.c.l.b16 %v132
    %v661 = vunpack.c.l.b16 %v133
    %v662 = vunpack.c.l.b16 %v134
    %v663 = vunpack.c.l.b16 %v135
    %v664 = vunpack.c.l.b16 %v136
    %v665 = vunpack.c.l.b16 %v137
    %v666 = vunpack.c.l.b16 %v138
    %v667 = vunpack.c.l.b16 %v139
    %v668 = vunpack.c.l.b16 %v140
    %v669 = vunpack.c.l.b16 %v141
    %v670 = vunpack.c.l.b16 %v142
    %v671 = vunpack.c.l.b16 %v143
    %v672 = vunpack.c.l.b16 %v144
    %v673 = vunpack.c.l.b16 %v145
    %v674 = vunpack.c.l.b16 %v146
    %v675 = vunpack.c.l.b16 %v147
    %v676 = vunpack.c.l.b16 %v148
    %v677 = vunpack.c.l.b16 %v149
    %v678 = vunpack.c.l.b16 %v150
    %v679 = vunpack.c.l.b16 %v151
    %v680 = vunpack.c.l.b16 %v152
    %v681 = vunpack.c.l.b16 %v153
    %v682 = vunpack.c.l.b16 %v154
    %v683 = vunpack.c.l.b16 %v155
    %v684 = vunpack.c.l.b16 %v156
    %v685 = vunpack.c.l.b16 %v157
    %v686 = vunpack.c.l.b16 %v158
    %v687 = vunpack.c.l.b16 %v159
    %v688 = vunpack.c.l.b16 %v160
    %v689 = vunpack.c.l.b16 %v161
    %v690 = vunpack.c.l.b16 %v162
    %v691 = vunpack.c.l.b16 %v163
    %v692 = vunpack.c.l.b16 %v164
    %v693 = vunpack.c.l.b16 %v165
    %v694 = vunpack.c.l.b16 %v166
    %v695 = vunpack.c.l.b16 %v167
    %v696 = vunpack.c.l.b16 %v168
    %v697 = vunpack.c.l.b16 %v169
    %v698 = vunpack.c.l.b16 %v170
    %v699 = vunpack.c.l.b16 %v171
    %v700 = vunpack.c.l.b16 %v172
    %v701 = vunpack.c.l.b16 %v173
    %v702 = vunpack.c.l.b16 %v174
    %v703 = vunpack.c.l.b16 %v175
    %v704 = vunpack.c.l.b16 %v176
    %v705 = vunpack.c.l.b16 %v177
    %v706 = vunpack.c.l.b16 %v178
    %v707 = vunpack.c.l.b16 %v179
    %v708 = vunpack.c.l.b16 %v180
    %v709 = vunpack.c.l.b16 %v181
    %v710 = vunpack.c.l.b16 %v182
    %v711 = vunpack.c.l.b16 %v183
    %v712 = vunpack.c.l.b16 %v184
    %v713 = vunpack.c.l.b16 %v185
    %v714 = vunpack.c.l.b16 %v186
    %v715 = vunpack.c.l.b16 %v187
    %v716 = vunpack.c.l.b16 %v188
    %v717 = vunpack.c.l.b16 %v189
    %v718 = vunpack.c.l.b16 %v190
    %v719 = vunpack.c.l.b16 %v191
    %v720 = vunpack.c.l.b16 %v192
    %v721 = vunpack.c.l.b16 %v193
    %v722 = vunpack.c.l.b16 %v194
    %v723 = vunpack.c.l.b16 %v195
    %v724 = vunpack.c.l.b16 %v196
    %v725 = vunpack.c.l.b16 %v197
    %v726 = vunpack.c.l.b16 %v198
    %v727 = vunpack.c.l.b16 %v199
    %v728 = vunpack.c.l.b16 %v200
    %v729 = vunpack.c.l.b16 %v201
    %v730 = vunpack.c.l.b16 %v202
    %v731 = vunpack.c.l.b16 %v203
    %v732 = vunpack.c.l.b16 %v204
    %v733 = vunpack.c.l.b16 %v205
    %v734 = vunpack.c.l.b16 %v206
    %v735 = vunpack.c.l.b16 %v207
    %v736 = vunpack.c.l.b16 %v208
    %v737 = vunpack.c.l.b16 %v209
    %v738 = vunpack.c.l.b16 %v210
    %v739 = vunpack.c.l.b16 %v211
    %v740 = vunpack.c.l.b16 %v212
    %v741 = vunpack.c.l.b16 %v213
    %v742 = vunpack.c.l.b16 %v214
    %v743 = vunpack.c.l.b16 %v215
    %v744 = vunpack.c.l.b16 %v216
    %v745 = vunpack.c.l.b16 %v217
    %v746 = vunpack.c.l.b16 %v218
    %v747 = vunpack.c.l.b16 %v219
    %v748 = vunpack.c.l.b16 %v220
    %v749 = vunpack.c.l.b16 %v221
    %v750 = vunpack.c.l.b16 %v222
    %v751 = vunpack.c.l.b16 %v223
    %v752 = vunpack.c.l.b16 %v224
    %v753 = vunpack.c.l.b16 %v225
    %v754 = vunpack.c.l.b16 %v226
    %v755 = vunpack.c.l.b16 %v227
    %v756 = vunpack.c.l.b16 %v228
    %v757 = vunpack.c.l.b16 %v229
    %v758 = vunpack.c.l.b16 %v230
    %v759 = vunpack.c.l.b16 %v231
    %v760 = vunpack.c.l.b16 %v232
    %v761 = vunpack.c.l.b16 %v233
    %v762 = vunpack.c.l.b16 %v234
    %v763 = vunpack.c.l.b16 %v235
    %v764 = vunpack.c.l.b16 %v236
    %v765 = vunpack.c.l.b16 %v237
    %v766 = vunpack.c.l.b16 %v238
    %v767 = vunpack.c.l.b16 %v239
    %v768 = vunpack.c.l.b16 %v240
    %v769 = vunpack.c.l.b16 %v241
    %v770 = vunpack.c.l.b16 %v242
    %v771 = vunpack.c.l.b16 %v243
    %v772 = vunpack.c.l.b16 %v244
    %v773 = vunpack.c.l.b16 %v245
    %v774 = vunpack.c.l.b16 %v246
    %v775 = vunpack.c.l.b16 %v247
    %v776 = vunpack.c.l.b16 %v248
    %v777 = vunpack.c.l.b16 %v249
    %v778 = vunpack.c.l.b16 %v250
    %v779 = vunpack.c.l.b16 %v251
    %v780 = vunpack.c.l.b16 %v252
    %v781 = vunpack.c.l.b16 %v253
    %v782 = vunpack.c.l.b16 %v254
    %v783 = vunpack.c.l.b16 %v255
    %v784 = vunpack.c.l.b16 %v256
    %v785 = vunpack.c.l.b16 %v257
    %v786 = vunpack.c.l.b16 %v258
    %v787 = vunpack.c.l.b16 %v259
    %v788 = vunpack.c.l.b16 %v260
    %v789 = vunpack.c.l.b16 %v261
    %v790 = vunpack.c.l.b16 %v262
    %v791 = vunpack.c.l.b16 %v263
    %v792 = vunpack.c.l.b16 %v264
    %v793 = vunpack.c.l.b16 %v265
    %v794 = vunpack.c.l.b16 %v266
    %v795 = vunpack.c.l.b16 %v267
    %v796 = vunpack.c.l.b16 %v268
    %v797 = vunpack.c.l.b16 %v269
    %v798 = vunpack.c.l.b16 %v270
    %v799 = vunpack.c.l.b16 %v271
    %v800 = vunpack.c.l.b16 %v272
    %v801 = vunpack.c.l.b16 %v273
    %v802 = vunpack.c.l.b16 %v274
    %v803 = vunpack.c.l.b16 %v275
    %v804 = vunpack.c.l.b16 %v276
    %v805 = vunpack.c.l.b16 %v277
    %v806 = vunpack.c.l.b16 %v278
    %v807 = vunpack.c.l.b16 %v279
    %v808 = vunpack.c.l.b16 %v280
    %v809 = vunpack.c.l.b16 %v281
    %v810 = vunpack.c.l.b16 %v282
    %v811 = vunpack.c.l.b16 %v283
    %v812 = vunpack.c.l.b16 %v284
    %v813 = vunpack.c.l.b16 %v285
    %v814 = vunpack.c.l.b16 %v286
    %v815 = vunpack.c.l.b16 %v287
    %v816 = vunpack.c.l.b16 %v288
    %v817 = vunpack.c.l.b16 %v289
    %v818 = vunpack.c.l.b16 %v290
    %v819 = vunpack.c.l.b16 %v291
    %v820 = vunpack.c.l.b16 %v292
    %v821 = vunpack.c.l.b16 %v293
    %v822 = vunpack.c.l.b16 %v294
    %v823 = vunpack.c.l.b16 %v295
    %v824 = vunpack.c.l.b16 %v296
    %v825 = vunpack.c.l.b16 %v297
    %v826 = vunpack.c.l.b16 %v298
    %v827 = vunpack.c.l.b16 %v299
    %v828 = vunpack.c.l.b16 %v300
    %v829 = vunpack.c.l.b16 %v301
    %v830 = vunpack.c.l.b16 %v302
    %v831 = vpack.c.b16 %v576, %v575
    %v832 = vpack.c.b16 %v578, %v577
    %v833 = vpack.c.b16 %v580, %v579
    %v834 = vpack.c.b16 %v582, %v581
    %v835 = vpack.c.b16 %v584, %v583
    %v836 = vpack.c.b16 %v586, %v585
    %v837 = vpack.c.b16 %v588, %v587
    %v838 = vpack.c.b16 %v590, %v589
    %v839 = vpack.c.b16 %v592, %v591
    %v840 = vpack.c.b16 %v594, %v593
    %v841 = vpack.c.b16 %v596, %v595
    %v842 = vpack.c.b16 %v598, %v597
    %v843 = vpack.c.b16 %v600, %v599
    %v844 = vpack.c.b16 %v602, %v601
    %v845 = vpack.c.b16 %v604, %v603
    %v846 = vpack.c.b16 %v606, %v605
    %v847 = vpack.c.b16 %v608, %v607
    %v848 = vpack.c.b16 %v610, %v609
    %v849 = vpack.c.b16 %v612, %v611
    %v850 = vpack.c.b16 %v614, %v613
    %v851 = vpack.c.b16 %v616, %v615
    %v852 = vpack.c.b16 %v618, %v617
    %v853 = vpack.c.b16 %v620, %v619
    %v854 = vpack.c.b16 %v622, %v621
    %v855 = vpack.c.b16 %v624, %v623
    %v856 = vpack.c.b16 %v626, %v625
    %v857 = vpack.c.b16 %v628, %v627
    %v858 = vpack.c.b16 %v630, %v629
    %v859 = vpack.c.b16 %v632, %v631
    %v860 = vpack.c.b16 %v634, %v633
    %v861 = vpack.c.b16 %v636, %v635
    %v862 = vpack.c.b16 %v638, %v637
    %v863 = vpack.c.b16 %v640, %v639
    %v864 = vpack.c.b16 %v642, %v641
    %v865 = vpack.c.b16 %v644, %v643
    %v866 = vpack.c.b16 %v646, %v645
    %v867 = vpack.c.b16 %v648, %v647
    %v868 = vpack.c.b16 %v650, %v649
    %v869 = vpack.c.b16 %v652, %v651
    %v870 = vpack.c.b16 %v654, %v653
    %v871 = vpack.c.b16 %v656, %v655
    %v872 = vpack.c.b16 %v658, %v657
    %v873 = vpack.c.b16 %v660, %v659
    %v874 = vpack.c.b16 %v662, %v661
    %v875 = vpack.c.b16 %v664, %v663
    %v876 = vpack.c.b16 %v666, %v665
    %v877 = vpack.c.b16 %v668, %v667
    %v878 = vpack.c.b16 %v670, %v669
    %v879 = vpack.c.b16 %v672, %v671
    %v880 = vpack.c.b16 %v674, %v673
    %v881 = vpack.c.b16 %v676, %v675
    %v882 = vpack.c.b16 %v678, %v677
    %v883 = vpack.c.b16 %v680, %v679
    %v884 = vpack.c.b16 %v682, %v681
    %v885 = vpack.c.b16 %v684, %v683
    %v886 = vpack.c.b16 %v686, %v685
    %v887 = vpack.c.b16 %v688, %v687
    %v888 = vpack.c.b16 %v690, %v689
    %v889 = vpack.c.b16 %v692, %v691
    %v890 = vpack.c.b16 %v694, %v693
    %v891 = vpack.c.b16 %v696, %v695
    %v892 = vpack.c.b16 %v698, %v697
    %v893 = vpack.c.b16 %v700, %v699
    %v894 = vpack.c.b16 %v702, %v701
    %v895 = vpack.c.b16 %v704, %v703
    %v896 = vpack.c.b16 %v706, %v705
    %v897 = vpack.c.b16 %v708, %v707
    %v898 = vpack.c.b16 %v710, %v709
    %v899 = vpack.c.b16 %v712, %v711
    %v900 = vpack.c.b16 %v714, %v713
    %v901 = vpack.c.b16 %v716, %v715
    %v902 = vpack.c.b16 %v718, %v717
    %v903 = vpack.c.b16 %v720, %v719
    %v904 = vpack.c.b16 %v722, %v721
    %v905 = vpack.c.b16 %v724, %v723
    %v906 = vpack.c.b16 %v726, %v725
    %v907 = vpack.c.b16 %v728, %v727
    %v908 = vpack.c.b16 %v730, %v729
    %v909 = vpack.c.b16 %v732, %v731
    %v910 = vpack.c.b16 %v734, %v733
    %v911 = vpack.c.b16 %v736, %v735
    %v912 = vpack.c.b16 %v738, %v737
    %v913 = vpack.c.b16 %v740, %v739
    %v914 = vpack.c.b16 %v742, %v741
    %v915 = vpack.c.b16 %v744, %v743
    %v916 = vpack.c.b16 %v746, %v745
    %v917 = vpack.c.b16 %v748, %v747
    %v918 = vpack.c.b16 %v750, %v749
    %v919 = vpack.c.b16 %v752, %v751
    %v920 = vpack.c.b16 %v754, %v753
    %v921 = vpack.c.b16 %v756, %v755
    %v922 = vpack.c.b16 %v758, %v757
    %v923 = vpack.c.b16 %v760, %v759
    %v924 = vpack.c.b16 %v762, %v761
    %v925 = vpack.c.b16 %v764, %v763
    %v926 = vpack.c.b16 %v766, %v765
    %v927 = vpack.c.b16 %v768, %v767
    %v928 = vpack.c.b16 %v770, %v769
    %v929 = vpack.c.b16 %v772, %v771
    %v930 = vpack.c.b16 %v774, %v773
    %v931 = vpack.c.b16 %v776, %v775
    %v932 = vpack.c.b16 %v778, %v777
    %v933 = vpack.c.b16 %v780, %v779
    %v934 = vpack.c.b16 %v782, %v781
    %v935 = vpack.c.b16 %v784, %v783
    %v936 = vpack.c.b16 %v786, %v785
    %v937 = vpack.c.b16 %v788, %v787
    %v938 = vpack.c.b16 %v790, %v789
    %v939 = vpack.c.b16 %v792, %v791
    %v940 = vpack.c.b16 %v794, %v793
    %v941 = vpack.c.b16 %v796, %v795
    %v942 = vpack.c.b16 %v798, %v797
    %v943 = vpack.c.b16 %v800, %v799
    %v944 = vpack.c.b16 %v802, %v801
    %v945 = vpack.c.b16 %v804, %v803
    %v946 = vpack.c.b16 %v806, %v805
    %v947 = vpack.c.b16 %v808, %v807
    %v948 = vpack.c.b16 %v810, %v809
    %v949 = vpack.c.b16 %v812, %v811
    %v950 = vpack.c.b16 %v814, %v813
    %v951 = vpack.c.b16 %v816, %v815
    %v952 = vpack.c.b16 %v818, %v817
    %v953 = vpack.c.b16 %v820, %v819
    %v954 = vpack.c.b16 %v822, %v821
    %v955 = vpack.c.b16 %v824, %v823
    %v956 = vpack.c.b16 %v826, %v825
    %v957 = vpack.c.b16 %v828, %v827
    %v958 = vpack.c.b16 %v830, %v829
    %v1103 = vunpack.c.l.b16 %v303
    %v1104 = vunpack.c.l.b16 %v304
    %v1105 = vunpack.c.l.b16 %v305
    %v1106 = vunpack.c.l.b16 %v306
    %v1107 = vunpack.c.l.b16 %v307
    %v1108 = vunpack.c.l.b16 %v308
    %v1109 = vunpack.c.l.b16 %v309
    %v1110 = vunpack.c.l.b16 %v310
    %v1111 = vunpack.c.l.b16 %v311
    %v1112 = vunpack.c.l.b16 %v312
    %v1113 = vunpack.c.l.b16 %v313
    %v1114 = vunpack.c.l.b16 %v314
    %v1115 = vunpack.c.l.b16 %v315
    %v1116 = vunpack.c.l.b16 %v316
    %v1117 = vunpack.c.l.b16 %v317
    %v1118 = vunpack.c.l.b16 %v318
    %v1119 = vpack.c.b16 %v1104, %v1103
    %v1120 = vpack.c.b16 %v1106, %v1105
    %v1121 = vpack.c.b16 %v1108, %v1107
    %v1122 = vpack.c.b16 %v1110, %v1109
    %v1123 = vpack.c.b16 %v1112, %v1111
    %v1124 = vpack.c.b16 %v1114, %v1113
    %v1125 = vpack.c.b16 %v1116, %v1115
    %v1126 = vpack.c.b16 %v1118, %v1117
    %1135 = vmatprep.subr.bf16.mxu0 0
    %1136 = vmatpush1.bf16.msra.mxu0 %v1119
    %1137 = vmatprep.subr.bf16.mxu0 0
    %1138 = vmatpush1.bf16.msra.mxu0 %v1120
    %1139 = vmatprep.subr.bf16.mxu0 0
    %1140 = vmatpush1.bf16.msra.mxu0 %v1121
    %1141 = vmatprep.subr.bf16.mxu0 0
    %1142 = vmatpush1.bf16.msra.mxu0 %v1122
    %1143 = vmatprep.subr.bf16.mxu0 0
    %1144 = vmatpush1.bf16.msra.mxu0 %v1123
    %1145 = vmatprep.subr.bf16.mxu0 0
    %1146 = vmatpush1.bf16.msra.mxu0 %v1124
    %1147 = vmatprep.subr.bf16.mxu0 0
    %1148 = vmatpush1.bf16.msra.mxu0 %v1125
    %1149 = vmatprep.subr.bf16.mxu0 0
    %1150 = vmatpush1.bf16.msra.mxu0 %v1126
    %1151 = vmatprep.subr.bf16.mxu0 0
    %1152 = vmatpush1.bf16.msra.mxu0 0
    %1153 = vmatprep.subr.bf16.mxu0 0
    %1154 = vmatpush1.bf16.msra.mxu0 0
    %1155 = vmatprep.subr.bf16.mxu0 0
    %1156 = vmatpush1.bf16.msra.mxu0 0
    %1157 = vmatprep.subr.bf16.mxu0 0
    %1158 = vmatpush1.bf16.msra.mxu0 0
    %1159 = vmatprep.subr.bf16.mxu0 0
    %1160 = vmatpush1.bf16.msra.mxu0 0
    %1161 = vmatprep.subr.bf16.mxu0 0
    %1162 = vmatpush1.bf16.msra.mxu0 0
    %1163 = vmatprep.subr.bf16.mxu0 0
    %1164 = vmatpush1.bf16.msra.mxu0 0
    %1165 = vmatprep.subr.bf16.mxu0 0
    %1166 = vmatpush1.bf16.msra.mxu0 0
    %1167 = vmatprep.mubr.bf16.mxu0 0
    %1168 = vmatmul.mubr.bf16.gmra.mrb[0].mxu0 %v831
    %v1169 = vpop.f32.mrb[0].mxu0
    %v1170 = vadd.f32 0.0, %v1169
    %v1171 = vpop.f32.mrb[0].mxu0
    %v1172 = vpop.f32.mrb[0].mxu0
    %v1173 = vadd.f32 0.0, %v1172
    %v1174 = vpop.f32.mrb[0].mxu0
    %1175 = vmatprep.mubr.bf16.mxu0 0
    %1176 = vmatmul.mubr.bf16.gmra.mrb[0].mxu0 %v832
    %v1177 = vpop.f32.mrb[0].mxu0
    %v1178 = vadd.f32 0.0, %v1177
    %v1179 = vpop.f32.mrb[0].mxu0
    %v1180 = vpop.f32.mrb[0].mxu0
    %v1181 = vadd.f32 0.0, %v1180
    %v1182 = vpop.f32.mrb[0].mxu0
    %1183 = vmatprep.mubr.bf16.mxu0 0
    %1184 = vmatmul.mubr.bf16.gmra.mrb[0].mxu0 %v833
    %v1185 = vpop.f32.mrb[0].mxu0
    %v1186 = vadd.f32 0.0, %v1185
    %v1187 = vpop.f32.mrb[0].mxu0
    %v1188 = vpop.f32.mrb[0].mxu0
    %v1189 = vadd.f32 0.0, %v1188
    %v1190 = vpop.f32.mrb[0].mxu0
    %1191 = vmatprep.mubr.bf16.mxu0 0
    %1192 = vmatmul.mubr.bf16.gmra.mrb[0].mxu0 %v834
    %v1193 = vpop.f32.mrb[0].mxu0
    %v1194 = vadd.f32 0.0, %v1193
    %v1195 = vpop.f32.mrb[0].mxu0
    %v1196 = vpop.f32.mrb[0].mxu0
    %v1197 = vadd.f32 0.0, %v1196
    %v1198 = vpop.f32.mrb[0].mxu0
    %1199 = vmatprep.mubr.bf16.mxu0 0
    %1200 = vmatmul.mubr.bf16.gmra.mrb[0].mxu0 %v835
    %v1201 = vpop.f32.mrb[0].mxu0
    %v1202 = vadd.f32 0.0, %v1201
    %v1203 = vpop.f32.mrb[0].mxu0
    %v1204 = vpop.f32.mrb[0].mxu0
    %v1205 = vadd.f32 0.0, %v1204
    %v1206 = vpop.f32.mrb[0].mxu0
    %1207 = vmatprep.mubr.bf16.mxu0 0
    %1208 = vmatmul.mubr.bf16.gmra.mrb[0].mxu0 %v836
    %v1209 = vpop.f32.mrb[0].mxu0
    %v1210 = vadd.f32 0.0, %v1209
    %v1211 = vpop.f32.mrb[0].mxu0
    %v1212 = vpop.f32.mrb[0].mxu0
    %v1213 = vadd.f32 0.0, %v1212
    %v1214 = vpop.f32.mrb[0].mxu0
    %1215 = vmatprep.mubr.bf16.mxu0 0
    %1216 = vmatmul.mubr.bf16.gmra.mrb[0].mxu0 %v837
    %v1217 = vpop.f32.mrb[0].mxu0
    %v1218 = vadd.f32 0.0, %v1217
    %v1219 = vpop.f32.mrb[0].mxu0
    %v1220 = vpop.f32.mrb[0].mxu0
    %v1221 = vadd.f32 0.0, %v1220
    %v1222 = vpop.f32.mrb[0].mxu0
    %1223 = vmatprep.mubr.bf16.mxu0 0
    %1224 = vmatmul.mubr.bf16.gmra.mrb[0].mxu0 %v838
    %v1225 = vpop.f32.mrb[0].mxu0
    %v1226 = vadd.f32 0.0, %v1225
    %v1227 = vpop.f32.mrb[0].mxu0
    %v1228 = vpop.f32.mrb[0].mxu0
    %v1229 = vadd.f32 0.0, %v1228
    %v1230 = vpop.f32.mrb[0].mxu0
    %1231 = vmatprep.mubr.bf16.mxu0 0
    %1232 = vmatmul.mubr.bf16.gmra.mrb[0].mxu0 %v839
    %v1233 = vpop.f32.mrb[0].mxu0
    %v1234 = vadd.f32 0.0, %v1233
    %v1235 = vpop.f32.mrb[0].mxu0
    %v1236 = vpop.f32.mrb[0].mxu0
    %v1237 = vadd.f32 0.0, %v1236
    %v1238 = vpop.f32.mrb[0].mxu0
    %1239 = vmatprep.mubr.bf16.mxu0 0
    %1240 = vmatmul.mubr.bf16.gmra.mrb[0].mxu0 %v840
    %v1241 = vpop.f32.mrb[0].mxu0
    %v1242 = vadd.f32 0.0, %v1241
    %v1243 = vpop.f32.mrb[0].mxu0
    %v1244 = vpop.f32.mrb[0].mxu0
    %v1245 = vadd.f32 0.0, %v1244
    %v1246 = vpop.f32.mrb[0].mxu0
    %1247 = vmatprep.mubr.bf16.mxu0 0
    %1248 = vmatmul.mubr.bf16.gmra.mrb[0].mxu0 %v841
    %v1249 = vpop.f32.mrb[0].mxu0
    %v1250 = vadd.f32 0.0, %v1249
    %v1251 = vpop.f32.mrb[0].mxu0
    %v1252 = vpop.f32.mrb[0].mxu0
    %v1253 = vadd.f32 0.0, %v1252
    %v1254 = vpop.f32.mrb[0].mxu0
    %1255 = vmatprep.mubr.bf16.mxu0 0
    %1256 = vmatmul.mubr.bf16.gmra.mrb[0].mxu0 %v842
    %v1257 = vpop.f32.mrb[0].mxu0
    %v1258 = vadd.f32 0.0, %v1257
    %v1259 = vpop.f32.mrb[0].mxu0
    %v1260 = vpop.f32.mrb[0].mxu0
    %v1261 = vadd.f32 0.0, %v1260
    %v1262 = vpop.f32.mrb[0].mxu0
    %1263 = vmatprep.mubr.bf16.mxu0 0
    %1264 = vmatmul.mubr.bf16.gmra.mrb[0].mxu0 %v843
    %v1265 = vpop.f32.mrb[0].mxu0
    %v1266 = vadd.f32 0.0, %v1265
    %v1267 = vpop.f32.mrb[0].mxu0
    %v1268 = vpop.f32.mrb[0].mxu0
    %v1269 = vadd.f32 0.0, %v1268
    %v1270 = vpop.f32.mrb[0].mxu0
    %1271 = vmatprep.mubr.bf16.mxu0 0
    %1272 = vmatmul.mubr.bf16.gmra.mrb[0].mxu0 %v844
    %v1273 = vpop.f32.mrb[0].mxu0
    %v1274 = vadd.f32 0.0, %v1273
    %v1275 = vpop.f32.mrb[0].mxu0
    %v1276 = vpop.f32.mrb[0].mxu0
    %v1277 = vadd.f32 0.0, %v1276
    %v1278 = vpop.f32.mrb[0].mxu0
    %1279 = vmatprep.mubr.bf16.mxu0 0
    %1280 = vmatmul.mubr.bf16.gmra.mrb[0].mxu0 %v845
    %v1281 = vpop.f32.mrb[0].mxu0
    %v1282 = vadd.f32 0.0, %v1281
    %v1283 = vpop.f32.mrb[0].mxu0
    %v1284 = vpop.f32.mrb[0].mxu0
    %v1285 = vadd.f32 0.0, %v1284
    %v1286 = vpop.f32.mrb[0].mxu0
    %1287 = vmatprep.mubr.bf16.mxu0 0
    %1288 = vmatmul.mubr.bf16.gmra.mrb[0].mxu0 %v846
    %v1289 = vpop.f32.mrb[0].mxu0
    %v1290 = vadd.f32 0.0, %v1289
    %v1291 = vpop.f32.mrb[0].mxu0
    %v1292 = vpop.f32.mrb[0].mxu0
    %v1293 = vadd.f32 0.0, %v1292
    %v1294 = vpop.f32.mrb[0].mxu0
    %1295 = vmatprep.mubr.bf16.mxu0 0
    %1296 = vmatmul.mubr.bf16.gmra.mrb[0].mxu0 %v847
    %v1297 = vpop.f32.mrb[0].mxu0
    %v1298 = vadd.f32 0.0, %v1297
    %v1299 = vpop.f32.mrb[0].mxu0
    %v1300 = vpop.f32.mrb[0].mxu0
    %v1301 = vadd.f32 0.0, %v1300
    %v1302 = vpop.f32.mrb[0].mxu0
    %1303 = vmatprep.mubr.bf16.mxu0 0
    %1304 = vmatmul.mubr.bf16.gmra.mrb[0].mxu0 %v848
    %v1305 = vpop.f32.mrb[0].mxu0
    %v1306 = vadd.f32 0.0, %v1305
    %v1307 = vpop.f32.mrb[0].mxu0
    %v1308 = vpop.f32.mrb[0].mxu0
    %v1309 = vadd.f32 0.0, %v1308
    %v1310 = vpop.f32.mrb[0].mxu0
    %1311 = vmatprep.mubr.bf16.mxu0 0
    %1312 = vmatmul.mubr.bf16.gmra.mrb[0].mxu0 %v849
    %v1313 = vpop.f32.mrb[0].mxu0
    %v1314 = vadd.f32 0.0, %v1313
    %v1315 = vpop.f32.mrb[0].mxu0
    %v1316 = vpop.f32.mrb[0].mxu0
    %v1317 = vadd.f32 0.0, %v1316
    %v1318 = vpop.f32.mrb[0].mxu0
    %1319 = vmatprep.mubr.bf16.mxu0 0
    %1320 = vmatmul.mubr.bf16.gmra.mrb[0].mxu0 %v850
    %v1321 = vpop.f32.mrb[0].mxu0
    %v1322 = vadd.f32 0.0, %v1321
    %v1323 = vpop.f32.mrb[0].mxu0
    %v1324 = vpop.f32.mrb[0].mxu0
    %v1325 = vadd.f32 0.0, %v1324
    %v1326 = vpop.f32.mrb[0].mxu0
    %1327 = vmatprep.mubr.bf16.mxu0 0
    %1328 = vmatmul.mubr.bf16.gmra.mrb[0].mxu0 %v851
    %v1329 = vpop.f32.mrb[0].mxu0
    %v1330 = vadd.f32 0.0, %v1329
    %v1331 = vpop.f32.mrb[0].mxu0
    %v1332 = vpop.f32.mrb[0].mxu0
    %v1333 = vadd.f32 0.0, %v1332
    %v1334 = vpop.f32.mrb[0].mxu0
    %1335 = vmatprep.mubr.bf16.mxu0 0
    %1336 = vmatmul.mubr.bf16.gmra.mrb[0].mxu0 %v852
    %v1337 = vpop.f32.mrb[0].mxu0
    %v1338 = vadd.f32 0.0, %v1337
    %v1339 = vpop.f32.mrb[0].mxu0
    %v1340 = vpop.f32.mrb[0].mxu0
    %v1341 = vadd.f32 0.0, %v1340
    %v1342 = vpop.f32.mrb[0].mxu0
    %1343 = vmatprep.mubr.bf16.mxu0 0
    %1344 = vmatmul.mubr.bf16.gmra.mrb[0].mxu0 %v853
    %v1345 = vpop.f32.mrb[0].mxu0
    %v1346 = vadd.f32 0.0, %v1345
    %v1347 = vpop.f32.mrb[0].mxu0
    %v1348 = vpop.f32.mrb[0].mxu0
    %v1349 = vadd.f32 0.0, %v1348
    %v1350 = vpop.f32.mrb[0].mxu0
    %1351 = vmatprep.mubr.bf16.mxu0 0
    %1352 = vmatmul.mubr.bf16.gmra.mrb[0].mxu0 %v854
    %v1353 = vpop.f32.mrb[0].mxu0
    %v1354 = vadd.f32 0.0, %v1353
    %v1355 = vpop.f32.mrb[0].mxu0
    %v1356 = vpop.f32.mrb[0].mxu0
    %v1357 = vadd.f32 0.0, %v1356
    %v1358 = vpop.f32.mrb[0].mxu0
    %1359 = vmatprep.mubr.bf16.mxu0 0
    %1360 = vmatmul.mubr.bf16.gmra.mrb[0].mxu0 %v855
    %v1361 = vpop.f32.mrb[0].mxu0
    %v1362 = vadd.f32 0.0, %v1361
    %v1363 = vpop.f32.mrb[0].mxu0
    %v1364 = vpop.f32.mrb[0].mxu0
    %v1365 = vadd.f32 0.0, %v1364
    %v1366 = vpop.f32.mrb[0].mxu0
    %1367 = vmatprep.mubr.bf16.mxu0 0
    %1368 = vmatmul.mubr.bf16.gmra.mrb[0].mxu0 %v856
    %v1369 = vpop.f32.mrb[0].mxu0
    %v1370 = vadd.f32 0.0, %v1369
    %v1371 = vpop.f32.mrb[0].mxu0
    %v1372 = vpop.f32.mrb[0].mxu0
    %v1373 = vadd.f32 0.0, %v1372
    %v1374 = vpop.f32.mrb[0].mxu0
    %1375 = vmatprep.mubr.bf16.mxu0 0
    %1376 = vmatmul.mubr.bf16.gmra.mrb[0].mxu0 %v857
    %v1377 = vpop.f32.mrb[0].mxu0
    %v1378 = vadd.f32 0.0, %v1377
    %v1379 = vpop.f32.mrb[0].mxu0
    %v1380 = vpop.f32.mrb[0].mxu0
    %v1381 = vadd.f32 0.0, %v1380
    %v1382 = vpop.f32.mrb[0].mxu0
    %1383 = vmatprep.mubr.bf16.mxu0 0
    %1384 = vmatmul.mubr.bf16.gmra.mrb[0].mxu0 %v858
    %v1385 = vpop.f32.mrb[0].mxu0
    %v1386 = vadd.f32 0.0, %v1385
    %v1387 = vpop.f32.mrb[0].mxu0
    %v1388 = vpop.f32.mrb[0].mxu0
    %v1389 = vadd.f32 0.0, %v1388
    %v1390 = vpop.f32.mrb[0].mxu0
    %1391 = vmatprep.mubr.bf16.mxu0 0
    %1392 = vmatmul.mubr.bf16.gmra.mrb[0].mxu0 %v859
    %v1393 = vpop.f32.mrb[0].mxu0
    %v1394 = vadd.f32 0.0, %v1393
    %v1395 = vpop.f32.mrb[0].mxu0
    %v1396 = vpop.f32.mrb[0].mxu0
    %v1397 = vadd.f32 0.0, %v1396
    %v1398 = vpop.f32.mrb[0].mxu0
    %1399 = vmatprep.mubr.bf16.mxu0 0
    %1400 = vmatmul.mubr.bf16.gmra.mrb[0].mxu0 %v860
    %v1401 = vpop.f32.mrb[0].mxu0
    %v1402 = vadd.f32 0.0, %v1401
    %v1403 = vpop.f32.mrb[0].mxu0
    %v1404 = vpop.f32.mrb[0].mxu0
    %v1405 = vadd.f32 0.0, %v1404
    %v1406 = vpop.f32.mrb[0].mxu0
    %1407 = vmatprep.mubr.bf16.mxu0 0
    %1408 = vmatmul.mubr.bf16.gmra.mrb[0].mxu0 %v861
    %v1409 = vpop.f32.mrb[0].mxu0
    %v1410 = vadd.f32 0.0, %v1409
    %v1411 = vpop.f32.mrb[0].mxu0
    %v1412 = vpop.f32.mrb[0].mxu0
    %v1413 = vadd.f32 0.0, %v1412
    %v1414 = vpop.f32.mrb[0].mxu0
    %1415 = vmatprep.mubr.bf16.mxu0 0
    %1416 = vmatmul.mubr.bf16.gmra.mrb[0].mxu0 %v862
    %v1417 = vpop.f32.mrb[0].mxu0
    %v1418 = vadd.f32 0.0, %v1417
    %v1419 = vpop.f32.mrb[0].mxu0
    %v1420 = vpop.f32.mrb[0].mxu0
    %v1421 = vadd.f32 0.0, %v1420
    %v1422 = vpop.f32.mrb[0].mxu0
    %1423 = vmatprep.mubr.bf16.mxu0 0
    %1424 = vmatmul.mubr.bf16.gmra.mrb[0].mxu0 %v863
    %v1425 = vpop.f32.mrb[0].mxu0
    %v1426 = vadd.f32 0.0, %v1425
    %v1427 = vpop.f32.mrb[0].mxu0
    %v1428 = vpop.f32.mrb[0].mxu0
    %v1429 = vadd.f32 0.0, %v1428
    %v1430 = vpop.f32.mrb[0].mxu0
    %1431 = vmatprep.mubr.bf16.mxu0 0
    %1432 = vmatmul.mubr.bf16.gmra.mrb[0].mxu0 %v864
    %v1433 = vpop.f32.mrb[0].mxu0
    %v1434 = vadd.f32 0.0, %v1433
    %v1435 = vpop.f32.mrb[0].mxu0
    %v1436 = vpop.f32.mrb[0].mxu0
    %v1437 = vadd.f32 0.0, %v1436
    %v1438 = vpop.f32.mrb[0].mxu0
    %1439 = vmatprep.mubr.bf16.mxu0 0
    %1440 = vmatmul.mubr.bf16.gmra.mrb[0].mxu0 %v865
    %v1441 = vpop.f32.mrb[0].mxu0
    %v1442 = vadd.f32 0.0, %v1441
    %v1443 = vpop.f32.mrb[0].mxu0
    %v1444 = vpop.f32.mrb[0].mxu0
    %v1445 = vadd.f32 0.0, %v1444
    %v1446 = vpop.f32.mrb[0].mxu0
    %1447 = vmatprep.mubr.bf16.mxu0 0
    %1448 = vmatmul.mubr.bf16.gmra.mrb[0].mxu0 %v866
    %v1449 = vpop.f32.mrb[0].mxu0
    %v1450 = vadd.f32 0.0, %v1449
    %v1451 = vpop.f32.mrb[0].mxu0
    %v1452 = vpop.f32.mrb[0].mxu0
    %v1453 = vadd.f32 0.0, %v1452
    %v1454 = vpop.f32.mrb[0].mxu0
    %1455 = vmatprep.mubr.bf16.mxu0 0
    %1456 = vmatmul.mubr.bf16.gmra.mrb[0].mxu0 %v867
    %v1457 = vpop.f32.mrb[0].mxu0
    %v1458 = vadd.f32 0.0, %v1457
    %v1459 = vpop.f32.mrb[0].mxu0
    %v1460 = vpop.f32.mrb[0].mxu0
    %v1461 = vadd.f32 0.0, %v1460
    %v1462 = vpop.f32.mrb[0].mxu0
    %1463 = vmatprep.mubr.bf16.mxu0 0
    %1464 = vmatmul.mubr.bf16.gmra.mrb[0].mxu0 %v868
    %v1465 = vpop.f32.mrb[0].mxu0
    %v1466 = vadd.f32 0.0, %v1465
    %v1467 = vpop.f32.mrb[0].mxu0
    %v1468 = vpop.f32.mrb[0].mxu0
    %v1469 = vadd.f32 0.0, %v1468
    %v1470 = vpop.f32.mrb[0].mxu0
    %1471 = vmatprep.mubr.bf16.mxu0 0
    %1472 = vmatmul.mubr.bf16.gmra.mrb[0].mxu0 %v869
    %v1473 = vpop.f32.mrb[0].mxu0
    %v1474 = vadd.f32 0.0, %v1473
    %v1475 = vpop.f32.mrb[0].mxu0
    %v1476 = vpop.f32.mrb[0].mxu0
    %v1477 = vadd.f32 0.0, %v1476
    %v1478 = vpop.f32.mrb[0].mxu0
    %1479 = vmatprep.mubr.bf16.mxu0 0
    %1480 = vmatmul.mubr.bf16.gmra.mrb[0].mxu0 %v870
    %v1481 = vpop.f32.mrb[0].mxu0
    %v1482 = vadd.f32 0.0, %v1481
    %v1483 = vpop.f32.mrb[0].mxu0
    %v1484 = vpop.f32.mrb[0].mxu0
    %v1485 = vadd.f32 0.0, %v1484
    %v1486 = vpop.f32.mrb[0].mxu0
    %1487 = vmatprep.mubr.bf16.mxu0 0
    %1488 = vmatmul.mubr.bf16.gmra.mrb[0].mxu0 %v871
    %v1489 = vpop.f32.mrb[0].mxu0
    %v1490 = vadd.f32 0.0, %v1489
    %v1491 = vpop.f32.mrb[0].mxu0
    %v1492 = vpop.f32.mrb[0].mxu0
    %v1493 = vadd.f32 0.0, %v1492
    %v1494 = vpop.f32.mrb[0].mxu0
    %1495 = vmatprep.mubr.bf16.mxu0 0
    %1496 = vmatmul.mubr.bf16.gmra.mrb[0].mxu0 %v872
    %v1497 = vpop.f32.mrb[0].mxu0
    %v1498 = vadd.f32 0.0, %v1497
    %v1499 = vpop.f32.mrb[0].mxu0
    %v1500 = vpop.f32.mrb[0].mxu0
    %v1501 = vadd.f32 0.0, %v1500
    %v1502 = vpop.f32.mrb[0].mxu0
    %1503 = vmatprep.mubr.bf16.mxu0 0
    %1504 = vmatmul.mubr.bf16.gmra.mrb[0].mxu0 %v873
    %v1505 = vpop.f32.mrb[0].mxu0
    %v1506 = vadd.f32 0.0, %v1505
    %v1507 = vpop.f32.mrb[0].mxu0
    %v1508 = vpop.f32.mrb[0].mxu0
    %v1509 = vadd.f32 0.0, %v1508
    %v1510 = vpop.f32.mrb[0].mxu0
    %1511 = vmatprep.mubr.bf16.mxu0 0
    %1512 = vmatmul.mubr.bf16.gmra.mrb[0].mxu0 %v874
    %v1513 = vpop.f32.mrb[0].mxu0
    %v1514 = vadd.f32 0.0, %v1513
    %v1515 = vpop.f32.mrb[0].mxu0
    %v1516 = vpop.f32.mrb[0].mxu0
    %v1517 = vadd.f32 0.0, %v1516
    %v1518 = vpop.f32.mrb[0].mxu0
    %1519 = vmatprep.mubr.bf16.mxu0 0
    %1520 = vmatmul.mubr.bf16.gmra.mrb[0].mxu0 %v875
    %v1521 = vpop.f32.mrb[0].mxu0
    %v1522 = vadd.f32 0.0, %v1521
    %v1523 = vpop.f32.mrb[0].mxu0
    %v1524 = vpop.f32.mrb[0].mxu0
    %v1525 = vadd.f32 0.0, %v1524
    %v1526 = vpop.f32.mrb[0].mxu0
    %1527 = vmatprep.mubr.bf16.mxu0 0
    %1528 = vmatmul.mubr.bf16.gmra.mrb[0].mxu0 %v876
    %v1529 = vpop.f32.mrb[0].mxu0
    %v1530 = vadd.f32 0.0, %v1529
    %v1531 = vpop.f32.mrb[0].mxu0
    %v1532 = vpop.f32.mrb[0].mxu0
    %v1533 = vadd.f32 0.0, %v1532
    %v1534 = vpop.f32.mrb[0].mxu0
    %1535 = vmatprep.mubr.bf16.mxu0 0
    %1536 = vmatmul.mubr.bf16.gmra.mrb[0].mxu0 %v877
    %v1537 = vpop.f32.mrb[0].mxu0
    %v1538 = vadd.f32 0.0, %v1537
    %v1539 = vpop.f32.mrb[0].mxu0
    %v1540 = vpop.f32.mrb[0].mxu0
    %v1541 = vadd.f32 0.0, %v1540
    %v1542 = vpop.f32.mrb[0].mxu0
    %1543 = vmatprep.mubr.bf16.mxu0 0
    %1544 = vmatmul.mubr.bf16.gmra.mrb[0].mxu0 %v878
    %v1545 = vpop.f32.mrb[0].mxu0
    %v1546 = vadd.f32 0.0, %v1545
    %v1547 = vpop.f32.mrb[0].mxu0
    %v1548 = vpop.f32.mrb[0].mxu0
    %v1549 = vadd.f32 0.0, %v1548
    %v1550 = vpop.f32.mrb[0].mxu0
    %1551 = vmatprep.mubr.bf16.mxu0 0
    %1552 = vmatmul.mubr.bf16.gmra.mrb[0].mxu0 %v879
    %v1553 = vpop.f32.mrb[0].mxu0
    %v1554 = vadd.f32 0.0, %v1553
    %v1555 = vpop.f32.mrb[0].mxu0
    %v1556 = vpop.f32.mrb[0].mxu0
    %v1557 = vadd.f32 0.0, %v1556
    %v1558 = vpop.f32.mrb[0].mxu0
    %1559 = vmatprep.mubr.bf16.mxu0 0
    %1560 = vmatmul.mubr.bf16.gmra.mrb[0].mxu0 %v880
    %v1561 = vpop.f32.mrb[0].mxu0
    %v1562 = vadd.f32 0.0, %v1561
    %v1563 = vpop.f32.mrb[0].mxu0
    %v1564 = vpop.f32.mrb[0].mxu0
    %v1565 = vadd.f32 0.0, %v1564
    %v1566 = vpop.f32.mrb[0].mxu0
    %1567 = vmatprep.mubr.bf16.mxu0 0
    %1568 = vmatmul.mubr.bf16.gmra.mrb[0].mxu0 %v881
    %v1569 = vpop.f32.mrb[0].mxu0
    %v1570 = vadd.f32 0.0, %v1569
    %v1571 = vpop.f32.mrb[0].mxu0
    %v1572 = vpop.f32.mrb[0].mxu0
    %v1573 = vadd.f32 0.0, %v1572
    %v1574 = vpop.f32.mrb[0].mxu0
    %1575 = vmatprep.mubr.bf16.mxu0 0
    %1576 = vmatmul.mubr.bf16.gmra.mrb[0].mxu0 %v882
    %v1577 = vpop.f32.mrb[0].mxu0
    %v1578 = vadd.f32 0.0, %v1577
    %v1579 = vpop.f32.mrb[0].mxu0
    %v1580 = vpop.f32.mrb[0].mxu0
    %v1581 = vadd.f32 0.0, %v1580
    %v1582 = vpop.f32.mrb[0].mxu0
    %1583 = vmatprep.mubr.bf16.mxu0 0
    %1584 = vmatmul.mubr.bf16.gmra.mrb[0].mxu0 %v883
    %v1585 = vpop.f32.mrb[0].mxu0
    %v1586 = vadd.f32 0.0, %v1585
    %v1587 = vpop.f32.mrb[0].mxu0
    %v1588 = vpop.f32.mrb[0].mxu0
    %v1589 = vadd.f32 0.0, %v1588
    %v1590 = vpop.f32.mrb[0].mxu0
    %1591 = vmatprep.mubr.bf16.mxu0 0
    %1592 = vmatmul.mubr.bf16.gmra.mrb[0].mxu0 %v884
    %v1593 = vpop.f32.mrb[0].mxu0
    %v1594 = vadd.f32 0.0, %v1593
    %v1595 = vpop.f32.mrb[0].mxu0
    %v1596 = vpop.f32.mrb[0].mxu0
    %v1597 = vadd.f32 0.0, %v1596
    %v1598 = vpop.f32.mrb[0].mxu0
    %1599 = vmatprep.mubr.bf16.mxu0 0
    %1600 = vmatmul.mubr.bf16.gmra.mrb[0].mxu0 %v885
    %v1601 = vpop.f32.mrb[0].mxu0
    %v1602 = vadd.f32 0.0, %v1601
    %v1603 = vpop.f32.mrb[0].mxu0
    %v1604 = vpop.f32.mrb[0].mxu0
    %v1605 = vadd.f32 0.0, %v1604
    %v1606 = vpop.f32.mrb[0].mxu0
    %1607 = vmatprep.mubr.bf16.mxu0 0
    %1608 = vmatmul.mubr.bf16.gmra.mrb[0].mxu0 %v886
    %v1609 = vpop.f32.mrb[0].mxu0
    %v1610 = vadd.f32 0.0, %v1609
    %v1611 = vpop.f32.mrb[0].mxu0
    %v1612 = vpop.f32.mrb[0].mxu0
    %v1613 = vadd.f32 0.0, %v1612
    %v1614 = vpop.f32.mrb[0].mxu0
    %1615 = vmatprep.mubr.bf16.mxu0 0
    %1616 = vmatmul.mubr.bf16.gmra.mrb[0].mxu0 %v887
    %v1617 = vpop.f32.mrb[0].mxu0
    %v1618 = vadd.f32 0.0, %v1617
    %v1619 = vpop.f32.mrb[0].mxu0
    %v1620 = vpop.f32.mrb[0].mxu0
    %v1621 = vadd.f32 0.0, %v1620
    %v1622 = vpop.f32.mrb[0].mxu0
    %1623 = vmatprep.mubr.bf16.mxu0 0
    %1624 = vmatmul.mubr.bf16.gmra.mrb[0].mxu0 %v888
    %v1625 = vpop.f32.mrb[0].mxu0
    %v1626 = vadd.f32 0.0, %v1625
    %v1627 = vpop.f32.mrb[0].mxu0
    %v1628 = vpop.f32.mrb[0].mxu0
    %v1629 = vadd.f32 0.0, %v1628
    %v1630 = vpop.f32.mrb[0].mxu0
    %1631 = vmatprep.mubr.bf16.mxu0 0
    %1632 = vmatmul.mubr.bf16.gmra.mrb[0].mxu0 %v889
    %v1633 = vpop.f32.mrb[0].mxu0
    %v1634 = vadd.f32 0.0, %v1633
    %v1635 = vpop.f32.mrb[0].mxu0
    %v1636 = vpop.f32.mrb[0].mxu0
    %v1637 = vadd.f32 0.0, %v1636
    %v1638 = vpop.f32.mrb[0].mxu0
    %1639 = vmatprep.mubr.bf16.mxu0 0
    %1640 = vmatmul.mubr.bf16.gmra.mrb[0].mxu0 %v890
    %v1641 = vpop.f32.mrb[0].mxu0
    %v1642 = vadd.f32 0.0, %v1641
    %v1643 = vpop.f32.mrb[0].mxu0
    %v1644 = vpop.f32.mrb[0].mxu0
    %v1645 = vadd.f32 0.0, %v1644
    %v1646 = vpop.f32.mrb[0].mxu0
    %1647 = vmatprep.mubr.bf16.mxu0 0
    %1648 = vmatmul.mubr.bf16.gmra.mrb[0].mxu0 %v891
    %v1649 = vpop.f32.mrb[0].mxu0
    %v1650 = vadd.f32 0.0, %v1649
    %v1651 = vpop.f32.mrb[0].mxu0
    %v1652 = vpop.f32.mrb[0].mxu0
    %v1653 = vadd.f32 0.0, %v1652
    %v1654 = vpop.f32.mrb[0].mxu0
    %1655 = vmatprep.mubr.bf16.mxu0 0
    %1656 = vmatmul.mubr.bf16.gmra.mrb[0].mxu0 %v892
    %v1657 = vpop.f32.mrb[0].mxu0
    %v1658 = vadd.f32 0.0, %v1657
    %v1659 = vpop.f32.mrb[0].mxu0
    %v1660 = vpop.f32.mrb[0].mxu0
    %v1661 = vadd.f32 0.0, %v1660
    %v1662 = vpop.f32.mrb[0].mxu0
    %1663 = vmatprep.mubr.bf16.mxu0 0
    %1664 = vmatmul.mubr.bf16.gmra.mrb[0].mxu0 %v893
    %v1665 = vpop.f32.mrb[0].mxu0
    %v1666 = vadd.f32 0.0, %v1665
    %v1667 = vpop.f32.mrb[0].mxu0
    %v1668 = vpop.f32.mrb[0].mxu0
    %v1669 = vadd.f32 0.0, %v1668
    %v1670 = vpop.f32.mrb[0].mxu0
    %1671 = vmatprep.mubr.bf16.mxu0 0
    %1672 = vmatmul.mubr.bf16.gmra.mrb[0].mxu0 %v894
    %v1673 = vpop.f32.mrb[0].mxu0
    %v1674 = vadd.f32 0.0, %v1673
    %v1675 = vpop.f32.mrb[0].mxu0
    %v1676 = vpop.f32.mrb[0].mxu0
    %v1677 = vadd.f32 0.0, %v1676
    %v1678 = vpop.f32.mrb[0].mxu0
    %1679 = vmatprep.mubr.bf16.mxu0 0
    %1680 = vmatmul.mubr.bf16.gmra.mrb[0].mxu0 %v895
    %v1681 = vpop.f32.mrb[0].mxu0
    %v1682 = vadd.f32 0.0, %v1681
    %v1683 = vpop.f32.mrb[0].mxu0
    %v1684 = vpop.f32.mrb[0].mxu0
    %v1685 = vadd.f32 0.0, %v1684
    %v1686 = vpop.f32.mrb[0].mxu0
    %1687 = vmatprep.mubr.bf16.mxu0 0
    %1688 = vmatmul.mubr.bf16.gmra.mrb[0].mxu0 %v896
    %v1689 = vpop.f32.mrb[0].mxu0
    %v1690 = vadd.f32 0.0, %v1689
    %v1691 = vpop.f32.mrb[0].mxu0
    %v1692 = vpop.f32.mrb[0].mxu0
    %v1693 = vadd.f32 0.0, %v1692
    %v1694 = vpop.f32.mrb[0].mxu0
    %1695 = vmatprep.mubr.bf16.mxu0 0
    %1696 = vmatmul.mubr.bf16.gmra.mrb[0].mxu0 %v897
    %v1697 = vpop.f32.mrb[0].mxu0
    %v1698 = vadd.f32 0.0, %v1697
    %v1699 = vpop.f32.mrb[0].mxu0
    %v1700 = vpop.f32.mrb[0].mxu0
    %v1701 = vadd.f32 0.0, %v1700
    %v1702 = vpop.f32.mrb[0].mxu0
    %1703 = vmatprep.mubr.bf16.mxu0 0
    %1704 = vmatmul.mubr.bf16.gmra.mrb[0].mxu0 %v898
    %v1705 = vpop.f32.mrb[0].mxu0
    %v1706 = vadd.f32 0.0, %v1705
    %v1707 = vpop.f32.mrb[0].mxu0
    %v1708 = vpop.f32.mrb[0].mxu0
    %v1709 = vadd.f32 0.0, %v1708
    %v1710 = vpop.f32.mrb[0].mxu0
    %1711 = vmatprep.mubr.bf16.mxu0 0
    %1712 = vmatmul.mubr.bf16.gmra.mrb[0].mxu0 %v899
    %v1713 = vpop.f32.mrb[0].mxu0
    %v1714 = vadd.f32 0.0, %v1713
    %v1715 = vpop.f32.mrb[0].mxu0
    %v1716 = vpop.f32.mrb[0].mxu0
    %v1717 = vadd.f32 0.0, %v1716
    %v1718 = vpop.f32.mrb[0].mxu0
    %1719 = vmatprep.mubr.bf16.mxu0 0
    %1720 = vmatmul.mubr.bf16.gmra.mrb[0].mxu0 %v900
    %v1721 = vpop.f32.mrb[0].mxu0
    %v1722 = vadd.f32 0.0, %v1721
    %v1723 = vpop.f32.mrb[0].mxu0
    %v1724 = vpop.f32.mrb[0].mxu0
    %v1725 = vadd.f32 0.0, %v1724
    %v1726 = vpop.f32.mrb[0].mxu0
    %1727 = vmatprep.mubr.bf16.mxu0 0
    %1728 = vmatmul.mubr.bf16.gmra.mrb[0].mxu0 %v901
    %v1729 = vpop.f32.mrb[0].mxu0
    %v1730 = vadd.f32 0.0, %v1729
    %v1731 = vpop.f32.mrb[0].mxu0
    %v1732 = vpop.f32.mrb[0].mxu0
    %v1733 = vadd.f32 0.0, %v1732
    %v1734 = vpop.f32.mrb[0].mxu0
    %1735 = vmatprep.mubr.bf16.mxu0 0
    %1736 = vmatmul.mubr.bf16.gmra.mrb[0].mxu0 %v902
    %v1737 = vpop.f32.mrb[0].mxu0
    %v1738 = vadd.f32 0.0, %v1737
    %v1739 = vpop.f32.mrb[0].mxu0
    %v1740 = vpop.f32.mrb[0].mxu0
    %v1741 = vadd.f32 0.0, %v1740
    %v1742 = vpop.f32.mrb[0].mxu0
    %1743 = vmatprep.mubr.bf16.mxu0 0
    %1744 = vmatmul.mubr.bf16.gmra.mrb[0].mxu0 %v903
    %v1745 = vpop.f32.mrb[0].mxu0
    %v1746 = vadd.f32 0.0, %v1745
    %v1747 = vpop.f32.mrb[0].mxu0
    %v1748 = vpop.f32.mrb[0].mxu0
    %v1749 = vadd.f32 0.0, %v1748
    %v1750 = vpop.f32.mrb[0].mxu0
    %1751 = vmatprep.mubr.bf16.mxu0 0
    %1752 = vmatmul.mubr.bf16.gmra.mrb[0].mxu0 %v904
    %v1753 = vpop.f32.mrb[0].mxu0
    %v1754 = vadd.f32 0.0, %v1753
    %v1755 = vpop.f32.mrb[0].mxu0
    %v1756 = vpop.f32.mrb[0].mxu0
    %v1757 = vadd.f32 0.0, %v1756
    %v1758 = vpop.f32.mrb[0].mxu0
    %1759 = vmatprep.mubr.bf16.mxu0 0
    %1760 = vmatmul.mubr.bf16.gmra.mrb[0].mxu0 %v905
    %v1761 = vpop.f32.mrb[0].mxu0
    %v1762 = vadd.f32 0.0, %v1761
    %v1763 = vpop.f32.mrb[0].mxu0
    %v1764 = vpop.f32.mrb[0].mxu0
    %v1765 = vadd.f32 0.0, %v1764
    %v1766 = vpop.f32.mrb[0].mxu0
    %1767 = vmatprep.mubr.bf16.mxu0 0
    %1768 = vmatmul.mubr.bf16.gmra.mrb[0].mxu0 %v906
    %v1769 = vpop.f32.mrb[0].mxu0
    %v1770 = vadd.f32 0.0, %v1769
    %v1771 = vpop.f32.mrb[0].mxu0
    %v1772 = vpop.f32.mrb[0].mxu0
    %v1773 = vadd.f32 0.0, %v1772
    %v1774 = vpop.f32.mrb[0].mxu0
    %1775 = vmatprep.mubr.bf16.mxu0 0
    %1776 = vmatmul.mubr.bf16.gmra.mrb[0].mxu0 %v907
    %v1777 = vpop.f32.mrb[0].mxu0
    %v1778 = vadd.f32 0.0, %v1777
    %v1779 = vpop.f32.mrb[0].mxu0
    %v1780 = vpop.f32.mrb[0].mxu0
    %v1781 = vadd.f32 0.0, %v1780
    %v1782 = vpop.f32.mrb[0].mxu0
    %1783 = vmatprep.mubr.bf16.mxu0 0
    %1784 = vmatmul.mubr.bf16.gmra.mrb[0].mxu0 %v908
    %v1785 = vpop.f32.mrb[0].mxu0
    %v1786 = vadd.f32 0.0, %v1785
    %v1787 = vpop.f32.mrb[0].mxu0
    %v1788 = vpop.f32.mrb[0].mxu0
    %v1789 = vadd.f32 0.0, %v1788
    %v1790 = vpop.f32.mrb[0].mxu0
    %1791 = vmatprep.mubr.bf16.mxu0 0
    %1792 = vmatmul.mubr.bf16.gmra.mrb[0].mxu0 %v909
    %v1793 = vpop.f32.mrb[0].mxu0
    %v1794 = vadd.f32 0.0, %v1793
    %v1795 = vpop.f32.mrb[0].mxu0
    %v1796 = vpop.f32.mrb[0].mxu0
    %v1797 = vadd.f32 0.0, %v1796
    %v1798 = vpop.f32.mrb[0].mxu0
    %1799 = vmatprep.mubr.bf16.mxu0 0
    %1800 = vmatmul.mubr.bf16.gmra.mrb[0].mxu0 %v910
    %v1801 = vpop.f32.mrb[0].mxu0
    %v1802 = vadd.f32 0.0, %v1801
    %v1803 = vpop.f32.mrb[0].mxu0
    %v1804 = vpop.f32.mrb[0].mxu0
    %v1805 = vadd.f32 0.0, %v1804
    %v1806 = vpop.f32.mrb[0].mxu0
    %1807 = vmatprep.mubr.bf16.mxu0 0
    %1808 = vmatmul.mubr.bf16.gmra.mrb[0].mxu0 %v911
    %v1809 = vpop.f32.mrb[0].mxu0
    %v1810 = vadd.f32 0.0, %v1809
    %v1811 = vpop.f32.mrb[0].mxu0
    %v1812 = vpop.f32.mrb[0].mxu0
    %v1813 = vadd.f32 0.0, %v1812
    %v1814 = vpop.f32.mrb[0].mxu0
    %1815 = vmatprep.mubr.bf16.mxu0 0
    %1816 = vmatmul.mubr.bf16.gmra.mrb[0].mxu0 %v912
    %v1817 = vpop.f32.mrb[0].mxu0
    %v1818 = vadd.f32 0.0, %v1817
    %v1819 = vpop.f32.mrb[0].mxu0
    %v1820 = vpop.f32.mrb[0].mxu0
    %v1821 = vadd.f32 0.0, %v1820
    %v1822 = vpop.f32.mrb[0].mxu0
    %1823 = vmatprep.mubr.bf16.mxu0 0
    %1824 = vmatmul.mubr.bf16.gmra.mrb[0].mxu0 %v913
    %v1825 = vpop.f32.mrb[0].mxu0
    %v1826 = vadd.f32 0.0, %v1825
    %v1827 = vpop.f32.mrb[0].mxu0
    %v1828 = vpop.f32.mrb[0].mxu0
    %v1829 = vadd.f32 0.0, %v1828
    %v1830 = vpop.f32.mrb[0].mxu0
    %1831 = vmatprep.mubr.bf16.mxu0 0
    %1832 = vmatmul.mubr.bf16.gmra.mrb[0].mxu0 %v914
    %v1833 = vpop.f32.mrb[0].mxu0
    %v1834 = vadd.f32 0.0, %v1833
    %v1835 = vpop.f32.mrb[0].mxu0
    %v1836 = vpop.f32.mrb[0].mxu0
    %v1837 = vadd.f32 0.0, %v1836
    %v1838 = vpop.f32.mrb[0].mxu0
    %1839 = vmatprep.mubr.bf16.mxu0 0
    %1840 = vmatmul.mubr.bf16.gmra.mrb[0].mxu0 %v915
    %v1841 = vpop.f32.mrb[0].mxu0
    %v1842 = vadd.f32 0.0, %v1841
    %v1843 = vpop.f32.mrb[0].mxu0
    %v1844 = vpop.f32.mrb[0].mxu0
    %v1845 = vadd.f32 0.0, %v1844
    %v1846 = vpop.f32.mrb[0].mxu0
    %1847 = vmatprep.mubr.bf16.mxu0 0
    %1848 = vmatmul.mubr.bf16.gmra.mrb[0].mxu0 %v916
    %v1849 = vpop.f32.mrb[0].mxu0
    %v1850 = vadd.f32 0.0, %v1849
    %v1851 = vpop.f32.mrb[0].mxu0
    %v1852 = vpop.f32.mrb[0].mxu0
    %v1853 = vadd.f32 0.0, %v1852
    %v1854 = vpop.f32.mrb[0].mxu0
    %1855 = vmatprep.mubr.bf16.mxu0 0
    %1856 = vmatmul.mubr.bf16.gmra.mrb[0].mxu0 %v917
    %v1857 = vpop.f32.mrb[0].mxu0
    %v1858 = vadd.f32 0.0, %v1857
    %v1859 = vpop.f32.mrb[0].mxu0
    %v1860 = vpop.f32.mrb[0].mxu0
    %v1861 = vadd.f32 0.0, %v1860
    %v1862 = vpop.f32.mrb[0].mxu0
    %1863 = vmatprep.mubr.bf16.mxu0 0
    %1864 = vmatmul.mubr.bf16.gmra.mrb[0].mxu0 %v918
    %v1865 = vpop.f32.mrb[0].mxu0
    %v1866 = vadd.f32 0.0, %v1865
    %v1867 = vpop.f32.mrb[0].mxu0
    %v1868 = vpop.f32.mrb[0].mxu0
    %v1869 = vadd.f32 0.0, %v1868
    %v1870 = vpop.f32.mrb[0].mxu0
    %1871 = vmatprep.mubr.bf16.mxu0 0
    %1872 = vmatmul.mubr.bf16.gmra.mrb[0].mxu0 %v919
    %v1873 = vpop.f32.mrb[0].mxu0
    %v1874 = vadd.f32 0.0, %v1873
    %v1875 = vpop.f32.mrb[0].mxu0
    %v1876 = vpop.f32.mrb[0].mxu0
    %v1877 = vadd.f32 0.0, %v1876
    %v1878 = vpop.f32.mrb[0].mxu0
    %1879 = vmatprep.mubr.bf16.mxu0 0
    %1880 = vmatmul.mubr.bf16.gmra.mrb[0].mxu0 %v920
    %v1881 = vpop.f32.mrb[0].mxu0
    %v1882 = vadd.f32 0.0, %v1881
    %v1883 = vpop.f32.mrb[0].mxu0
    %v1884 = vpop.f32.mrb[0].mxu0
    %v1885 = vadd.f32 0.0, %v1884
    %v1886 = vpop.f32.mrb[0].mxu0
    %1887 = vmatprep.mubr.bf16.mxu0 0
    %1888 = vmatmul.mubr.bf16.gmra.mrb[0].mxu0 %v921
    %v1889 = vpop.f32.mrb[0].mxu0
    %v1890 = vadd.f32 0.0, %v1889
    %v1891 = vpop.f32.mrb[0].mxu0
    %v1892 = vpop.f32.mrb[0].mxu0
    %v1893 = vadd.f32 0.0, %v1892
    %v1894 = vpop.f32.mrb[0].mxu0
    %1895 = vmatprep.mubr.bf16.mxu0 0
    %1896 = vmatmul.mubr.bf16.gmra.mrb[0].mxu0 %v922
    %v1897 = vpop.f32.mrb[0].mxu0
    %v1898 = vadd.f32 0.0, %v1897
    %v1899 = vpop.f32.mrb[0].mxu0
    %v1900 = vpop.f32.mrb[0].mxu0
    %v1901 = vadd.f32 0.0, %v1900
    %v1902 = vpop.f32.mrb[0].mxu0
    %1903 = vmatprep.mubr.bf16.mxu0 0
    %1904 = vmatmul.mubr.bf16.gmra.mrb[0].mxu0 %v923
    %v1905 = vpop.f32.mrb[0].mxu0
    %v1906 = vadd.f32 0.0, %v1905
    %v1907 = vpop.f32.mrb[0].mxu0
    %v1908 = vpop.f32.mrb[0].mxu0
    %v1909 = vadd.f32 0.0, %v1908
    %v1910 = vpop.f32.mrb[0].mxu0
    %1911 = vmatprep.mubr.bf16.mxu0 0
    %1912 = vmatmul.mubr.bf16.gmra.mrb[0].mxu0 %v924
    %v1913 = vpop.f32.mrb[0].mxu0
    %v1914 = vadd.f32 0.0, %v1913
    %v1915 = vpop.f32.mrb[0].mxu0
    %v1916 = vpop.f32.mrb[0].mxu0
    %v1917 = vadd.f32 0.0, %v1916
    %v1918 = vpop.f32.mrb[0].mxu0
    %1919 = vmatprep.mubr.bf16.mxu0 0
    %1920 = vmatmul.mubr.bf16.gmra.mrb[0].mxu0 %v925
    %v1921 = vpop.f32.mrb[0].mxu0
    %v1922 = vadd.f32 0.0, %v1921
    %v1923 = vpop.f32.mrb[0].mxu0
    %v1924 = vpop.f32.mrb[0].mxu0
    %v1925 = vadd.f32 0.0, %v1924
    %v1926 = vpop.f32.mrb[0].mxu0
    %1927 = vmatprep.mubr.bf16.mxu0 0
    %1928 = vmatmul.mubr.bf16.gmra.mrb[0].mxu0 %v926
    %v1929 = vpop.f32.mrb[0].mxu0
    %v1930 = vadd.f32 0.0, %v1929
    %v1931 = vpop.f32.mrb[0].mxu0
    %v1932 = vpop.f32.mrb[0].mxu0
    %v1933 = vadd.f32 0.0, %v1932
    %v1934 = vpop.f32.mrb[0].mxu0
    %1935 = vmatprep.mubr.bf16.mxu0 0
    %1936 = vmatmul.mubr.bf16.gmra.mrb[0].mxu0 %v927
    %v1937 = vpop.f32.mrb[0].mxu0
    %v1938 = vadd.f32 0.0, %v1937
    %v1939 = vpop.f32.mrb[0].mxu0
    %v1940 = vpop.f32.mrb[0].mxu0
    %v1941 = vadd.f32 0.0, %v1940
    %v1942 = vpop.f32.mrb[0].mxu0
    %1943 = vmatprep.mubr.bf16.mxu0 0
    %1944 = vmatmul.mubr.bf16.gmra.mrb[0].mxu0 %v928
    %v1945 = vpop.f32.mrb[0].mxu0
    %v1946 = vadd.f32 0.0, %v1945
    %v1947 = vpop.f32.mrb[0].mxu0
    %v1948 = vpop.f32.mrb[0].mxu0
    %v1949 = vadd.f32 0.0, %v1948
    %v1950 = vpop.f32.mrb[0].mxu0
    %1951 = vmatprep.mubr.bf16.mxu0 0
    %1952 = vmatmul.mubr.bf16.gmra.mrb[0].mxu0 %v929
    %v1953 = vpop.f32.mrb[0].mxu0
    %v1954 = vadd.f32 0.0, %v1953
    %v1955 = vpop.f32.mrb[0].mxu0
    %v1956 = vpop.f32.mrb[0].mxu0
    %v1957 = vadd.f32 0.0, %v1956
    %v1958 = vpop.f32.mrb[0].mxu0
    %1959 = vmatprep.mubr.bf16.mxu0 0
    %1960 = vmatmul.mubr.bf16.gmra.mrb[0].mxu0 %v930
    %v1961 = vpop.f32.mrb[0].mxu0
    %v1962 = vadd.f32 0.0, %v1961
    %v1963 = vpop.f32.mrb[0].mxu0
    %v1964 = vpop.f32.mrb[0].mxu0
    %v1965 = vadd.f32 0.0, %v1964
    %v1966 = vpop.f32.mrb[0].mxu0
    %1967 = vmatprep.mubr.bf16.mxu0 0
    %1968 = vmatmul.mubr.bf16.gmra.mrb[0].mxu0 %v931
    %v1969 = vpop.f32.mrb[0].mxu0
    %v1970 = vadd.f32 0.0, %v1969
    %v1971 = vpop.f32.mrb[0].mxu0
    %v1972 = vpop.f32.mrb[0].mxu0
    %v1973 = vadd.f32 0.0, %v1972
    %v1974 = vpop.f32.mrb[0].mxu0
    %1975 = vmatprep.mubr.bf16.mxu0 0
    %1976 = vmatmul.mubr.bf16.gmra.mrb[0].mxu0 %v932
    %v1977 = vpop.f32.mrb[0].mxu0
    %v1978 = vadd.f32 0.0, %v1977
    %v1979 = vpop.f32.mrb[0].mxu0
    %v1980 = vpop.f32.mrb[0].mxu0
    %v1981 = vadd.f32 0.0, %v1980
    %v1982 = vpop.f32.mrb[0].mxu0
    %1983 = vmatprep.mubr.bf16.mxu0 0
    %1984 = vmatmul.mubr.bf16.gmra.mrb[0].mxu0 %v933
    %v1985 = vpop.f32.mrb[0].mxu0
    %v1986 = vadd.f32 0.0, %v1985
    %v1987 = vpop.f32.mrb[0].mxu0
    %v1988 = vpop.f32.mrb[0].mxu0
    %v1989 = vadd.f32 0.0, %v1988
    %v1990 = vpop.f32.mrb[0].mxu0
    %1991 = vmatprep.mubr.bf16.mxu0 0
    %1992 = vmatmul.mubr.bf16.gmra.mrb[0].mxu0 %v934
    %v1993 = vpop.f32.mrb[0].mxu0
    %v1994 = vadd.f32 0.0, %v1993
    %v1995 = vpop.f32.mrb[0].mxu0
    %v1996 = vpop.f32.mrb[0].mxu0
    %v1997 = vadd.f32 0.0, %v1996
    %v1998 = vpop.f32.mrb[0].mxu0
    %1999 = vmatprep.mubr.bf16.mxu0 0
    %2000 = vmatmul.mubr.bf16.gmra.mrb[0].mxu0 %v935
    %v2001 = vpop.f32.mrb[0].mxu0
    %v2002 = vadd.f32 0.0, %v2001
    %v2003 = vpop.f32.mrb[0].mxu0
    %v2004 = vpop.f32.mrb[0].mxu0
    %v2005 = vadd.f32 0.0, %v2004
    %v2006 = vpop.f32.mrb[0].mxu0
    %2007 = vmatprep.mubr.bf16.mxu0 0
    %2008 = vmatmul.mubr.bf16.gmra.mrb[0].mxu0 %v936
    %v2009 = vpop.f32.mrb[0].mxu0
    %v2010 = vadd.f32 0.0, %v2009
    %v2011 = vpop.f32.mrb[0].mxu0
    %v2012 = vpop.f32.mrb[0].mxu0
    %v2013 = vadd.f32 0.0, %v2012
    %v2014 = vpop.f32.mrb[0].mxu0
    %2015 = vmatprep.mubr.bf16.mxu0 0
    %2016 = vmatmul.mubr.bf16.gmra.mrb[0].mxu0 %v937
    %v2017 = vpop.f32.mrb[0].mxu0
    %v2018 = vadd.f32 0.0, %v2017
    %v2019 = vpop.f32.mrb[0].mxu0
    %v2020 = vpop.f32.mrb[0].mxu0
    %v2021 = vadd.f32 0.0, %v2020
    %v2022 = vpop.f32.mrb[0].mxu0
    %2023 = vmatprep.mubr.bf16.mxu0 0
    %2024 = vmatmul.mubr.bf16.gmra.mrb[0].mxu0 %v938
    %v2025 = vpop.f32.mrb[0].mxu0
    %v2026 = vadd.f32 0.0, %v2025
    %v2027 = vpop.f32.mrb[0].mxu0
    %v2028 = vpop.f32.mrb[0].mxu0
    %v2029 = vadd.f32 0.0, %v2028
    %v2030 = vpop.f32.mrb[0].mxu0
    %2031 = vmatprep.mubr.bf16.mxu0 0
    %2032 = vmatmul.mubr.bf16.gmra.mrb[0].mxu0 %v939
    %v2033 = vpop.f32.mrb[0].mxu0
    %v2034 = vadd.f32 0.0, %v2033
    %v2035 = vpop.f32.mrb[0].mxu0
    %v2036 = vpop.f32.mrb[0].mxu0
    %v2037 = vadd.f32 0.0, %v2036
    %v2038 = vpop.f32.mrb[0].mxu0
    %2039 = vmatprep.mubr.bf16.mxu0 0
    %2040 = vmatmul.mubr.bf16.gmra.mrb[0].mxu0 %v940
    %v2041 = vpop.f32.mrb[0].mxu0
    %v2042 = vadd.f32 0.0, %v2041
    %v2043 = vpop.f32.mrb[0].mxu0
    %v2044 = vpop.f32.mrb[0].mxu0
    %v2045 = vadd.f32 0.0, %v2044
    %v2046 = vpop.f32.mrb[0].mxu0
    %2047 = vmatprep.mubr.bf16.mxu0 0
    %2048 = vmatmul.mubr.bf16.gmra.mrb[0].mxu0 %v941
    %v2049 = vpop.f32.mrb[0].mxu0
    %v2050 = vadd.f32 0.0, %v2049
    %v2051 = vpop.f32.mrb[0].mxu0
    %v2052 = vpop.f32.mrb[0].mxu0
    %v2053 = vadd.f32 0.0, %v2052
    %v2054 = vpop.f32.mrb[0].mxu0
    %2055 = vmatprep.mubr.bf16.mxu0 0
    %2056 = vmatmul.mubr.bf16.gmra.mrb[0].mxu0 %v942
    %v2057 = vpop.f32.mrb[0].mxu0
    %v2058 = vadd.f32 0.0, %v2057
    %v2059 = vpop.f32.mrb[0].mxu0
    %v2060 = vpop.f32.mrb[0].mxu0
    %v2061 = vadd.f32 0.0, %v2060
    %v2062 = vpop.f32.mrb[0].mxu0
    %2063 = vmatprep.mubr.bf16.mxu0 0
    %2064 = vmatmul.mubr.bf16.gmra.mrb[0].mxu0 %v943
    %v2065 = vpop.f32.mrb[0].mxu0
    %v2066 = vadd.f32 0.0, %v2065
    %v2067 = vpop.f32.mrb[0].mxu0
    %v2068 = vpop.f32.mrb[0].mxu0
    %v2069 = vadd.f32 0.0, %v2068
    %v2070 = vpop.f32.mrb[0].mxu0
    %2071 = vmatprep.mubr.bf16.mxu0 0
    %2072 = vmatmul.mubr.bf16.gmra.mrb[0].mxu0 %v944
    %v2073 = vpop.f32.mrb[0].mxu0
    %v2074 = vadd.f32 0.0, %v2073
    %v2075 = vpop.f32.mrb[0].mxu0
    %v2076 = vpop.f32.mrb[0].mxu0
    %v2077 = vadd.f32 0.0, %v2076
    %v2078 = vpop.f32.mrb[0].mxu0
    %2079 = vmatprep.mubr.bf16.mxu0 0
    %2080 = vmatmul.mubr.bf16.gmra.mrb[0].mxu0 %v945
    %v2081 = vpop.f32.mrb[0].mxu0
    %v2082 = vadd.f32 0.0, %v2081
    %v2083 = vpop.f32.mrb[0].mxu0
    %v2084 = vpop.f32.mrb[0].mxu0
    %v2085 = vadd.f32 0.0, %v2084
    %v2086 = vpop.f32.mrb[0].mxu0
    %2087 = vmatprep.mubr.bf16.mxu0 0
    %2088 = vmatmul.mubr.bf16.gmra.mrb[0].mxu0 %v946
    %v2089 = vpop.f32.mrb[0].mxu0
    %v2090 = vadd.f32 0.0, %v2089
    %v2091 = vpop.f32.mrb[0].mxu0
    %v2092 = vpop.f32.mrb[0].mxu0
    %v2093 = vadd.f32 0.0, %v2092
    %v2094 = vpop.f32.mrb[0].mxu0
    %2095 = vmatprep.mubr.bf16.mxu0 0
    %2096 = vmatmul.mubr.bf16.gmra.mrb[0].mxu0 %v947
    %v2097 = vpop.f32.mrb[0].mxu0
    %v2098 = vadd.f32 0.0, %v2097
    %v2099 = vpop.f32.mrb[0].mxu0
    %v2100 = vpop.f32.mrb[0].mxu0
    %v2101 = vadd.f32 0.0, %v2100
    %v2102 = vpop.f32.mrb[0].mxu0
    %2103 = vmatprep.mubr.bf16.mxu0 0
    %2104 = vmatmul.mubr.bf16.gmra.mrb[0].mxu0 %v948
    %v2105 = vpop.f32.mrb[0].mxu0
    %v2106 = vadd.f32 0.0, %v2105
    %v2107 = vpop.f32.mrb[0].mxu0
    %v2108 = vpop.f32.mrb[0].mxu0
    %v2109 = vadd.f32 0.0, %v2108
    %v2110 = vpop.f32.mrb[0].mxu0
    %2111 = vmatprep.mubr.bf16.mxu0 0
    %2112 = vmatmul.mubr.bf16.gmra.mrb[0].mxu0 %v949
    %v2113 = vpop.f32.mrb[0].mxu0
    %v2114 = vadd.f32 0.0, %v2113
    %v2115 = vpop.f32.mrb[0].mxu0
    %v2116 = vpop.f32.mrb[0].mxu0
    %v2117 = vadd.f32 0.0, %v2116
    %v2118 = vpop.f32.mrb[0].mxu0
    %2119 = vmatprep.mubr.bf16.mxu0 0
    %2120 = vmatmul.mubr.bf16.gmra.mrb[0].mxu0 %v950
    %v2121 = vpop.f32.mrb[0].mxu0
    %v2122 = vadd.f32 0.0, %v2121
    %v2123 = vpop.f32.mrb[0].mxu0
    %v2124 = vpop.f32.mrb[0].mxu0
    %v2125 = vadd.f32 0.0, %v2124
    %v2126 = vpop.f32.mrb[0].mxu0
    %2127 = vmatprep.mubr.bf16.mxu0 0
    %2128 = vmatmul.mubr.bf16.gmra.mrb[0].mxu0 %v951
    %v2129 = vpop.f32.mrb[0].mxu0
    %v2130 = vadd.f32 0.0, %v2129
    %v2131 = vpop.f32.mrb[0].mxu0
    %v2132 = vpop.f32.mrb[0].mxu0
    %v2133 = vadd.f32 0.0, %v2132
    %v2134 = vpop.f32.mrb[0].mxu0
    %2135 = vmatprep.mubr.bf16.mxu0 0
    %2136 = vmatmul.mubr.bf16.gmra.mrb[0].mxu0 %v952
    %v2137 = vpop.f32.mrb[0].mxu0
    %v2138 = vadd.f32 0.0, %v2137
    %v2139 = vpop.f32.mrb[0].mxu0
    %v2140 = vpop.f32.mrb[0].mxu0
    %v2141 = vadd.f32 0.0, %v2140
    %v2142 = vpop.f32.mrb[0].mxu0
    %2143 = vmatprep.mubr.bf16.mxu0 0
    %2144 = vmatmul.mubr.bf16.gmra.mrb[0].mxu0 %v953
    %v2145 = vpop.f32.mrb[0].mxu0
    %v2146 = vadd.f32 0.0, %v2145
    %v2147 = vpop.f32.mrb[0].mxu0
    %v2148 = vpop.f32.mrb[0].mxu0
    %v2149 = vadd.f32 0.0, %v2148
    %v2150 = vpop.f32.mrb[0].mxu0
    %2151 = vmatprep.mubr.bf16.mxu0 0
    %2152 = vmatmul.mubr.bf16.gmra.mrb[0].mxu0 %v954
    %v2153 = vpop.f32.mrb[0].mxu0
    %v2154 = vadd.f32 0.0, %v2153
    %v2155 = vpop.f32.mrb[0].mxu0
    %v2156 = vpop.f32.mrb[0].mxu0
    %v2157 = vadd.f32 0.0, %v2156
    %v2158 = vpop.f32.mrb[0].mxu0
    %2159 = vmatprep.mubr.bf16.mxu0 0
    %2160 = vmatmul.mubr.bf16.gmra.mrb[0].mxu0 %v955
    %v2161 = vpop.f32.mrb[0].mxu0
    %v2162 = vadd.f32 0.0, %v2161
    %v2163 = vpop.f32.mrb[0].mxu0
    %v2164 = vpop.f32.mrb[0].mxu0
    %v2165 = vadd.f32 0.0, %v2164
    %v2166 = vpop.f32.mrb[0].mxu0
    %2167 = vmatprep.mubr.bf16.mxu0 0
    %2168 = vmatmul.mubr.bf16.gmra.mrb[0].mxu0 %v956
    %v2169 = vpop.f32.mrb[0].mxu0
    %v2170 = vadd.f32 0.0, %v2169
    %v2171 = vpop.f32.mrb[0].mxu0
    %v2172 = vpop.f32.mrb[0].mxu0
    %v2173 = vadd.f32 0.0, %v2172
    %v2174 = vpop.f32.mrb[0].mxu0
    %2175 = vmatprep.mubr.bf16.mxu0 0
    %2176 = vmatmul.mubr.bf16.gmra.mrb[0].mxu0 %v957
    %v2177 = vpop.f32.mrb[0].mxu0
    %v2178 = vadd.f32 0.0, %v2177
    %v2179 = vpop.f32.mrb[0].mxu0
    %v2180 = vpop.f32.mrb[0].mxu0
    %v2181 = vadd.f32 0.0, %v2180
    %v2182 = vpop.f32.mrb[0].mxu0
    %2183 = vmatprep.mubr.bf16.mxu0 0
    %2184 = vmatmul.mubr.bf16.gmra.mrb[0].mxu0 %v958
    %v2185 = vpop.f32.mrb[0].mxu0
    %v2186 = vadd.f32 0.0, %v2185
    %v2187 = vpop.f32.mrb[0].mxu0
    %v2188 = vpop.f32.mrb[0].mxu0
    %v2189 = vadd.f32 0.0, %v2188
    %v2190 = vpop.f32.mrb[0].mxu0
    %2191 = vdwg.mxu0
    %v2192 = vadd.f32 %v1170, %v1173
    %v2193 = vadd.f32 %v2192, %v1178
    %v2194 = vadd.f32 %v2193, %v1181
    %v2195 = vadd.f32 %v2194, %v1186
    %v2196 = vadd.f32 %v2195, %v1189
    %v2197 = vadd.f32 %v2196, %v1194
    %v2198 = vadd.f32 %v2197, %v1197
    %v2199 = vadd.f32 %v2198, %v1202
    %v2200 = vadd.f32 %v2199, %v1205
    %v2201 = vadd.f32 %v2200, %v1210
    %v2202 = vadd.f32 %v2201, %v1213
    %v2203 = vadd.f32 %v2202, %v1218
    %v2204 = vadd.f32 %v2203, %v1221
    %v2205 = vadd.f32 %v2204, %v1226
    %v2206 = vadd.f32 %v2205, %v1229
    %v2207 = vadd.f32 %v2206, %v1234
    %v2208 = vadd.f32 %v2207, %v1237
    %v2209 = vadd.f32 %v2208, %v1242
    %v2210 = vadd.f32 %v2209, %v1245
    %v2211 = vadd.f32 %v2210, %v1250
    %v2212 = vadd.f32 %v2211, %v1253
    %v2213 = vadd.f32 %v2212, %v1258
    %v2214 = vadd.f32 %v2213, %v1261
    %v2215 = vadd.f32 %v2214, %v1266
    %v2216 = vadd.f32 %v2215, %v1269
    %v2217 = vadd.f32 %v2216, %v1274
    %v2218 = vadd.f32 %v2217, %v1277
    %v2219 = vadd.f32 %v2218, %v1282
    %v2220 = vadd.f32 %v2219, %v1285
    %v2221 = vadd.f32 %v2220, %v1290
    %v2222 = vadd.f32 %v2221, %v1293
    %v2223 = vadd.f32 %v2222, %v1298
    %v2224 = vadd.f32 %v2223, %v1301
    %v2225 = vadd.f32 %v2224, %v1306
    %v2226 = vadd.f32 %v2225, %v1309
    %v2227 = vadd.f32 %v2226, %v1314
    %v2228 = vadd.f32 %v2227, %v1317
    %v2229 = vadd.f32 %v2228, %v1322
    %v2230 = vadd.f32 %v2229, %v1325
    %v2231 = vadd.f32 %v2230, %v1330
    %v2232 = vadd.f32 %v2231, %v1333
    %v2233 = vadd.f32 %v2232, %v1338
    %v2234 = vadd.f32 %v2233, %v1341
    %v2235 = vadd.f32 %v2234, %v1346
    %v2236 = vadd.f32 %v2235, %v1349
    %v2237 = vadd.f32 %v2236, %v1354
    %v2238 = vadd.f32 %v2237, %v1357
    %v2239 = vadd.f32 %v2238, %v1362
    %v2240 = vadd.f32 %v2239, %v1365
    %v2241 = vadd.f32 %v2240, %v1370
    %v2242 = vadd.f32 %v2241, %v1373
    %v2243 = vadd.f32 %v2242, %v1378
    %v2244 = vadd.f32 %v2243, %v1381
    %v2245 = vadd.f32 %v2244, %v1386
    %v2246 = vadd.f32 %v2245, %v1389
    %v2247 = vadd.f32 %v2246, %v1394
    %v2248 = vadd.f32 %v2247, %v1397
    %v2249 = vadd.f32 %v2248, %v1402
    %v2250 = vadd.f32 %v2249, %v1405
    %v2251 = vadd.f32 %v2250, %v1410
    %v2252 = vadd.f32 %v2251, %v1413
    %v2253 = vadd.f32 %v2252, %v1418
    %v2254 = vadd.f32 %v2253, %v1421
    %v2255 = vadd.f32 %v2254, %v1426
    %v2256 = vadd.f32 %v2255, %v1429
    %v2257 = vadd.f32 %v2256, %v1434
    %v2258 = vadd.f32 %v2257, %v1437
    %v2259 = vadd.f32 %v2258, %v1442
    %v2260 = vadd.f32 %v2259, %v1445
    %v2261 = vadd.f32 %v2260, %v1450
    %v2262 = vadd.f32 %v2261, %v1453
    %v2263 = vadd.f32 %v2262, %v1458
    %v2264 = vadd.f32 %v2263, %v1461
    %v2265 = vadd.f32 %v2264, %v1466
    %v2266 = vadd.f32 %v2265, %v1469
    %v2267 = vadd.f32 %v2266, %v1474
    %v2268 = vadd.f32 %v2267, %v1477
    %v2269 = vadd.f32 %v2268, %v1482
    %v2270 = vadd.f32 %v2269, %v1485
    %v2271 = vadd.f32 %v2270, %v1490
    %v2272 = vadd.f32 %v2271, %v1493
    %v2273 = vadd.f32 %v2272, %v1498
    %v2274 = vadd.f32 %v2273, %v1501
    %v2275 = vadd.f32 %v2274, %v1506
    %v2276 = vadd.f32 %v2275, %v1509
    %v2277 = vadd.f32 %v2276, %v1514
    %v2278 = vadd.f32 %v2277, %v1517
    %v2279 = vadd.f32 %v2278, %v1522
    %v2280 = vadd.f32 %v2279, %v1525
    %v2281 = vadd.f32 %v2280, %v1530
    %v2282 = vadd.f32 %v2281, %v1533
    %v2283 = vadd.f32 %v2282, %v1538
    %v2284 = vadd.f32 %v2283, %v1541
    %v2285 = vadd.f32 %v2284, %v1546
    %v2286 = vadd.f32 %v2285, %v1549
    %v2287 = vadd.f32 %v2286, %v1554
    %v2288 = vadd.f32 %v2287, %v1557
    %v2289 = vadd.f32 %v2288, %v1562
    %v2290 = vadd.f32 %v2289, %v1565
    %v2291 = vadd.f32 %v2290, %v1570
    %v2292 = vadd.f32 %v2291, %v1573
    %v2293 = vadd.f32 %v2292, %v1578
    %v2294 = vadd.f32 %v2293, %v1581
    %v2295 = vadd.f32 %v2294, %v1586
    %v2296 = vadd.f32 %v2295, %v1589
    %v2297 = vadd.f32 %v2296, %v1594
    %v2298 = vadd.f32 %v2297, %v1597
    %v2299 = vadd.f32 %v2298, %v1602
    %v2300 = vadd.f32 %v2299, %v1605
    %v2301 = vadd.f32 %v2300, %v1610
    %v2302 = vadd.f32 %v2301, %v1613
    %v2303 = vadd.f32 %v2302, %v1618
    %v2304 = vadd.f32 %v2303, %v1621
    %v2305 = vadd.f32 %v2304, %v1626
    %v2306 = vadd.f32 %v2305, %v1629
    %v2307 = vadd.f32 %v2306, %v1634
    %v2308 = vadd.f32 %v2307, %v1637
    %v2309 = vadd.f32 %v2308, %v1642
    %v2310 = vadd.f32 %v2309, %v1645
    %v2311 = vadd.f32 %v2310, %v1650
    %v2312 = vadd.f32 %v2311, %v1653
    %v2313 = vadd.f32 %v2312, %v1658
    %v2314 = vadd.f32 %v2313, %v1661
    %v2315 = vadd.f32 %v2314, %v1666
    %v2316 = vadd.f32 %v2315, %v1669
    %v2317 = vadd.f32 %v2316, %v1674
    %v2318 = vadd.f32 %v2317, %v1677
    %v2319 = vadd.f32 %v2318, %v1682
    %v2320 = vadd.f32 %v2319, %v1685
    %v2321 = vadd.f32 %v2320, %v1690
    %v2322 = vadd.f32 %v2321, %v1693
    %v2323 = vadd.f32 %v2322, %v1698
    %v2324 = vadd.f32 %v2323, %v1701
    %v2325 = vadd.f32 %v2324, %v1706
    %v2326 = vadd.f32 %v2325, %v1709
    %v2327 = vadd.f32 %v2326, %v1714
    %v2328 = vadd.f32 %v2327, %v1717
    %v2329 = vadd.f32 %v2328, %v1722
    %v2330 = vadd.f32 %v2329, %v1725
    %v2331 = vadd.f32 %v2330, %v1730
    %v2332 = vadd.f32 %v2331, %v1733
    %v2333 = vadd.f32 %v2332, %v1738
    %v2334 = vadd.f32 %v2333, %v1741
    %v2335 = vadd.f32 %v2334, %v1746
    %v2336 = vadd.f32 %v2335, %v1749
    %v2337 = vadd.f32 %v2336, %v1754
    %v2338 = vadd.f32 %v2337, %v1757
    %v2339 = vadd.f32 %v2338, %v1762
    %v2340 = vadd.f32 %v2339, %v1765
    %v2341 = vadd.f32 %v2340, %v1770
    %v2342 = vadd.f32 %v2341, %v1773
    %v2343 = vadd.f32 %v2342, %v1778
    %v2344 = vadd.f32 %v2343, %v1781
    %v2345 = vadd.f32 %v2344, %v1786
    %v2346 = vadd.f32 %v2345, %v1789
    %v2347 = vadd.f32 %v2346, %v1794
    %v2348 = vadd.f32 %v2347, %v1797
    %v2349 = vadd.f32 %v2348, %v1802
    %v2350 = vadd.f32 %v2349, %v1805
    %v2351 = vadd.f32 %v2350, %v1810
    %v2352 = vadd.f32 %v2351, %v1813
    %v2353 = vadd.f32 %v2352, %v1818
    %v2354 = vadd.f32 %v2353, %v1821
    %v2355 = vadd.f32 %v2354, %v1826
    %v2356 = vadd.f32 %v2355, %v1829
    %v2357 = vadd.f32 %v2356, %v1834
    %v2358 = vadd.f32 %v2357, %v1837
    %v2359 = vadd.f32 %v2358, %v1842
    %v2360 = vadd.f32 %v2359, %v1845
    %v2361 = vadd.f32 %v2360, %v1850
    %v2362 = vadd.f32 %v2361, %v1853
    %v2363 = vadd.f32 %v2362, %v1858
    %v2364 = vadd.f32 %v2363, %v1861
    %v2365 = vadd.f32 %v2364, %v1866
    %v2366 = vadd.f32 %v2365, %v1869
    %v2367 = vadd.f32 %v2366, %v1874
    %v2368 = vadd.f32 %v2367, %v1877
    %v2369 = vadd.f32 %v2368, %v1882
    %v2370 = vadd.f32 %v2369, %v1885
    %v2371 = vadd.f32 %v2370, %v1890
    %v2372 = vadd.f32 %v2371, %v1893
    %v2373 = vadd.f32 %v2372, %v1898
    %v2374 = vadd.f32 %v2373, %v1901
    %v2375 = vadd.f32 %v2374, %v1906
    %v2376 = vadd.f32 %v2375, %v1909
    %v2377 = vadd.f32 %v2376, %v1914
    %v2378 = vadd.f32 %v2377, %v1917
    %v2379 = vadd.f32 %v2378, %v1922
    %v2380 = vadd.f32 %v2379, %v1925
    %v2381 = vadd.f32 %v2380, %v1930
    %v2382 = vadd.f32 %v2381, %v1933
    %v2383 = vadd.f32 %v2382, %v1938
    %v2384 = vadd.f32 %v2383, %v1941
    %v2385 = vadd.f32 %v2384, %v1946
    %v2386 = vadd.f32 %v2385, %v1949
    %v2387 = vadd.f32 %v2386, %v1954
    %v2388 = vadd.f32 %v2387, %v1957
    %v2389 = vadd.f32 %v2388, %v1962
    %v2390 = vadd.f32 %v2389, %v1965
    %v2391 = vadd.f32 %v2390, %v1970
    %v2392 = vadd.f32 %v2391, %v1973
    %v2393 = vadd.f32 %v2392, %v1978
    %v2394 = vadd.f32 %v2393, %v1981
    %v2395 = vadd.f32 %v2394, %v1986
    %v2396 = vadd.f32 %v2395, %v1989
    %v2397 = vadd.f32 %v2396, %v1994
    %v2398 = vadd.f32 %v2397, %v1997
    %v2399 = vadd.f32 %v2398, %v2002
    %v2400 = vadd.f32 %v2399, %v2005
    %v2401 = vadd.f32 %v2400, %v2010
    %v2402 = vadd.f32 %v2401, %v2013
    %v2403 = vadd.f32 %v2402, %v2018
    %v2404 = vadd.f32 %v2403, %v2021
    %v2405 = vadd.f32 %v2404, %v2026
    %v2406 = vadd.f32 %v2405, %v2029
    %v2407 = vadd.f32 %v2406, %v2034
    %v2408 = vadd.f32 %v2407, %v2037
    %v2409 = vadd.f32 %v2408, %v2042
    %v2410 = vadd.f32 %v2409, %v2045
    %v2411 = vadd.f32 %v2410, %v2050
    %v2412 = vadd.f32 %v2411, %v2053
    %v2413 = vadd.f32 %v2412, %v2058
    %v2414 = vadd.f32 %v2413, %v2061
    %v2415 = vadd.f32 %v2414, %v2066
    %v2416 = vadd.f32 %v2415, %v2069
    %v2417 = vadd.f32 %v2416, %v2074
    %v2418 = vadd.f32 %v2417, %v2077
    %v2419 = vadd.f32 %v2418, %v2082
    %v2420 = vadd.f32 %v2419, %v2085
    %v2421 = vadd.f32 %v2420, %v2090
    %v2422 = vadd.f32 %v2421, %v2093
    %v2423 = vadd.f32 %v2422, %v2098
    %v2424 = vadd.f32 %v2423, %v2101
    %v2425 = vadd.f32 %v2424, %v2106
    %v2426 = vadd.f32 %v2425, %v2109
    %v2427 = vadd.f32 %v2426, %v2114
    %v2428 = vadd.f32 %v2427, %v2117
    %v2429 = vadd.f32 %v2428, %v2122
    %v2430 = vadd.f32 %v2429, %v2125
    %v2431 = vadd.f32 %v2430, %v2130
    %v2432 = vadd.f32 %v2431, %v2133
    %v2433 = vadd.f32 %v2432, %v2138
    %v2434 = vadd.f32 %v2433, %v2141
    %v2435 = vadd.f32 %v2434, %v2146
    %v2436 = vadd.f32 %v2435, %v2149
    %v2437 = vadd.f32 %v2436, %v2154
    %v2438 = vadd.f32 %v2437, %v2157
    %v2439 = vadd.f32 %v2438, %v2162
    %v2440 = vadd.f32 %v2439, %v2165
    %v2441 = vadd.f32 %v2440, %v2170
    %v2442 = vadd.f32 %v2441, %v2173
    %v2443 = vadd.f32 %v2442, %v2178
    %v2444 = vadd.f32 %v2443, %v2181
    %v2445 = vadd.f32 %v2444, %v2186
    %v2446 = vadd.f32 %v2445, %v2189
    %v2447 = vrot.slane %v2446, 4
    %v2448 = vadd.f32 %v2446, %v2447
    %v2449 = vrot.slane %v2448, 2
    %v2450 = vadd.f32 %v2448, %v2449
    %v2451 = vrot.slane %v2450, 1
    %v2452 = vadd.f32 %v2450, %v2451
    %v2453 = vmul.f32 %v2452, 0.00048828125
    %v2454 = vsub.f32 %v1170, %v2453
    %v2455 = vsub.f32 %v1173, %v2453
    %v2456 = vsub.f32 %v1178, %v2453
    %v2457 = vsub.f32 %v1181, %v2453
    %v2458 = vsub.f32 %v1186, %v2453
    %v2459 = vsub.f32 %v1189, %v2453
    %v2460 = vsub.f32 %v1194, %v2453
    %v2461 = vsub.f32 %v1197, %v2453
    %v2462 = vsub.f32 %v1202, %v2453
    %v2463 = vsub.f32 %v1205, %v2453
    %v2464 = vsub.f32 %v1210, %v2453
    %v2465 = vsub.f32 %v1213, %v2453
    %v2466 = vsub.f32 %v1218, %v2453
    %v2467 = vsub.f32 %v1221, %v2453
    %v2468 = vsub.f32 %v1226, %v2453
    %v2469 = vsub.f32 %v1229, %v2453
    %v2470 = vsub.f32 %v1234, %v2453
    %v2471 = vsub.f32 %v1237, %v2453
    %v2472 = vsub.f32 %v1242, %v2453
    %v2473 = vsub.f32 %v1245, %v2453
    %v2474 = vsub.f32 %v1250, %v2453
    %v2475 = vsub.f32 %v1253, %v2453
    %v2476 = vsub.f32 %v1258, %v2453
    %v2477 = vsub.f32 %v1261, %v2453
    %v2478 = vsub.f32 %v1266, %v2453
    %v2479 = vsub.f32 %v1269, %v2453
    %v2480 = vsub.f32 %v1274, %v2453
    %v2481 = vsub.f32 %v1277, %v2453
    %v2482 = vsub.f32 %v1282, %v2453
    %v2483 = vsub.f32 %v1285, %v2453
    %v2484 = vsub.f32 %v1290, %v2453
    %v2485 = vsub.f32 %v1293, %v2453
    %v2486 = vsub.f32 %v1298, %v2453
    %v2487 = vsub.f32 %v1301, %v2453
    %v2488 = vsub.f32 %v1306, %v2453
    %v2489 = vsub.f32 %v1309, %v2453
    %v2490 = vsub.f32 %v1314, %v2453
    %v2491 = vsub.f32 %v1317, %v2453
    %v2492 = vsub.f32 %v1322, %v2453
    %v2493 = vsub.f32 %v1325, %v2453
    %v2494 = vsub.f32 %v1330, %v2453
    %v2495 = vsub.f32 %v1333, %v2453
    %v2496 = vsub.f32 %v1338, %v2453
    %v2497 = vsub.f32 %v1341, %v2453
    %v2498 = vsub.f32 %v1346, %v2453
    %v2499 = vsub.f32 %v1349, %v2453
    %v2500 = vsub.f32 %v1354, %v2453
    %v2501 = vsub.f32 %v1357, %v2453
    %v2502 = vsub.f32 %v1362, %v2453
    %v2503 = vsub.f32 %v1365, %v2453
    %v2504 = vsub.f32 %v1370, %v2453
    %v2505 = vsub.f32 %v1373, %v2453
    %v2506 = vsub.f32 %v1378, %v2453
    %v2507 = vsub.f32 %v1381, %v2453
    %v2508 = vsub.f32 %v1386, %v2453
    %v2509 = vsub.f32 %v1389, %v2453
    %v2510 = vsub.f32 %v1394, %v2453
    %v2511 = vsub.f32 %v1397, %v2453
    %v2512 = vsub.f32 %v1402, %v2453
    %v2513 = vsub.f32 %v1405, %v2453
    %v2514 = vsub.f32 %v1410, %v2453
    %v2515 = vsub.f32 %v1413, %v2453
    %v2516 = vsub.f32 %v1418, %v2453
    %v2517 = vsub.f32 %v1421, %v2453
    %v2518 = vsub.f32 %v1426, %v2453
    %v2519 = vsub.f32 %v1429, %v2453
    %v2520 = vsub.f32 %v1434, %v2453
    %v2521 = vsub.f32 %v1437, %v2453
    %v2522 = vsub.f32 %v1442, %v2453
    %v2523 = vsub.f32 %v1445, %v2453
    %v2524 = vsub.f32 %v1450, %v2453
    %v2525 = vsub.f32 %v1453, %v2453
    %v2526 = vsub.f32 %v1458, %v2453
    %v2527 = vsub.f32 %v1461, %v2453
    %v2528 = vsub.f32 %v1466, %v2453
    %v2529 = vsub.f32 %v1469, %v2453
    %v2530 = vsub.f32 %v1474, %v2453
    %v2531 = vsub.f32 %v1477, %v2453
    %v2532 = vsub.f32 %v1482, %v2453
    %v2533 = vsub.f32 %v1485, %v2453
    %v2534 = vsub.f32 %v1490, %v2453
    %v2535 = vsub.f32 %v1493, %v2453
    %v2536 = vsub.f32 %v1498, %v2453
    %v2537 = vsub.f32 %v1501, %v2453
    %v2538 = vsub.f32 %v1506, %v2453
    %v2539 = vsub.f32 %v1509, %v2453
    %v2540 = vsub.f32 %v1514, %v2453
    %v2541 = vsub.f32 %v1517, %v2453
    %v2542 = vsub.f32 %v1522, %v2453
    %v2543 = vsub.f32 %v1525, %v2453
    %v2544 = vsub.f32 %v1530, %v2453
    %v2545 = vsub.f32 %v1533, %v2453
    %v2546 = vsub.f32 %v1538, %v2453
    %v2547 = vsub.f32 %v1541, %v2453
    %v2548 = vsub.f32 %v1546, %v2453
    %v2549 = vsub.f32 %v1549, %v2453
    %v2550 = vsub.f32 %v1554, %v2453
    %v2551 = vsub.f32 %v1557, %v2453
    %v2552 = vsub.f32 %v1562, %v2453
    %v2553 = vsub.f32 %v1565, %v2453
    %v2554 = vsub.f32 %v1570, %v2453
    %v2555 = vsub.f32 %v1573, %v2453
    %v2556 = vsub.f32 %v1578, %v2453
    %v2557 = vsub.f32 %v1581, %v2453
    %v2558 = vsub.f32 %v1586, %v2453
    %v2559 = vsub.f32 %v1589, %v2453
    %v2560 = vsub.f32 %v1594, %v2453
    %v2561 = vsub.f32 %v1597, %v2453
    %v2562 = vsub.f32 %v1602, %v2453
    %v2563 = vsub.f32 %v1605, %v2453
    %v2564 = vsub.f32 %v1610, %v2453
    %v2565 = vsub.f32 %v1613, %v2453
    %v2566 = vsub.f32 %v1618, %v2453
    %v2567 = vsub.f32 %v1621, %v2453
    %v2568 = vsub.f32 %v1626, %v2453
    %v2569 = vsub.f32 %v1629, %v2453
    %v2570 = vsub.f32 %v1634, %v2453
    %v2571 = vsub.f32 %v1637, %v2453
    %v2572 = vsub.f32 %v1642, %v2453
    %v2573 = vsub.f32 %v1645, %v2453
    %v2574 = vsub.f32 %v1650, %v2453
    %v2575 = vsub.f32 %v1653, %v2453
    %v2576 = vsub.f32 %v1658, %v2453
    %v2577 = vsub.f32 %v1661, %v2453
    %v2578 = vsub.f32 %v1666, %v2453
    %v2579 = vsub.f32 %v1669, %v2453
    %v2580 = vsub.f32 %v1674, %v2453
    %v2581 = vsub.f32 %v1677, %v2453
    %v2582 = vsub.f32 %v1682, %v2453
    %v2583 = vsub.f32 %v1685, %v2453
    %v2584 = vsub.f32 %v1690, %v2453
    %v2585 = vsub.f32 %v1693, %v2453
    %v2586 = vsub.f32 %v1698, %v2453
    %v2587 = vsub.f32 %v1701, %v2453
    %v2588 = vsub.f32 %v1706, %v2453
    %v2589 = vsub.f32 %v1709, %v2453
    %v2590 = vsub.f32 %v1714, %v2453
    %v2591 = vsub.f32 %v1717, %v2453
    %v2592 = vsub.f32 %v1722, %v2453
    %v2593 = vsub.f32 %v1725, %v2453
    %v2594 = vsub.f32 %v1730, %v2453
    %v2595 = vsub.f32 %v1733, %v2453
    %v2596 = vsub.f32 %v1738, %v2453
    %v2597 = vsub.f32 %v1741, %v2453
    %v2598 = vsub.f32 %v1746, %v2453
    %v2599 = vsub.f32 %v1749, %v2453
    %v2600 = vsub.f32 %v1754, %v2453
    %v2601 = vsub.f32 %v1757, %v2453
    %v2602 = vsub.f32 %v1762, %v2453
    %v2603 = vsub.f32 %v1765, %v2453
    %v2604 = vsub.f32 %v1770, %v2453
    %v2605 = vsub.f32 %v1773, %v2453
    %v2606 = vsub.f32 %v1778, %v2453
    %v2607 = vsub.f32 %v1781, %v2453
    %v2608 = vsub.f32 %v1786, %v2453
    %v2609 = vsub.f32 %v1789, %v2453
    %v2610 = vsub.f32 %v1794, %v2453
    %v2611 = vsub.f32 %v1797, %v2453
    %v2612 = vsub.f32 %v1802, %v2453
    %v2613 = vsub.f32 %v1805, %v2453
    %v2614 = vsub.f32 %v1810, %v2453
    %v2615 = vsub.f32 %v1813, %v2453
    %v2616 = vsub.f32 %v1818, %v2453
    %v2617 = vsub.f32 %v1821, %v2453
    %v2618 = vsub.f32 %v1826, %v2453
    %v2619 = vsub.f32 %v1829, %v2453
    %v2620 = vsub.f32 %v1834, %v2453
    %v2621 = vsub.f32 %v1837, %v2453
    %v2622 = vsub.f32 %v1842, %v2453
    %v2623 = vsub.f32 %v1845, %v2453
    %v2624 = vsub.f32 %v1850, %v2453
    %v2625 = vsub.f32 %v1853, %v2453
    %v2626 = vsub.f32 %v1858, %v2453
    %v2627 = vsub.f32 %v1861, %v2453
    %v2628 = vsub.f32 %v1866, %v2453
    %v2629 = vsub.f32 %v1869, %v2453
    %v2630 = vsub.f32 %v1874, %v2453
    %v2631 = vsub.f32 %v1877, %v2453
    %v2632 = vsub.f32 %v1882, %v2453
    %v2633 = vsub.f32 %v1885, %v2453
    %v2634 = vsub.f32 %v1890, %v2453
    %v2635 = vsub.f32 %v1893, %v2453
    %v2636 = vsub.f32 %v1898, %v2453
    %v2637 = vsub.f32 %v1901, %v2453
    %v2638 = vsub.f32 %v1906, %v2453
    %v2639 = vsub.f32 %v1909, %v2453
    %v2640 = vsub.f32 %v1914, %v2453
    %v2641 = vsub.f32 %v1917, %v2453
    %v2642 = vsub.f32 %v1922, %v2453
    %v2643 = vsub.f32 %v1925, %v2453
    %v2644 = vsub.f32 %v1930, %v2453
    %v2645 = vsub.f32 %v1933, %v2453
    %v2646 = vsub.f32 %v1938, %v2453
    %v2647 = vsub.f32 %v1941, %v2453
    %v2648 = vsub.f32 %v1946, %v2453
    %v2649 = vsub.f32 %v1949, %v2453
    %v2650 = vsub.f32 %v1954, %v2453
    %v2651 = vsub.f32 %v1957, %v2453
    %v2652 = vsub.f32 %v1962, %v2453
    %v2653 = vsub.f32 %v1965, %v2453
    %v2654 = vsub.f32 %v1970, %v2453
    %v2655 = vsub.f32 %v1973, %v2453
    %v2656 = vsub.f32 %v1978, %v2453
    %v2657 = vsub.f32 %v1981, %v2453
    %v2658 = vsub.f32 %v1986, %v2453
    %v2659 = vsub.f32 %v1989, %v2453
    %v2660 = vsub.f32 %v1994, %v2453
    %v2661 = vsub.f32 %v1997, %v2453
    %v2662 = vsub.f32 %v2002, %v2453
    %v2663 = vsub.f32 %v2005, %v2453
    %v2664 = vsub.f32 %v2010, %v2453
    %v2665 = vsub.f32 %v2013, %v2453
    %v2666 = vsub.f32 %v2018, %v2453
    %v2667 = vsub.f32 %v2021, %v2453
    %v2668 = vsub.f32 %v2026, %v2453
    %v2669 = vsub.f32 %v2029, %v2453
    %v2670 = vsub.f32 %v2034, %v2453
    %v2671 = vsub.f32 %v2037, %v2453
    %v2672 = vsub.f32 %v2042, %v2453
    %v2673 = vsub.f32 %v2045, %v2453
    %v2674 = vsub.f32 %v2050, %v2453
    %v2675 = vsub.f32 %v2053, %v2453
    %v2676 = vsub.f32 %v2058, %v2453
    %v2677 = vsub.f32 %v2061, %v2453
    %v2678 = vsub.f32 %v2066, %v2453
    %v2679 = vsub.f32 %v2069, %v2453
    %v2680 = vsub.f32 %v2074, %v2453
    %v2681 = vsub.f32 %v2077, %v2453
    %v2682 = vsub.f32 %v2082, %v2453
    %v2683 = vsub.f32 %v2085, %v2453
    %v2684 = vsub.f32 %v2090, %v2453
    %v2685 = vsub.f32 %v2093, %v2453
    %v2686 = vsub.f32 %v2098, %v2453
    %v2687 = vsub.f32 %v2101, %v2453
    %v2688 = vsub.f32 %v2106, %v2453
    %v2689 = vsub.f32 %v2109, %v2453
    %v2690 = vsub.f32 %v2114, %v2453
    %v2691 = vsub.f32 %v2117, %v2453
    %v2692 = vsub.f32 %v2122, %v2453
    %v2693 = vsub.f32 %v2125, %v2453
    %v2694 = vsub.f32 %v2130, %v2453
    %v2695 = vsub.f32 %v2133, %v2453
    %v2696 = vsub.f32 %v2138, %v2453
    %v2697 = vsub.f32 %v2141, %v2453
    %v2698 = vsub.f32 %v2146, %v2453
    %v2699 = vsub.f32 %v2149, %v2453
    %v2700 = vsub.f32 %v2154, %v2453
    %v2701 = vsub.f32 %v2157, %v2453
    %v2702 = vsub.f32 %v2162, %v2453
    %v2703 = vsub.f32 %v2165, %v2453
    %v2704 = vsub.f32 %v2170, %v2453
    %v2705 = vsub.f32 %v2173, %v2453
    %v2706 = vsub.f32 %v2178, %v2453
    %v2707 = vsub.f32 %v2181, %v2453
    %v2708 = vsub.f32 %v2186, %v2453
    %v2709 = vsub.f32 %v2189, %v2453
    %v2710 = vmul.f32 %v2454, %v2454
    %v2711 = vmul.f32 %v2455, %v2455
    %v2712 = vmul.f32 %v2456, %v2456
    %v2713 = vmul.f32 %v2457, %v2457
    %v2714 = vmul.f32 %v2458, %v2458
    %v2715 = vmul.f32 %v2459, %v2459
    %v2716 = vmul.f32 %v2460, %v2460
    %v2717 = vmul.f32 %v2461, %v2461
    %v2718 = vmul.f32 %v2462, %v2462
    %v2719 = vmul.f32 %v2463, %v2463
    %v2720 = vmul.f32 %v2464, %v2464
    %v2721 = vmul.f32 %v2465, %v2465
    %v2722 = vmul.f32 %v2466, %v2466
    %v2723 = vmul.f32 %v2467, %v2467
    %v2724 = vmul.f32 %v2468, %v2468
    %v2725 = vmul.f32 %v2469, %v2469
    %v2726 = vmul.f32 %v2470, %v2470
    %v2727 = vmul.f32 %v2471, %v2471
    %v2728 = vmul.f32 %v2472, %v2472
    %v2729 = vmul.f32 %v2473, %v2473
    %v2730 = vmul.f32 %v2474, %v2474
    %v2731 = vmul.f32 %v2475, %v2475
    %v2732 = vmul.f32 %v2476, %v2476
    %v2733 = vmul.f32 %v2477, %v2477
    %v2734 = vmul.f32 %v2478, %v2478
    %v2735 = vmul.f32 %v2479, %v2479
    %v2736 = vmul.f32 %v2480, %v2480
    %v2737 = vmul.f32 %v2481, %v2481
    %v2738 = vmul.f32 %v2482, %v2482
    %v2739 = vmul.f32 %v2483, %v2483
    %v2740 = vmul.f32 %v2484, %v2484
    %v2741 = vmul.f32 %v2485, %v2485
    %v2742 = vmul.f32 %v2486, %v2486
    %v2743 = vmul.f32 %v2487, %v2487
    %v2744 = vmul.f32 %v2488, %v2488
    %v2745 = vmul.f32 %v2489, %v2489
    %v2746 = vmul.f32 %v2490, %v2490
    %v2747 = vmul.f32 %v2491, %v2491
    %v2748 = vmul.f32 %v2492, %v2492
    %v2749 = vmul.f32 %v2493, %v2493
    %v2750 = vmul.f32 %v2494, %v2494
    %v2751 = vmul.f32 %v2495, %v2495
    %v2752 = vmul.f32 %v2496, %v2496
    %v2753 = vmul.f32 %v2497, %v2497
    %v2754 = vmul.f32 %v2498, %v2498
    %v2755 = vmul.f32 %v2499, %v2499
    %v2756 = vmul.f32 %v2500, %v2500
    %v2757 = vmul.f32 %v2501, %v2501
    %v2758 = vmul.f32 %v2502, %v2502
    %v2759 = vmul.f32 %v2503, %v2503
    %v2760 = vmul.f32 %v2504, %v2504
    %v2761 = vmul.f32 %v2505, %v2505
    %v2762 = vmul.f32 %v2506, %v2506
    %v2763 = vmul.f32 %v2507, %v2507
    %v2764 = vmul.f32 %v2508, %v2508
    %v2765 = vmul.f32 %v2509, %v2509
    %v2766 = vmul.f32 %v2510, %v2510
    %v2767 = vmul.f32 %v2511, %v2511
    %v2768 = vmul.f32 %v2512, %v2512
    %v2769 = vmul.f32 %v2513, %v2513
    %v2770 = vmul.f32 %v2514, %v2514
    %v2771 = vmul.f32 %v2515, %v2515
    %v2772 = vmul.f32 %v2516, %v2516
    %v2773 = vmul.f32 %v2517, %v2517
    %v2774 = vmul.f32 %v2518, %v2518
    %v2775 = vmul.f32 %v2519, %v2519
    %v2776 = vmul.f32 %v2520, %v2520
    %v2777 = vmul.f32 %v2521, %v2521
    %v2778 = vmul.f32 %v2522, %v2522
    %v2779 = vmul.f32 %v2523, %v2523
    %v2780 = vmul.f32 %v2524, %v2524
    %v2781 = vmul.f32 %v2525, %v2525
    %v2782 = vmul.f32 %v2526, %v2526
    %v2783 = vmul.f32 %v2527, %v2527
    %v2784 = vmul.f32 %v2528, %v2528
    %v2785 = vmul.f32 %v2529, %v2529
    %v2786 = vmul.f32 %v2530, %v2530
    %v2787 = vmul.f32 %v2531, %v2531
    %v2788 = vmul.f32 %v2532, %v2532
    %v2789 = vmul.f32 %v2533, %v2533
    %v2790 = vmul.f32 %v2534, %v2534
    %v2791 = vmul.f32 %v2535, %v2535
    %v2792 = vmul.f32 %v2536, %v2536
    %v2793 = vmul.f32 %v2537, %v2537
    %v2794 = vmul.f32 %v2538, %v2538
    %v2795 = vmul.f32 %v2539, %v2539
    %v2796 = vmul.f32 %v2540, %v2540
    %v2797 = vmul.f32 %v2541, %v2541
    %v2798 = vmul.f32 %v2542, %v2542
    %v2799 = vmul.f32 %v2543, %v2543
    %v2800 = vmul.f32 %v2544, %v2544
    %v2801 = vmul.f32 %v2545, %v2545
    %v2802 = vmul.f32 %v2546, %v2546
    %v2803 = vmul.f32 %v2547, %v2547
    %v2804 = vmul.f32 %v2548, %v2548
    %v2805 = vmul.f32 %v2549, %v2549
    %v2806 = vmul.f32 %v2550, %v2550
    %v2807 = vmul.f32 %v2551, %v2551
    %v2808 = vmul.f32 %v2552, %v2552
    %v2809 = vmul.f32 %v2553, %v2553
    %v2810 = vmul.f32 %v2554, %v2554
    %v2811 = vmul.f32 %v2555, %v2555
    %v2812 = vmul.f32 %v2556, %v2556
    %v2813 = vmul.f32 %v2557, %v2557
    %v2814 = vmul.f32 %v2558, %v2558
    %v2815 = vmul.f32 %v2559, %v2559
    %v2816 = vmul.f32 %v2560, %v2560
    %v2817 = vmul.f32 %v2561, %v2561
    %v2818 = vmul.f32 %v2562, %v2562
    %v2819 = vmul.f32 %v2563, %v2563
    %v2820 = vmul.f32 %v2564, %v2564
    %v2821 = vmul.f32 %v2565, %v2565
    %v2822 = vmul.f32 %v2566, %v2566
    %v2823 = vmul.f32 %v2567, %v2567
    %v2824 = vmul.f32 %v2568, %v2568
    %v2825 = vmul.f32 %v2569, %v2569
    %v2826 = vmul.f32 %v2570, %v2570
    %v2827 = vmul.f32 %v2571, %v2571
    %v2828 = vmul.f32 %v2572, %v2572
    %v2829 = vmul.f32 %v2573, %v2573
    %v2830 = vmul.f32 %v2574, %v2574
    %v2831 = vmul.f32 %v2575, %v2575
    %v2832 = vmul.f32 %v2576, %v2576
    %v2833 = vmul.f32 %v2577, %v2577
    %v2834 = vmul.f32 %v2578, %v2578
    %v2835 = vmul.f32 %v2579, %v2579
    %v2836 = vmul.f32 %v2580, %v2580
    %v2837 = vmul.f32 %v2581, %v2581
    %v2838 = vmul.f32 %v2582, %v2582
    %v2839 = vmul.f32 %v2583, %v2583
    %v2840 = vmul.f32 %v2584, %v2584
    %v2841 = vmul.f32 %v2585, %v2585
    %v2842 = vmul.f32 %v2586, %v2586
    %v2843 = vmul.f32 %v2587, %v2587
    %v2844 = vmul.f32 %v2588, %v2588
    %v2845 = vmul.f32 %v2589, %v2589
    %v2846 = vmul.f32 %v2590, %v2590
    %v2847 = vmul.f32 %v2591, %v2591
    %v2848 = vmul.f32 %v2592, %v2592
    %v2849 = vmul.f32 %v2593, %v2593
    %v2850 = vmul.f32 %v2594, %v2594
    %v2851 = vmul.f32 %v2595, %v2595
    %v2852 = vmul.f32 %v2596, %v2596
    %v2853 = vmul.f32 %v2597, %v2597
    %v2854 = vmul.f32 %v2598, %v2598
    %v2855 = vmul.f32 %v2599, %v2599
    %v2856 = vmul.f32 %v2600, %v2600
    %v2857 = vmul.f32 %v2601, %v2601
    %v2858 = vmul.f32 %v2602, %v2602
    %v2859 = vmul.f32 %v2603, %v2603
    %v2860 = vmul.f32 %v2604, %v2604
    %v2861 = vmul.f32 %v2605, %v2605
    %v2862 = vmul.f32 %v2606, %v2606
    %v2863 = vmul.f32 %v2607, %v2607
    %v2864 = vmul.f32 %v2608, %v2608
    %v2865 = vmul.f32 %v2609, %v2609
    %v2866 = vmul.f32 %v2610, %v2610
    %v2867 = vmul.f32 %v2611, %v2611
    %v2868 = vmul.f32 %v2612, %v2612
    %v2869 = vmul.f32 %v2613, %v2613
    %v2870 = vmul.f32 %v2614, %v2614
    %v2871 = vmul.f32 %v2615, %v2615
    %v2872 = vmul.f32 %v2616, %v2616
    %v2873 = vmul.f32 %v2617, %v2617
    %v2874 = vmul.f32 %v2618, %v2618
    %v2875 = vmul.f32 %v2619, %v2619
    %v2876 = vmul.f32 %v2620, %v2620
    %v2877 = vmul.f32 %v2621, %v2621
    %v2878 = vmul.f32 %v2622, %v2622
    %v2879 = vmul.f32 %v2623, %v2623
    %v2880 = vmul.f32 %v2624, %v2624
    %v2881 = vmul.f32 %v2625, %v2625
    %v2882 = vmul.f32 %v2626, %v2626
    %v2883 = vmul.f32 %v2627, %v2627
    %v2884 = vmul.f32 %v2628, %v2628
    %v2885 = vmul.f32 %v2629, %v2629
    %v2886 = vmul.f32 %v2630, %v2630
    %v2887 = vmul.f32 %v2631, %v2631
    %v2888 = vmul.f32 %v2632, %v2632
    %v2889 = vmul.f32 %v2633, %v2633
    %v2890 = vmul.f32 %v2634, %v2634
    %v2891 = vmul.f32 %v2635, %v2635
    %v2892 = vmul.f32 %v2636, %v2636
    %v2893 = vmul.f32 %v2637, %v2637
    %v2894 = vmul.f32 %v2638, %v2638
    %v2895 = vmul.f32 %v2639, %v2639
    %v2896 = vmul.f32 %v2640, %v2640
    %v2897 = vmul.f32 %v2641, %v2641
    %v2898 = vmul.f32 %v2642, %v2642
    %v2899 = vmul.f32 %v2643, %v2643
    %v2900 = vmul.f32 %v2644, %v2644
    %v2901 = vmul.f32 %v2645, %v2645
    %v2902 = vmul.f32 %v2646, %v2646
    %v2903 = vmul.f32 %v2647, %v2647
    %v2904 = vmul.f32 %v2648, %v2648
    %v2905 = vmul.f32 %v2649, %v2649
    %v2906 = vmul.f32 %v2650, %v2650
    %v2907 = vmul.f32 %v2651, %v2651
    %v2908 = vmul.f32 %v2652, %v2652
    %v2909 = vmul.f32 %v2653, %v2653
    %v2910 = vmul.f32 %v2654, %v2654
    %v2911 = vmul.f32 %v2655, %v2655
    %v2912 = vmul.f32 %v2656, %v2656
    %v2913 = vmul.f32 %v2657, %v2657
    %v2914 = vmul.f32 %v2658, %v2658
    %v2915 = vmul.f32 %v2659, %v2659
    %v2916 = vmul.f32 %v2660, %v2660
    %v2917 = vmul.f32 %v2661, %v2661
    %v2918 = vmul.f32 %v2662, %v2662
    %v2919 = vmul.f32 %v2663, %v2663
    %v2920 = vmul.f32 %v2664, %v2664
    %v2921 = vmul.f32 %v2665, %v2665
    %v2922 = vmul.f32 %v2666, %v2666
    %v2923 = vmul.f32 %v2667, %v2667
    %v2924 = vmul.f32 %v2668, %v2668
    %v2925 = vmul.f32 %v2669, %v2669
    %v2926 = vmul.f32 %v2670, %v2670
    %v2927 = vmul.f32 %v2671, %v2671
    %v2928 = vmul.f32 %v2672, %v2672
    %v2929 = vmul.f32 %v2673, %v2673
    %v2930 = vmul.f32 %v2674, %v2674
    %v2931 = vmul.f32 %v2675, %v2675
    %v2932 = vmul.f32 %v2676, %v2676
    %v2933 = vmul.f32 %v2677, %v2677
    %v2934 = vmul.f32 %v2678, %v2678
    %v2935 = vmul.f32 %v2679, %v2679
    %v2936 = vmul.f32 %v2680, %v2680
    %v2937 = vmul.f32 %v2681, %v2681
    %v2938 = vmul.f32 %v2682, %v2682
    %v2939 = vmul.f32 %v2683, %v2683
    %v2940 = vmul.f32 %v2684, %v2684
    %v2941 = vmul.f32 %v2685, %v2685
    %v2942 = vmul.f32 %v2686, %v2686
    %v2943 = vmul.f32 %v2687, %v2687
    %v2944 = vmul.f32 %v2688, %v2688
    %v2945 = vmul.f32 %v2689, %v2689
    %v2946 = vmul.f32 %v2690, %v2690
    %v2947 = vmul.f32 %v2691, %v2691
    %v2948 = vmul.f32 %v2692, %v2692
    %v2949 = vmul.f32 %v2693, %v2693
    %v2950 = vmul.f32 %v2694, %v2694
    %v2951 = vmul.f32 %v2695, %v2695
    %v2952 = vmul.f32 %v2696, %v2696
    %v2953 = vmul.f32 %v2697, %v2697
    %v2954 = vmul.f32 %v2698, %v2698
    %v2955 = vmul.f32 %v2699, %v2699
    %v2956 = vmul.f32 %v2700, %v2700
    %v2957 = vmul.f32 %v2701, %v2701
    %v2958 = vmul.f32 %v2702, %v2702
    %v2959 = vmul.f32 %v2703, %v2703
    %v2960 = vmul.f32 %v2704, %v2704
    %v2961 = vmul.f32 %v2705, %v2705
    %v2962 = vmul.f32 %v2706, %v2706
    %v2963 = vmul.f32 %v2707, %v2707
    %v2964 = vmul.f32 %v2708, %v2708
    %v2965 = vmul.f32 %v2709, %v2709
    %v2966 = vadd.f32 %v2710, %v2711
    %v2967 = vadd.f32 %v2966, %v2712
    %v2968 = vadd.f32 %v2967, %v2713
    %v2969 = vadd.f32 %v2968, %v2714
    %v2970 = vadd.f32 %v2969, %v2715
    %v2971 = vadd.f32 %v2970, %v2716
    %v2972 = vadd.f32 %v2971, %v2717
    %v2973 = vadd.f32 %v2972, %v2718
    %v2974 = vadd.f32 %v2973, %v2719
    %v2975 = vadd.f32 %v2974, %v2720
    %v2976 = vadd.f32 %v2975, %v2721
    %v2977 = vadd.f32 %v2976, %v2722
    %v2978 = vadd.f32 %v2977, %v2723
    %v2979 = vadd.f32 %v2978, %v2724
    %v2980 = vadd.f32 %v2979, %v2725
    %v2981 = vadd.f32 %v2980, %v2726
    %v2982 = vadd.f32 %v2981, %v2727
    %v2983 = vadd.f32 %v2982, %v2728
    %v2984 = vadd.f32 %v2983, %v2729
    %v2985 = vadd.f32 %v2984, %v2730
    %v2986 = vadd.f32 %v2985, %v2731
    %v2987 = vadd.f32 %v2986, %v2732
    %v2988 = vadd.f32 %v2987, %v2733
    %v2989 = vadd.f32 %v2988, %v2734
    %v2990 = vadd.f32 %v2989, %v2735
    %v2991 = vadd.f32 %v2990, %v2736
    %v2992 = vadd.f32 %v2991, %v2737
    %v2993 = vadd.f32 %v2992, %v2738
    %v2994 = vadd.f32 %v2993, %v2739
    %v2995 = vadd.f32 %v2994, %v2740
    %v2996 = vadd.f32 %v2995, %v2741
    %v2997 = vadd.f32 %v2996, %v2742
    %v2998 = vadd.f32 %v2997, %v2743
    %v2999 = vadd.f32 %v2998, %v2744
    %v3000 = vadd.f32 %v2999, %v2745
    %v3001 = vadd.f32 %v3000, %v2746
    %v3002 = vadd.f32 %v3001, %v2747
    %v3003 = vadd.f32 %v3002, %v2748
    %v3004 = vadd.f32 %v3003, %v2749
    %v3005 = vadd.f32 %v3004, %v2750
    %v3006 = vadd.f32 %v3005, %v2751
    %v3007 = vadd.f32 %v3006, %v2752
    %v3008 = vadd.f32 %v3007, %v2753
    %v3009 = vadd.f32 %v3008, %v2754
    %v3010 = vadd.f32 %v3009, %v2755
    %v3011 = vadd.f32 %v3010, %v2756
    %v3012 = vadd.f32 %v3011, %v2757
    %v3013 = vadd.f32 %v3012, %v2758
    %v3014 = vadd.f32 %v3013, %v2759
    %v3015 = vadd.f32 %v3014, %v2760
    %v3016 = vadd.f32 %v3015, %v2761
    %v3017 = vadd.f32 %v3016, %v2762
    %v3018 = vadd.f32 %v3017, %v2763
    %v3019 = vadd.f32 %v3018, %v2764
    %v3020 = vadd.f32 %v3019, %v2765
    %v3021 = vadd.f32 %v3020, %v2766
    %v3022 = vadd.f32 %v3021, %v2767
    %v3023 = vadd.f32 %v3022, %v2768
    %v3024 = vadd.f32 %v3023, %v2769
    %v3025 = vadd.f32 %v3024, %v2770
    %v3026 = vadd.f32 %v3025, %v2771
    %v3027 = vadd.f32 %v3026, %v2772
    %v3028 = vadd.f32 %v3027, %v2773
    %v3029 = vadd.f32 %v3028, %v2774
    %v3030 = vadd.f32 %v3029, %v2775
    %v3031 = vadd.f32 %v3030, %v2776
    %v3032 = vadd.f32 %v3031, %v2777
    %v3033 = vadd.f32 %v3032, %v2778
    %v3034 = vadd.f32 %v3033, %v2779
    %v3035 = vadd.f32 %v3034, %v2780
    %v3036 = vadd.f32 %v3035, %v2781
    %v3037 = vadd.f32 %v3036, %v2782
    %v3038 = vadd.f32 %v3037, %v2783
    %v3039 = vadd.f32 %v3038, %v2784
    %v3040 = vadd.f32 %v3039, %v2785
    %v3041 = vadd.f32 %v3040, %v2786
    %v3042 = vadd.f32 %v3041, %v2787
    %v3043 = vadd.f32 %v3042, %v2788
    %v3044 = vadd.f32 %v3043, %v2789
    %v3045 = vadd.f32 %v3044, %v2790
    %v3046 = vadd.f32 %v3045, %v2791
    %v3047 = vadd.f32 %v3046, %v2792
    %v3048 = vadd.f32 %v3047, %v2793
    %v3049 = vadd.f32 %v3048, %v2794
    %v3050 = vadd.f32 %v3049, %v2795
    %v3051 = vadd.f32 %v3050, %v2796
    %v3052 = vadd.f32 %v3051, %v2797
    %v3053 = vadd.f32 %v3052, %v2798
    %v3054 = vadd.f32 %v3053, %v2799
    %v3055 = vadd.f32 %v3054, %v2800
    %v3056 = vadd.f32 %v3055, %v2801
    %v3057 = vadd.f32 %v3056, %v2802
    %v3058 = vadd.f32 %v3057, %v2803
    %v3059 = vadd.f32 %v3058, %v2804
    %v3060 = vadd.f32 %v3059, %v2805
    %v3061 = vadd.f32 %v3060, %v2806
    %v3062 = vadd.f32 %v3061, %v2807
    %v3063 = vadd.f32 %v3062, %v2808
    %v3064 = vadd.f32 %v3063, %v2809
    %v3065 = vadd.f32 %v3064, %v2810
    %v3066 = vadd.f32 %v3065, %v2811
    %v3067 = vadd.f32 %v3066, %v2812
    %v3068 = vadd.f32 %v3067, %v2813
    %v3069 = vadd.f32 %v3068, %v2814
    %v3070 = vadd.f32 %v3069, %v2815
    %v3071 = vadd.f32 %v3070, %v2816
    %v3072 = vadd.f32 %v3071, %v2817
    %v3073 = vadd.f32 %v3072, %v2818
    %v3074 = vadd.f32 %v3073, %v2819
    %v3075 = vadd.f32 %v3074, %v2820
    %v3076 = vadd.f32 %v3075, %v2821
    %v3077 = vadd.f32 %v3076, %v2822
    %v3078 = vadd.f32 %v3077, %v2823
    %v3079 = vadd.f32 %v3078, %v2824
    %v3080 = vadd.f32 %v3079, %v2825
    %v3081 = vadd.f32 %v3080, %v2826
    %v3082 = vadd.f32 %v3081, %v2827
    %v3083 = vadd.f32 %v3082, %v2828
    %v3084 = vadd.f32 %v3083, %v2829
    %v3085 = vadd.f32 %v3084, %v2830
    %v3086 = vadd.f32 %v3085, %v2831
    %v3087 = vadd.f32 %v3086, %v2832
    %v3088 = vadd.f32 %v3087, %v2833
    %v3089 = vadd.f32 %v3088, %v2834
    %v3090 = vadd.f32 %v3089, %v2835
    %v3091 = vadd.f32 %v3090, %v2836
    %v3092 = vadd.f32 %v3091, %v2837
    %v3093 = vadd.f32 %v3092, %v2838
    %v3094 = vadd.f32 %v3093, %v2839
    %v3095 = vadd.f32 %v3094, %v2840
    %v3096 = vadd.f32 %v3095, %v2841
    %v3097 = vadd.f32 %v3096, %v2842
    %v3098 = vadd.f32 %v3097, %v2843
    %v3099 = vadd.f32 %v3098, %v2844
    %v3100 = vadd.f32 %v3099, %v2845
    %v3101 = vadd.f32 %v3100, %v2846
    %v3102 = vadd.f32 %v3101, %v2847
    %v3103 = vadd.f32 %v3102, %v2848
    %v3104 = vadd.f32 %v3103, %v2849
    %v3105 = vadd.f32 %v3104, %v2850
    %v3106 = vadd.f32 %v3105, %v2851
    %v3107 = vadd.f32 %v3106, %v2852
    %v3108 = vadd.f32 %v3107, %v2853
    %v3109 = vadd.f32 %v3108, %v2854
    %v3110 = vadd.f32 %v3109, %v2855
    %v3111 = vadd.f32 %v3110, %v2856
    %v3112 = vadd.f32 %v3111, %v2857
    %v3113 = vadd.f32 %v3112, %v2858
    %v3114 = vadd.f32 %v3113, %v2859
    %v3115 = vadd.f32 %v3114, %v2860
    %v3116 = vadd.f32 %v3115, %v2861
    %v3117 = vadd.f32 %v3116, %v2862
    %v3118 = vadd.f32 %v3117, %v2863
    %v3119 = vadd.f32 %v3118, %v2864
    %v3120 = vadd.f32 %v3119, %v2865
    %v3121 = vadd.f32 %v3120, %v2866
    %v3122 = vadd.f32 %v3121, %v2867
    %v3123 = vadd.f32 %v3122, %v2868
    %v3124 = vadd.f32 %v3123, %v2869
    %v3125 = vadd.f32 %v3124, %v2870
    %v3126 = vadd.f32 %v3125, %v2871
    %v3127 = vadd.f32 %v3126, %v2872
    %v3128 = vadd.f32 %v3127, %v2873
    %v3129 = vadd.f32 %v3128, %v2874
    %v3130 = vadd.f32 %v3129, %v2875
    %v3131 = vadd.f32 %v3130, %v2876
    %v3132 = vadd.f32 %v3131, %v2877
    %v3133 = vadd.f32 %v3132, %v2878
    %v3134 = vadd.f32 %v3133, %v2879
    %v3135 = vadd.f32 %v3134, %v2880
    %v3136 = vadd.f32 %v3135, %v2881
    %v3137 = vadd.f32 %v3136, %v2882
    %v3138 = vadd.f32 %v3137, %v2883
    %v3139 = vadd.f32 %v3138, %v2884
    %v3140 = vadd.f32 %v3139, %v2885
    %v3141 = vadd.f32 %v3140, %v2886
    %v3142 = vadd.f32 %v3141, %v2887
    %v3143 = vadd.f32 %v3142, %v2888
    %v3144 = vadd.f32 %v3143, %v2889
    %v3145 = vadd.f32 %v3144, %v2890
    %v3146 = vadd.f32 %v3145, %v2891
    %v3147 = vadd.f32 %v3146, %v2892
    %v3148 = vadd.f32 %v3147, %v2893
    %v3149 = vadd.f32 %v3148, %v2894
    %v3150 = vadd.f32 %v3149, %v2895
    %v3151 = vadd.f32 %v3150, %v2896
    %v3152 = vadd.f32 %v3151, %v2897
    %v3153 = vadd.f32 %v3152, %v2898
    %v3154 = vadd.f32 %v3153, %v2899
    %v3155 = vadd.f32 %v3154, %v2900
    %v3156 = vadd.f32 %v3155, %v2901
    %v3157 = vadd.f32 %v3156, %v2902
    %v3158 = vadd.f32 %v3157, %v2903
    %v3159 = vadd.f32 %v3158, %v2904
    %v3160 = vadd.f32 %v3159, %v2905
    %v3161 = vadd.f32 %v3160, %v2906
    %v3162 = vadd.f32 %v3161, %v2907
    %v3163 = vadd.f32 %v3162, %v2908
    %v3164 = vadd.f32 %v3163, %v2909
    %v3165 = vadd.f32 %v3164, %v2910
    %v3166 = vadd.f32 %v3165, %v2911
    %v3167 = vadd.f32 %v3166, %v2912
    %v3168 = vadd.f32 %v3167, %v2913
    %v3169 = vadd.f32 %v3168, %v2914
    %v3170 = vadd.f32 %v3169, %v2915
    %v3171 = vadd.f32 %v3170, %v2916
    %v3172 = vadd.f32 %v3171, %v2917
    %v3173 = vadd.f32 %v3172, %v2918
    %v3174 = vadd.f32 %v3173, %v2919
    %v3175 = vadd.f32 %v3174, %v2920
    %v3176 = vadd.f32 %v3175, %v2921
    %v3177 = vadd.f32 %v3176, %v2922
    %v3178 = vadd.f32 %v3177, %v2923
    %v3179 = vadd.f32 %v3178, %v2924
    %v3180 = vadd.f32 %v3179, %v2925
    %v3181 = vadd.f32 %v3180, %v2926
    %v3182 = vadd.f32 %v3181, %v2927
    %v3183 = vadd.f32 %v3182, %v2928
    %v3184 = vadd.f32 %v3183, %v2929
    %v3185 = vadd.f32 %v3184, %v2930
    %v3186 = vadd.f32 %v3185, %v2931
    %v3187 = vadd.f32 %v3186, %v2932
    %v3188 = vadd.f32 %v3187, %v2933
    %v3189 = vadd.f32 %v3188, %v2934
    %v3190 = vadd.f32 %v3189, %v2935
    %v3191 = vadd.f32 %v3190, %v2936
    %v3192 = vadd.f32 %v3191, %v2937
    %v3193 = vadd.f32 %v3192, %v2938
    %v3194 = vadd.f32 %v3193, %v2939
    %v3195 = vadd.f32 %v3194, %v2940
    %v3196 = vadd.f32 %v3195, %v2941
    %v3197 = vadd.f32 %v3196, %v2942
    %v3198 = vadd.f32 %v3197, %v2943
    %v3199 = vadd.f32 %v3198, %v2944
    %v3200 = vadd.f32 %v3199, %v2945
    %v3201 = vadd.f32 %v3200, %v2946
    %v3202 = vadd.f32 %v3201, %v2947
    %v3203 = vadd.f32 %v3202, %v2948
    %v3204 = vadd.f32 %v3203, %v2949
    %v3205 = vadd.f32 %v3204, %v2950
    %v3206 = vadd.f32 %v3205, %v2951
    %v3207 = vadd.f32 %v3206, %v2952
    %v3208 = vadd.f32 %v3207, %v2953
    %v3209 = vadd.f32 %v3208, %v2954
    %v3210 = vadd.f32 %v3209, %v2955
    %v3211 = vadd.f32 %v3210, %v2956
    %v3212 = vadd.f32 %v3211, %v2957
    %v3213 = vadd.f32 %v3212, %v2958
    %v3214 = vadd.f32 %v3213, %v2959
    %v3215 = vadd.f32 %v3214, %v2960
    %v3216 = vadd.f32 %v3215, %v2961
    %v3217 = vadd.f32 %v3216, %v2962
    %v3218 = vadd.f32 %v3217, %v2963
    %v3219 = vadd.f32 %v3218, %v2964
    %v3220 = vadd.f32 %v3219, %v2965
    %v3221 = vrot.slane %v3220, 4
    %v3222 = vadd.f32 %v3220, %v3221
    %v3223 = vrot.slane %v3222, 2
    %v3224 = vadd.f32 %v3222, %v3223
    %v3225 = vrot.slane %v3224, 1
    %v3226 = vadd.f32 %v3224, %v3225
    %v3227 = vmul.f32 %v2453, %v2453
    %v3228 = vmul.f32 %v3227, 0.0
    %v3229 = vsub.f32 %v3226, %v3228
    %v3230 = vmul.f32 %v3229, 0.00048828125
    %v3231 = vmax.f32 %v3230, 0.0
    %v3232 = vld [vmem:[%s2] sm:$0x1]
    %v3233 = vadd.f32 %v3231, 1e-05
    %v3234 = vrsqrt.pop %v3233
    %v3235 = vmul.f32 %v3232, %v3234
    %v3236 = vld [vmem:[%s3] sm:$0x1]
    %v3237 = vmul.f32 %v2453, %v3235
    %v3238 = vsub.f32 %v3236, %v3237
    %v3240 = vlaneseq
    %v3241 = vshrl.u32 %v3240, 7
    %v3242 = vsub.s32 0, %v3241
    %v3243 = vrot.slane %v3235, %v3242
    %v3245 = vmul.f32 %v1170, %v3243
    %v3246 = vmul.f32 %v1173, %v3243
    %v3247 = vmul.f32 %v1178, %v3243
    %v3248 = vmul.f32 %v1181, %v3243
    %v3249 = vmul.f32 %v1186, %v3243
    %v3250 = vmul.f32 %v1189, %v3243
    %v3251 = vmul.f32 %v1194, %v3243
    %v3252 = vmul.f32 %v1197, %v3243
    %v3253 = vmul.f32 %v1202, %v3243
    %v3254 = vmul.f32 %v1205, %v3243
    %v3255 = vmul.f32 %v1210, %v3243
    %v3256 = vmul.f32 %v1213, %v3243
    %v3257 = vmul.f32 %v1218, %v3243
    %v3258 = vmul.f32 %v1221, %v3243
    %v3259 = vmul.f32 %v1226, %v3243
    %v3260 = vmul.f32 %v1229, %v3243
    %v3261 = vmul.f32 %v1234, %v3243
    %v3262 = vmul.f32 %v1237, %v3243
    %v3263 = vmul.f32 %v1242, %v3243
    %v3264 = vmul.f32 %v1245, %v3243
    %v3265 = vmul.f32 %v1250, %v3243
    %v3266 = vmul.f32 %v1253, %v3243
    %v3267 = vmul.f32 %v1258, %v3243
    %v3268 = vmul.f32 %v1261, %v3243
    %v3269 = vmul.f32 %v1266, %v3243
    %v3270 = vmul.f32 %v1269, %v3243
    %v3271 = vmul.f32 %v1274, %v3243
    %v3272 = vmul.f32 %v1277, %v3243
    %v3273 = vmul.f32 %v1282, %v3243
    %v3274 = vmul.f32 %v1285, %v3243
    %v3275 = vmul.f32 %v1290, %v3243
    %v3276 = vmul.f32 %v1293, %v3243
    %v3277 = vmul.f32 %v1298, %v3243
    %v3278 = vmul.f32 %v1301, %v3243
    %v3279 = vmul.f32 %v1306, %v3243
    %v3280 = vmul.f32 %v1309, %v3243
    %v3281 = vmul.f32 %v1314, %v3243
    %v3282 = vmul.f32 %v1317, %v3243
    %v3283 = vmul.f32 %v1322, %v3243
    %v3284 = vmul.f32 %v1325, %v3243
    %v3285 = vmul.f32 %v1330, %v3243
    %v3286 = vmul.f32 %v1333, %v3243
    %v3287 = vmul.f32 %v1338, %v3243
    %v3288 = vmul.f32 %v1341, %v3243
    %v3289 = vmul.f32 %v1346, %v3243
    %v3290 = vmul.f32 %v1349, %v3243
    %v3291 = vmul.f32 %v1354, %v3243
    %v3292 = vmul.f32 %v1357, %v3243
    %v3293 = vmul.f32 %v1362, %v3243
    %v3294 = vmul.f32 %v1365, %v3243
    %v3295 = vmul.f32 %v1370, %v3243
    %v3296 = vmul.f32 %v1373, %v3243
    %v3297 = vmul.f32 %v1378, %v3243
    %v3298 = vmul.f32 %v1381, %v3243
    %v3299 = vmul.f32 %v1386, %v3243
    %v3300 = vmul.f32 %v1389, %v3243
    %v3301 = vmul.f32 %v1394, %v3243
    %v3302 = vmul.f32 %v1397, %v3243
    %v3303 = vmul.f32 %v1402, %v3243
    %v3304 = vmul.f32 %v1405, %v3243
    %v3305 = vmul.f32 %v1410, %v3243
    %v3306 = vmul.f32 %v1413, %v3243
    %v3307 = vmul.f32 %v1418, %v3243
    %v3308 = vmul.f32 %v1421, %v3243
    %v3309 = vmul.f32 %v1426, %v3243
    %v3310 = vmul.f32 %v1429, %v3243
    %v3311 = vmul.f32 %v1434, %v3243
    %v3312 = vmul.f32 %v1437, %v3243
    %v3313 = vmul.f32 %v1442, %v3243
    %v3314 = vmul.f32 %v1445, %v3243
    %v3315 = vmul.f32 %v1450, %v3243
    %v3316 = vmul.f32 %v1453, %v3243
    %v3317 = vmul.f32 %v1458, %v3243
    %v3318 = vmul.f32 %v1461, %v3243
    %v3319 = vmul.f32 %v1466, %v3243
    %v3320 = vmul.f32 %v1469, %v3243
    %v3321 = vmul.f32 %v1474, %v3243
    %v3322 = vmul.f32 %v1477, %v3243
    %v3323 = vmul.f32 %v1482, %v3243
    %v3324 = vmul.f32 %v1485, %v3243
    %v3325 = vmul.f32 %v1490, %v3243
    %v3326 = vmul.f32 %v1493, %v3243
    %v3327 = vmul.f32 %v1498, %v3243
    %v3328 = vmul.f32 %v1501, %v3243
    %v3329 = vmul.f32 %v1506, %v3243
    %v3330 = vmul.f32 %v1509, %v3243
    %v3331 = vmul.f32 %v1514, %v3243
    %v3332 = vmul.f32 %v1517, %v3243
    %v3333 = vmul.f32 %v1522, %v3243
    %v3334 = vmul.f32 %v1525, %v3243
    %v3335 = vmul.f32 %v1530, %v3243
    %v3336 = vmul.f32 %v1533, %v3243
    %v3337 = vmul.f32 %v1538, %v3243
    %v3338 = vmul.f32 %v1541, %v3243
    %v3339 = vmul.f32 %v1546, %v3243
    %v3340 = vmul.f32 %v1549, %v3243
    %v3341 = vmul.f32 %v1554, %v3243
    %v3342 = vmul.f32 %v1557, %v3243
    %v3343 = vmul.f32 %v1562, %v3243
    %v3344 = vmul.f32 %v1565, %v3243
    %v3345 = vmul.f32 %v1570, %v3243
    %v3346 = vmul.f32 %v1573, %v3243
    %v3347 = vmul.f32 %v1578, %v3243
    %v3348 = vmul.f32 %v1581, %v3243
    %v3349 = vmul.f32 %v1586, %v3243
    %v3350 = vmul.f32 %v1589, %v3243
    %v3351 = vmul.f32 %v1594, %v3243
    %v3352 = vmul.f32 %v1597, %v3243
    %v3353 = vmul.f32 %v1602, %v3243
    %v3354 = vmul.f32 %v1605, %v3243
    %v3355 = vmul.f32 %v1610, %v3243
    %v3356 = vmul.f32 %v1613, %v3243
    %v3357 = vmul.f32 %v1618, %v3243
    %v3358 = vmul.f32 %v1621, %v3243
    %v3359 = vmul.f32 %v1626, %v3243
    %v3360 = vmul.f32 %v1629, %v3243
    %v3361 = vmul.f32 %v1634, %v3243
    %v3362 = vmul.f32 %v1637, %v3243
    %v3363 = vmul.f32 %v1642, %v3243
    %v3364 = vmul.f32 %v1645, %v3243
    %v3365 = vmul.f32 %v1650, %v3243
    %v3366 = vmul.f32 %v1653, %v3243
    %v3367 = vmul.f32 %v1658, %v3243
    %v3368 = vmul.f32 %v1661, %v3243
    %v3369 = vmul.f32 %v1666, %v3243
    %v3370 = vmul.f32 %v1669, %v3243
    %v3371 = vmul.f32 %v1674, %v3243
    %v3372 = vmul.f32 %v1677, %v3243
    %v3373 = vmul.f32 %v1682, %v3243
    %v3374 = vmul.f32 %v1685, %v3243
    %v3375 = vmul.f32 %v1690, %v3243
    %v3376 = vmul.f32 %v1693, %v3243
    %v3377 = vmul.f32 %v1698, %v3243
    %v3378 = vmul.f32 %v1701, %v3243
    %v3379 = vmul.f32 %v1706, %v3243
    %v3380 = vmul.f32 %v1709, %v3243
    %v3381 = vmul.f32 %v1714, %v3243
    %v3382 = vmul.f32 %v1717, %v3243
    %v3383 = vmul.f32 %v1722, %v3243
    %v3384 = vmul.f32 %v1725, %v3243
    %v3385 = vmul.f32 %v1730, %v3243
    %v3386 = vmul.f32 %v1733, %v3243
    %v3387 = vmul.f32 %v1738, %v3243
    %v3388 = vmul.f32 %v1741, %v3243
    %v3389 = vmul.f32 %v1746, %v3243
    %v3390 = vmul.f32 %v1749, %v3243
    %v3391 = vmul.f32 %v1754, %v3243
    %v3392 = vmul.f32 %v1757, %v3243
    %v3393 = vmul.f32 %v1762, %v3243
    %v3394 = vmul.f32 %v1765, %v3243
    %v3395 = vmul.f32 %v1770, %v3243
    %v3396 = vmul.f32 %v1773, %v3243
    %v3397 = vmul.f32 %v1778, %v3243
    %v3398 = vmul.f32 %v1781, %v3243
    %v3399 = vmul.f32 %v1786, %v3243
    %v3400 = vmul.f32 %v1789, %v3243
    %v3401 = vmul.f32 %v1794, %v3243
    %v3402 = vmul.f32 %v1797, %v3243
    %v3403 = vmul.f32 %v1802, %v3243
    %v3404 = vmul.f32 %v1805, %v3243
    %v3405 = vmul.f32 %v1810, %v3243
    %v3406 = vmul.f32 %v1813, %v3243
    %v3407 = vmul.f32 %v1818, %v3243
    %v3408 = vmul.f32 %v1821, %v3243
    %v3409 = vmul.f32 %v1826, %v3243
    %v3410 = vmul.f32 %v1829, %v3243
    %v3411 = vmul.f32 %v1834, %v3243
    %v3412 = vmul.f32 %v1837, %v3243
    %v3413 = vmul.f32 %v1842, %v3243
    %v3414 = vmul.f32 %v1845, %v3243
    %v3415 = vmul.f32 %v1850, %v3243
    %v3416 = vmul.f32 %v1853, %v3243
    %v3417 = vmul.f32 %v1858, %v3243
    %v3418 = vmul.f32 %v1861, %v3243
    %v3419 = vmul.f32 %v1866, %v3243
    %v3420 = vmul.f32 %v1869, %v3243
    %v3421 = vmul.f32 %v1874, %v3243
    %v3422 = vmul.f32 %v1877, %v3243
    %v3423 = vmul.f32 %v1882, %v3243
    %v3424 = vmul.f32 %v1885, %v3243
    %v3425 = vmul.f32 %v1890, %v3243
    %v3426 = vmul.f32 %v1893, %v3243
    %v3427 = vmul.f32 %v1898, %v3243
    %v3428 = vmul.f32 %v1901, %v3243
    %v3429 = vmul.f32 %v1906, %v3243
    %v3430 = vmul.f32 %v1909, %v3243
    %v3431 = vmul.f32 %v1914, %v3243
    %v3432 = vmul.f32 %v1917, %v3243
    %v3433 = vmul.f32 %v1922, %v3243
    %v3434 = vmul.f32 %v1925, %v3243
    %v3435 = vmul.f32 %v1930, %v3243
    %v3436 = vmul.f32 %v1933, %v3243
    %v3437 = vmul.f32 %v1938, %v3243
    %v3438 = vmul.f32 %v1941, %v3243
    %v3439 = vmul.f32 %v1946, %v3243
    %v3440 = vmul.f32 %v1949, %v3243
    %v3441 = vmul.f32 %v1954, %v3243
    %v3442 = vmul.f32 %v1957, %v3243
    %v3443 = vmul.f32 %v1962, %v3243
    %v3444 = vmul.f32 %v1965, %v3243
    %v3445 = vmul.f32 %v1970, %v3243
    %v3446 = vmul.f32 %v1973, %v3243
    %v3447 = vmul.f32 %v1978, %v3243
    %v3448 = vmul.f32 %v1981, %v3243
    %v3449 = vmul.f32 %v1986, %v3243
    %v3450 = vmul.f32 %v1989, %v3243
    %v3451 = vmul.f32 %v1994, %v3243
    %v3452 = vmul.f32 %v1997, %v3243
    %v3453 = vmul.f32 %v2002, %v3243
    %v3454 = vmul.f32 %v2005, %v3243
    %v3455 = vmul.f32 %v2010, %v3243
    %v3456 = vmul.f32 %v2013, %v3243
    %v3457 = vmul.f32 %v2018, %v3243
    %v3458 = vmul.f32 %v2021, %v3243
    %v3459 = vmul.f32 %v2026, %v3243
    %v3460 = vmul.f32 %v2029, %v3243
    %v3461 = vmul.f32 %v2034, %v3243
    %v3462 = vmul.f32 %v2037, %v3243
    %v3463 = vmul.f32 %v2042, %v3243
    %v3464 = vmul.f32 %v2045, %v3243
    %v3465 = vmul.f32 %v2050, %v3243
    %v3466 = vmul.f32 %v2053, %v3243
    %v3467 = vmul.f32 %v2058, %v3243
    %v3468 = vmul.f32 %v2061, %v3243
    %v3469 = vmul.f32 %v2066, %v3243
    %v3470 = vmul.f32 %v2069, %v3243
    %v3471 = vmul.f32 %v2074, %v3243
    %v3472 = vmul.f32 %v2077, %v3243
    %v3473 = vmul.f32 %v2082, %v3243
    %v3474 = vmul.f32 %v2085, %v3243
    %v3475 = vmul.f32 %v2090, %v3243
    %v3476 = vmul.f32 %v2093, %v3243
    %v3477 = vmul.f32 %v2098, %v3243
    %v3478 = vmul.f32 %v2101, %v3243
    %v3479 = vmul.f32 %v2106, %v3243
    %v3480 = vmul.f32 %v2109, %v3243
    %v3481 = vmul.f32 %v2114, %v3243
    %v3482 = vmul.f32 %v2117, %v3243
    %v3483 = vmul.f32 %v2122, %v3243
    %v3484 = vmul.f32 %v2125, %v3243
    %v3485 = vmul.f32 %v2130, %v3243
    %v3486 = vmul.f32 %v2133, %v3243
    %v3487 = vmul.f32 %v2138, %v3243
    %v3488 = vmul.f32 %v2141, %v3243
    %v3489 = vmul.f32 %v2146, %v3243
    %v3490 = vmul.f32 %v2149, %v3243
    %v3491 = vmul.f32 %v2154, %v3243
    %v3492 = vmul.f32 %v2157, %v3243
    %v3493 = vmul.f32 %v2162, %v3243
    %v3494 = vmul.f32 %v2165, %v3243
    %v3495 = vmul.f32 %v2170, %v3243
    %v3496 = vmul.f32 %v2173, %v3243
    %v3497 = vmul.f32 %v2178, %v3243
    %v3498 = vmul.f32 %v2181, %v3243
    %v3499 = vmul.f32 %v2186, %v3243
    %v3500 = vmul.f32 %v2189, %v3243
    %v3502 = vlaneseq
    %v3503 = vshrl.u32 %v3502, 7
    %v3504 = vsub.s32 0, %v3503
    %v3505 = vrot.slane %v3238, %v3504
    %v3507 = vadd.f32 %v3245, %v3505
    %v3508 = vadd.f32 %v3246, %v3505
    %v3509 = vadd.f32 %v3247, %v3505
    %v3510 = vadd.f32 %v3248, %v3505
    %v3511 = vadd.f32 %v3249, %v3505
    %v3512 = vadd.f32 %v3250, %v3505
    %v3513 = vadd.f32 %v3251, %v3505
    %v3514 = vadd.f32 %v3252, %v3505
    %v3515 = vadd.f32 %v3253, %v3505
    %v3516 = vadd.f32 %v3254, %v3505
    %v3517 = vadd.f32 %v3255, %v3505
    %v3518 = vadd.f32 %v3256, %v3505
    %v3519 = vadd.f32 %v3257, %v3505
    %v3520 = vadd.f32 %v3258, %v3505
    %v3521 = vadd.f32 %v3259, %v3505
    %v3522 = vadd.f32 %v3260, %v3505
    %v3523 = vadd.f32 %v3261, %v3505
    %v3524 = vadd.f32 %v3262, %v3505
    %v3525 = vadd.f32 %v3263, %v3505
    %v3526 = vadd.f32 %v3264, %v3505
    %v3527 = vadd.f32 %v3265, %v3505
    %v3528 = vadd.f32 %v3266, %v3505
    %v3529 = vadd.f32 %v3267, %v3505
    %v3530 = vadd.f32 %v3268, %v3505
    %v3531 = vadd.f32 %v3269, %v3505
    %v3532 = vadd.f32 %v3270, %v3505
    %v3533 = vadd.f32 %v3271, %v3505
    %v3534 = vadd.f32 %v3272, %v3505
    %v3535 = vadd.f32 %v3273, %v3505
    %v3536 = vadd.f32 %v3274, %v3505
    %v3537 = vadd.f32 %v3275, %v3505
    %v3538 = vadd.f32 %v3276, %v3505
    %v3539 = vadd.f32 %v3277, %v3505
    %v3540 = vadd.f32 %v3278, %v3505
    %v3541 = vadd.f32 %v3279, %v3505
    %v3542 = vadd.f32 %v3280, %v3505
    %v3543 = vadd.f32 %v3281, %v3505
    %v3544 = vadd.f32 %v3282, %v3505
    %v3545 = vadd.f32 %v3283, %v3505
    %v3546 = vadd.f32 %v3284, %v3505
    %v3547 = vadd.f32 %v3285, %v3505
    %v3548 = vadd.f32 %v3286, %v3505
    %v3549 = vadd.f32 %v3287, %v3505
    %v3550 = vadd.f32 %v3288, %v3505
    %v3551 = vadd.f32 %v3289, %v3505
    %v3552 = vadd.f32 %v3290, %v3505
    %v3553 = vadd.f32 %v3291, %v3505
    %v3554 = vadd.f32 %v3292, %v3505
    %v3555 = vadd.f32 %v3293, %v3505
    %v3556 = vadd.f32 %v3294, %v3505
    %v3557 = vadd.f32 %v3295, %v3505
    %v3558 = vadd.f32 %v3296, %v3505
    %v3559 = vadd.f32 %v3297, %v3505
    %v3560 = vadd.f32 %v3298, %v3505
    %v3561 = vadd.f32 %v3299, %v3505
    %v3562 = vadd.f32 %v3300, %v3505
    %v3563 = vadd.f32 %v3301, %v3505
    %v3564 = vadd.f32 %v3302, %v3505
    %v3565 = vadd.f32 %v3303, %v3505
    %v3566 = vadd.f32 %v3304, %v3505
    %v3567 = vadd.f32 %v3305, %v3505
    %v3568 = vadd.f32 %v3306, %v3505
    %v3569 = vadd.f32 %v3307, %v3505
    %v3570 = vadd.f32 %v3308, %v3505
    %v3571 = vadd.f32 %v3309, %v3505
    %v3572 = vadd.f32 %v3310, %v3505
    %v3573 = vadd.f32 %v3311, %v3505
    %v3574 = vadd.f32 %v3312, %v3505
    %v3575 = vadd.f32 %v3313, %v3505
    %v3576 = vadd.f32 %v3314, %v3505
    %v3577 = vadd.f32 %v3315, %v3505
    %v3578 = vadd.f32 %v3316, %v3505
    %v3579 = vadd.f32 %v3317, %v3505
    %v3580 = vadd.f32 %v3318, %v3505
    %v3581 = vadd.f32 %v3319, %v3505
    %v3582 = vadd.f32 %v3320, %v3505
    %v3583 = vadd.f32 %v3321, %v3505
    %v3584 = vadd.f32 %v3322, %v3505
    %v3585 = vadd.f32 %v3323, %v3505
    %v3586 = vadd.f32 %v3324, %v3505
    %v3587 = vadd.f32 %v3325, %v3505
    %v3588 = vadd.f32 %v3326, %v3505
    %v3589 = vadd.f32 %v3327, %v3505
    %v3590 = vadd.f32 %v3328, %v3505
    %v3591 = vadd.f32 %v3329, %v3505
    %v3592 = vadd.f32 %v3330, %v3505
    %v3593 = vadd.f32 %v3331, %v3505
    %v3594 = vadd.f32 %v3332, %v3505
    %v3595 = vadd.f32 %v3333, %v3505
    %v3596 = vadd.f32 %v3334, %v3505
    %v3597 = vadd.f32 %v3335, %v3505
    %v3598 = vadd.f32 %v3336, %v3505
    %v3599 = vadd.f32 %v3337, %v3505
    %v3600 = vadd.f32 %v3338, %v3505
    %v3601 = vadd.f32 %v3339, %v3505
    %v3602 = vadd.f32 %v3340, %v3505
    %v3603 = vadd.f32 %v3341, %v3505
    %v3604 = vadd.f32 %v3342, %v3505
    %v3605 = vadd.f32 %v3343, %v3505
    %v3606 = vadd.f32 %v3344, %v3505
    %v3607 = vadd.f32 %v3345, %v3505
    %v3608 = vadd.f32 %v3346, %v3505
    %v3609 = vadd.f32 %v3347, %v3505
    %v3610 = vadd.f32 %v3348, %v3505
    %v3611 = vadd.f32 %v3349, %v3505
    %v3612 = vadd.f32 %v3350, %v3505
    %v3613 = vadd.f32 %v3351, %v3505
    %v3614 = vadd.f32 %v3352, %v3505
    %v3615 = vadd.f32 %v3353, %v3505
    %v3616 = vadd.f32 %v3354, %v3505
    %v3617 = vadd.f32 %v3355, %v3505
    %v3618 = vadd.f32 %v3356, %v3505
    %v3619 = vadd.f32 %v3357, %v3505
    %v3620 = vadd.f32 %v3358, %v3505
    %v3621 = vadd.f32 %v3359, %v3505
    %v3622 = vadd.f32 %v3360, %v3505
    %v3623 = vadd.f32 %v3361, %v3505
    %v3624 = vadd.f32 %v3362, %v3505
    %v3625 = vadd.f32 %v3363, %v3505
    %v3626 = vadd.f32 %v3364, %v3505
    %v3627 = vadd.f32 %v3365, %v3505
    %v3628 = vadd.f32 %v3366, %v3505
    %v3629 = vadd.f32 %v3367, %v3505
    %v3630 = vadd.f32 %v3368, %v3505
    %v3631 = vadd.f32 %v3369, %v3505
    %v3632 = vadd.f32 %v3370, %v3505
    %v3633 = vadd.f32 %v3371, %v3505
    %v3634 = vadd.f32 %v3372, %v3505
    %v3635 = vadd.f32 %v3373, %v3505
    %v3636 = vadd.f32 %v3374, %v3505
    %v3637 = vadd.f32 %v3375, %v3505
    %v3638 = vadd.f32 %v3376, %v3505
    %v3639 = vadd.f32 %v3377, %v3505
    %v3640 = vadd.f32 %v3378, %v3505
    %v3641 = vadd.f32 %v3379, %v3505
    %v3642 = vadd.f32 %v3380, %v3505
    %v3643 = vadd.f32 %v3381, %v3505
    %v3644 = vadd.f32 %v3382, %v3505
    %v3645 = vadd.f32 %v3383, %v3505
    %v3646 = vadd.f32 %v3384, %v3505
    %v3647 = vadd.f32 %v3385, %v3505
    %v3648 = vadd.f32 %v3386, %v3505
    %v3649 = vadd.f32 %v3387, %v3505
    %v3650 = vadd.f32 %v3388, %v3505
    %v3651 = vadd.f32 %v3389, %v3505
    %v3652 = vadd.f32 %v3390, %v3505
    %v3653 = vadd.f32 %v3391, %v3505
    %v3654 = vadd.f32 %v3392, %v3505
    %v3655 = vadd.f32 %v3393, %v3505
    %v3656 = vadd.f32 %v3394, %v3505
    %v3657 = vadd.f32 %v3395, %v3505
    %v3658 = vadd.f32 %v3396, %v3505
    %v3659 = vadd.f32 %v3397, %v3505
    %v3660 = vadd.f32 %v3398, %v3505
    %v3661 = vadd.f32 %v3399, %v3505
    %v3662 = vadd.f32 %v3400, %v3505
    %v3663 = vadd.f32 %v3401, %v3505
    %v3664 = vadd.f32 %v3402, %v3505
    %v3665 = vadd.f32 %v3403, %v3505
    %v3666 = vadd.f32 %v3404, %v3505
    %v3667 = vadd.f32 %v3405, %v3505
    %v3668 = vadd.f32 %v3406, %v3505
    %v3669 = vadd.f32 %v3407, %v3505
    %v3670 = vadd.f32 %v3408, %v3505
    %v3671 = vadd.f32 %v3409, %v3505
    %v3672 = vadd.f32 %v3410, %v3505
    %v3673 = vadd.f32 %v3411, %v3505
    %v3674 = vadd.f32 %v3412, %v3505
    %v3675 = vadd.f32 %v3413, %v3505
    %v3676 = vadd.f32 %v3414, %v3505
    %v3677 = vadd.f32 %v3415, %v3505
    %v3678 = vadd.f32 %v3416, %v3505
    %v3679 = vadd.f32 %v3417, %v3505
    %v3680 = vadd.f32 %v3418, %v3505
    %v3681 = vadd.f32 %v3419, %v3505
    %v3682 = vadd.f32 %v3420, %v3505
    %v3683 = vadd.f32 %v3421, %v3505
    %v3684 = vadd.f32 %v3422, %v3505
    %v3685 = vadd.f32 %v3423, %v3505
    %v3686 = vadd.f32 %v3424, %v3505
    %v3687 = vadd.f32 %v3425, %v3505
    %v3688 = vadd.f32 %v3426, %v3505
    %v3689 = vadd.f32 %v3427, %v3505
    %v3690 = vadd.f32 %v3428, %v3505
    %v3691 = vadd.f32 %v3429, %v3505
    %v3692 = vadd.f32 %v3430, %v3505
    %v3693 = vadd.f32 %v3431, %v3505
    %v3694 = vadd.f32 %v3432, %v3505
    %v3695 = vadd.f32 %v3433, %v3505
    %v3696 = vadd.f32 %v3434, %v3505
    %v3697 = vadd.f32 %v3435, %v3505
    %v3698 = vadd.f32 %v3436, %v3505
    %v3699 = vadd.f32 %v3437, %v3505
    %v3700 = vadd.f32 %v3438, %v3505
    %v3701 = vadd.f32 %v3439, %v3505
    %v3702 = vadd.f32 %v3440, %v3505
    %v3703 = vadd.f32 %v3441, %v3505
    %v3704 = vadd.f32 %v3442, %v3505
    %v3705 = vadd.f32 %v3443, %v3505
    %v3706 = vadd.f32 %v3444, %v3505
    %v3707 = vadd.f32 %v3445, %v3505
    %v3708 = vadd.f32 %v3446, %v3505
    %v3709 = vadd.f32 %v3447, %v3505
    %v3710 = vadd.f32 %v3448, %v3505
    %v3711 = vadd.f32 %v3449, %v3505
    %v3712 = vadd.f32 %v3450, %v3505
    %v3713 = vadd.f32 %v3451, %v3505
    %v3714 = vadd.f32 %v3452, %v3505
    %v3715 = vadd.f32 %v3453, %v3505
    %v3716 = vadd.f32 %v3454, %v3505
    %v3717 = vadd.f32 %v3455, %v3505
    %v3718 = vadd.f32 %v3456, %v3505
    %v3719 = vadd.f32 %v3457, %v3505
    %v3720 = vadd.f32 %v3458, %v3505
    %v3721 = vadd.f32 %v3459, %v3505
    %v3722 = vadd.f32 %v3460, %v3505
    %v3723 = vadd.f32 %v3461, %v3505
    %v3724 = vadd.f32 %v3462, %v3505
    %v3725 = vadd.f32 %v3463, %v3505
    %v3726 = vadd.f32 %v3464, %v3505
    %v3727 = vadd.f32 %v3465, %v3505
    %v3728 = vadd.f32 %v3466, %v3505
    %v3729 = vadd.f32 %v3467, %v3505
    %v3730 = vadd.f32 %v3468, %v3505
    %v3731 = vadd.f32 %v3469, %v3505
    %v3732 = vadd.f32 %v3470, %v3505
    %v3733 = vadd.f32 %v3471, %v3505
    %v3734 = vadd.f32 %v3472, %v3505
    %v3735 = vadd.f32 %v3473, %v3505
    %v3736 = vadd.f32 %v3474, %v3505
    %v3737 = vadd.f32 %v3475, %v3505
    %v3738 = vadd.f32 %v3476, %v3505
    %v3739 = vadd.f32 %v3477, %v3505
    %v3740 = vadd.f32 %v3478, %v3505
    %v3741 = vadd.f32 %v3479, %v3505
    %v3742 = vadd.f32 %v3480, %v3505
    %v3743 = vadd.f32 %v3481, %v3505
    %v3744 = vadd.f32 %v3482, %v3505
    %v3745 = vadd.f32 %v3483, %v3505
    %v3746 = vadd.f32 %v3484, %v3505
    %v3747 = vadd.f32 %v3485, %v3505
    %v3748 = vadd.f32 %v3486, %v3505
    %v3749 = vadd.f32 %v3487, %v3505
    %v3750 = vadd.f32 %v3488, %v3505
    %v3751 = vadd.f32 %v3489, %v3505
    %v3752 = vadd.f32 %v3490, %v3505
    %v3753 = vadd.f32 %v3491, %v3505
    %v3754 = vadd.f32 %v3492, %v3505
    %v3755 = vadd.f32 %v3493, %v3505
    %v3756 = vadd.f32 %v3494, %v3505
    %v3757 = vadd.f32 %v3495, %v3505
    %v3758 = vadd.f32 %v3496, %v3505
    %v3759 = vadd.f32 %v3497, %v3505
    %v3760 = vadd.f32 %v3498, %v3505
    %v3761 = vadd.f32 %v3499, %v3505
    %v3762 = vadd.f32 %v3500, %v3505
    %v3763 = vmax.f32 %v3507, 0.0
    %v3764 = vmax.f32 %v3508, 0.0
    %v3765 = vmax.f32 %v3509, 0.0
    %v3766 = vmax.f32 %v3510, 0.0
    %v3767 = vmax.f32 %v3511, 0.0
    %v3768 = vmax.f32 %v3512, 0.0
    %v3769 = vmax.f32 %v3513, 0.0
    %v3770 = vmax.f32 %v3514, 0.0
    %v3771 = vmax.f32 %v3515, 0.0
    %v3772 = vmax.f32 %v3516, 0.0
    %v3773 = vmax.f32 %v3517, 0.0
    %v3774 = vmax.f32 %v3518, 0.0
    %v3775 = vmax.f32 %v3519, 0.0
    %v3776 = vmax.f32 %v3520, 0.0
    %v3777 = vmax.f32 %v3521, 0.0
    %v3778 = vmax.f32 %v3522, 0.0
    %v3779 = vmax.f32 %v3523, 0.0
    %v3780 = vmax.f32 %v3524, 0.0
    %v3781 = vmax.f32 %v3525, 0.0
    %v3782 = vmax.f32 %v3526, 0.0
    %v3783 = vmax.f32 %v3527, 0.0
    %v3784 = vmax.f32 %v3528, 0.0
    %v3785 = vmax.f32 %v3529, 0.0
    %v3786 = vmax.f32 %v3530, 0.0
    %v3787 = vmax.f32 %v3531, 0.0
    %v3788 = vmax.f32 %v3532, 0.0
    %v3789 = vmax.f32 %v3533, 0.0
    %v3790 = vmax.f32 %v3534, 0.0
    %v3791 = vmax.f32 %v3535, 0.0
    %v3792 = vmax.f32 %v3536, 0.0
    %v3793 = vmax.f32 %v3537, 0.0
    %v3794 = vmax.f32 %v3538, 0.0
    %v3795 = vmax.f32 %v3539, 0.0
    %v3796 = vmax.f32 %v3540, 0.0
    %v3797 = vmax.f32 %v3541, 0.0
    %v3798 = vmax.f32 %v3542, 0.0
    %v3799 = vmax.f32 %v3543, 0.0
    %v3800 = vmax.f32 %v3544, 0.0
    %v3801 = vmax.f32 %v3545, 0.0
    %v3802 = vmax.f32 %v3546, 0.0
    %v3803 = vmax.f32 %v3547, 0.0
    %v3804 = vmax.f32 %v3548, 0.0
    %v3805 = vmax.f32 %v3549, 0.0
    %v3806 = vmax.f32 %v3550, 0.0
    %v3807 = vmax.f32 %v3551, 0.0
    %v3808 = vmax.f32 %v3552, 0.0
    %v3809 = vmax.f32 %v3553, 0.0
    %v3810 = vmax.f32 %v3554, 0.0
    %v3811 = vmax.f32 %v3555, 0.0
    %v3812 = vmax.f32 %v3556, 0.0
    %v3813 = vmax.f32 %v3557, 0.0
    %v3814 = vmax.f32 %v3558, 0.0
    %v3815 = vmax.f32 %v3559, 0.0
    %v3816 = vmax.f32 %v3560, 0.0
    %v3817 = vmax.f32 %v3561, 0.0
    %v3818 = vmax.f32 %v3562, 0.0
    %v3819 = vmax.f32 %v3563, 0.0
    %v3820 = vmax.f32 %v3564, 0.0
    %v3821 = vmax.f32 %v3565, 0.0
    %v3822 = vmax.f32 %v3566, 0.0
    %v3823 = vmax.f32 %v3567, 0.0
    %v3824 = vmax.f32 %v3568, 0.0
    %v3825 = vmax.f32 %v3569, 0.0
    %v3826 = vmax.f32 %v3570, 0.0
    %v3827 = vmax.f32 %v3571, 0.0
    %v3828 = vmax.f32 %v3572, 0.0
    %v3829 = vmax.f32 %v3573, 0.0
    %v3830 = vmax.f32 %v3574, 0.0
    %v3831 = vmax.f32 %v3575, 0.0
    %v3832 = vmax.f32 %v3576, 0.0
    %v3833 = vmax.f32 %v3577, 0.0
    %v3834 = vmax.f32 %v3578, 0.0
    %v3835 = vmax.f32 %v3579, 0.0
    %v3836 = vmax.f32 %v3580, 0.0
    %v3837 = vmax.f32 %v3581, 0.0
    %v3838 = vmax.f32 %v3582, 0.0
    %v3839 = vmax.f32 %v3583, 0.0
    %v3840 = vmax.f32 %v3584, 0.0
    %v3841 = vmax.f32 %v3585, 0.0
    %v3842 = vmax.f32 %v3586, 0.0
    %v3843 = vmax.f32 %v3587, 0.0
    %v3844 = vmax.f32 %v3588, 0.0
    %v3845 = vmax.f32 %v3589, 0.0
    %v3846 = vmax.f32 %v3590, 0.0
    %v3847 = vmax.f32 %v3591, 0.0
    %v3848 = vmax.f32 %v3592, 0.0
    %v3849 = vmax.f32 %v3593, 0.0
    %v3850 = vmax.f32 %v3594, 0.0
    %v3851 = vmax.f32 %v3595, 0.0
    %v3852 = vmax.f32 %v3596, 0.0
    %v3853 = vmax.f32 %v3597, 0.0
    %v3854 = vmax.f32 %v3598, 0.0
    %v3855 = vmax.f32 %v3599, 0.0
    %v3856 = vmax.f32 %v3600, 0.0
    %v3857 = vmax.f32 %v3601, 0.0
    %v3858 = vmax.f32 %v3602, 0.0
    %v3859 = vmax.f32 %v3603, 0.0
    %v3860 = vmax.f32 %v3604, 0.0
    %v3861 = vmax.f32 %v3605, 0.0
    %v3862 = vmax.f32 %v3606, 0.0
    %v3863 = vmax.f32 %v3607, 0.0
    %v3864 = vmax.f32 %v3608, 0.0
    %v3865 = vmax.f32 %v3609, 0.0
    %v3866 = vmax.f32 %v3610, 0.0
    %v3867 = vmax.f32 %v3611, 0.0
    %v3868 = vmax.f32 %v3612, 0.0
    %v3869 = vmax.f32 %v3613, 0.0
    %v3870 = vmax.f32 %v3614, 0.0
    %v3871 = vmax.f32 %v3615, 0.0
    %v3872 = vmax.f32 %v3616, 0.0
    %v3873 = vmax.f32 %v3617, 0.0
    %v3874 = vmax.f32 %v3618, 0.0
    %v3875 = vmax.f32 %v3619, 0.0
    %v3876 = vmax.f32 %v3620, 0.0
    %v3877 = vmax.f32 %v3621, 0.0
    %v3878 = vmax.f32 %v3622, 0.0
    %v3879 = vmax.f32 %v3623, 0.0
    %v3880 = vmax.f32 %v3624, 0.0
    %v3881 = vmax.f32 %v3625, 0.0
    %v3882 = vmax.f32 %v3626, 0.0
    %v3883 = vmax.f32 %v3627, 0.0
    %v3884 = vmax.f32 %v3628, 0.0
    %v3885 = vmax.f32 %v3629, 0.0
    %v3886 = vmax.f32 %v3630, 0.0
    %v3887 = vmax.f32 %v3631, 0.0
    %v3888 = vmax.f32 %v3632, 0.0
    %v3889 = vmax.f32 %v3633, 0.0
    %v3890 = vmax.f32 %v3634, 0.0
    %v3891 = vmax.f32 %v3635, 0.0
    %v3892 = vmax.f32 %v3636, 0.0
    %v3893 = vmax.f32 %v3637, 0.0
    %v3894 = vmax.f32 %v3638, 0.0
    %v3895 = vmax.f32 %v3639, 0.0
    %v3896 = vmax.f32 %v3640, 0.0
    %v3897 = vmax.f32 %v3641, 0.0
    %v3898 = vmax.f32 %v3642, 0.0
    %v3899 = vmax.f32 %v3643, 0.0
    %v3900 = vmax.f32 %v3644, 0.0
    %v3901 = vmax.f32 %v3645, 0.0
    %v3902 = vmax.f32 %v3646, 0.0
    %v3903 = vmax.f32 %v3647, 0.0
    %v3904 = vmax.f32 %v3648, 0.0
    %v3905 = vmax.f32 %v3649, 0.0
    %v3906 = vmax.f32 %v3650, 0.0
    %v3907 = vmax.f32 %v3651, 0.0
    %v3908 = vmax.f32 %v3652, 0.0
    %v3909 = vmax.f32 %v3653, 0.0
    %v3910 = vmax.f32 %v3654, 0.0
    %v3911 = vmax.f32 %v3655, 0.0
    %v3912 = vmax.f32 %v3656, 0.0
    %v3913 = vmax.f32 %v3657, 0.0
    %v3914 = vmax.f32 %v3658, 0.0
    %v3915 = vmax.f32 %v3659, 0.0
    %v3916 = vmax.f32 %v3660, 0.0
    %v3917 = vmax.f32 %v3661, 0.0
    %v3918 = vmax.f32 %v3662, 0.0
    %v3919 = vmax.f32 %v3663, 0.0
    %v3920 = vmax.f32 %v3664, 0.0
    %v3921 = vmax.f32 %v3665, 0.0
    %v3922 = vmax.f32 %v3666, 0.0
    %v3923 = vmax.f32 %v3667, 0.0
    %v3924 = vmax.f32 %v3668, 0.0
    %v3925 = vmax.f32 %v3669, 0.0
    %v3926 = vmax.f32 %v3670, 0.0
    %v3927 = vmax.f32 %v3671, 0.0
    %v3928 = vmax.f32 %v3672, 0.0
    %v3929 = vmax.f32 %v3673, 0.0
    %v3930 = vmax.f32 %v3674, 0.0
    %v3931 = vmax.f32 %v3675, 0.0
    %v3932 = vmax.f32 %v3676, 0.0
    %v3933 = vmax.f32 %v3677, 0.0
    %v3934 = vmax.f32 %v3678, 0.0
    %v3935 = vmax.f32 %v3679, 0.0
    %v3936 = vmax.f32 %v3680, 0.0
    %v3937 = vmax.f32 %v3681, 0.0
    %v3938 = vmax.f32 %v3682, 0.0
    %v3939 = vmax.f32 %v3683, 0.0
    %v3940 = vmax.f32 %v3684, 0.0
    %v3941 = vmax.f32 %v3685, 0.0
    %v3942 = vmax.f32 %v3686, 0.0
    %v3943 = vmax.f32 %v3687, 0.0
    %v3944 = vmax.f32 %v3688, 0.0
    %v3945 = vmax.f32 %v3689, 0.0
    %v3946 = vmax.f32 %v3690, 0.0
    %v3947 = vmax.f32 %v3691, 0.0
    %v3948 = vmax.f32 %v3692, 0.0
    %v3949 = vmax.f32 %v3693, 0.0
    %v3950 = vmax.f32 %v3694, 0.0
    %v3951 = vmax.f32 %v3695, 0.0
    %v3952 = vmax.f32 %v3696, 0.0
    %v3953 = vmax.f32 %v3697, 0.0
    %v3954 = vmax.f32 %v3698, 0.0
    %v3955 = vmax.f32 %v3699, 0.0
    %v3956 = vmax.f32 %v3700, 0.0
    %v3957 = vmax.f32 %v3701, 0.0
    %v3958 = vmax.f32 %v3702, 0.0
    %v3959 = vmax.f32 %v3703, 0.0
    %v3960 = vmax.f32 %v3704, 0.0
    %v3961 = vmax.f32 %v3705, 0.0
    %v3962 = vmax.f32 %v3706, 0.0
    %v3963 = vmax.f32 %v3707, 0.0
    %v3964 = vmax.f32 %v3708, 0.0
    %v3965 = vmax.f32 %v3709, 0.0
    %v3966 = vmax.f32 %v3710, 0.0
    %v3967 = vmax.f32 %v3711, 0.0
    %v3968 = vmax.f32 %v3712, 0.0
    %v3969 = vmax.f32 %v3713, 0.0
    %v3970 = vmax.f32 %v3714, 0.0
    %v3971 = vmax.f32 %v3715, 0.0
    %v3972 = vmax.f32 %v3716, 0.0
    %v3973 = vmax.f32 %v3717, 0.0
    %v3974 = vmax.f32 %v3718, 0.0
    %v3975 = vmax.f32 %v3719, 0.0
    %v3976 = vmax.f32 %v3720, 0.0
    %v3977 = vmax.f32 %v3721, 0.0
    %v3978 = vmax.f32 %v3722, 0.0
    %v3979 = vmax.f32 %v3723, 0.0
    %v3980 = vmax.f32 %v3724, 0.0
    %v3981 = vmax.f32 %v3725, 0.0
    %v3982 = vmax.f32 %v3726, 0.0
    %v3983 = vmax.f32 %v3727, 0.0
    %v3984 = vmax.f32 %v3728, 0.0
    %v3985 = vmax.f32 %v3729, 0.0
    %v3986 = vmax.f32 %v3730, 0.0
    %v3987 = vmax.f32 %v3731, 0.0
    %v3988 = vmax.f32 %v3732, 0.0
    %v3989 = vmax.f32 %v3733, 0.0
    %v3990 = vmax.f32 %v3734, 0.0
    %v3991 = vmax.f32 %v3735, 0.0
    %v3992 = vmax.f32 %v3736, 0.0
    %v3993 = vmax.f32 %v3737, 0.0
    %v3994 = vmax.f32 %v3738, 0.0
    %v3995 = vmax.f32 %v3739, 0.0
    %v3996 = vmax.f32 %v3740, 0.0
    %v3997 = vmax.f32 %v3741, 0.0
    %v3998 = vmax.f32 %v3742, 0.0
    %v3999 = vmax.f32 %v3743, 0.0
    %v4000 = vmax.f32 %v3744, 0.0
    %v4001 = vmax.f32 %v3745, 0.0
    %v4002 = vmax.f32 %v3746, 0.0
    %v4003 = vmax.f32 %v3747, 0.0
    %v4004 = vmax.f32 %v3748, 0.0
    %v4005 = vmax.f32 %v3749, 0.0
    %v4006 = vmax.f32 %v3750, 0.0
    %v4007 = vmax.f32 %v3751, 0.0
    %v4008 = vmax.f32 %v3752, 0.0
    %v4009 = vmax.f32 %v3753, 0.0
    %v4010 = vmax.f32 %v3754, 0.0
    %v4011 = vmax.f32 %v3755, 0.0
    %v4012 = vmax.f32 %v3756, 0.0
    %v4013 = vmax.f32 %v3757, 0.0
    %v4014 = vmax.f32 %v3758, 0.0
    %v4015 = vmax.f32 %v3759, 0.0
    %v4016 = vmax.f32 %v3760, 0.0
    %v4017 = vmax.f32 %v3761, 0.0
    %v4018 = vmax.f32 %v3762, 0.0
    %v4019 = vpack.c.bf16 %v3764, %v3763
    %v4020 = vpack.c.bf16 %v3766, %v3765
    %v4021 = vpack.c.bf16 %v3768, %v3767
    %v4022 = vpack.c.bf16 %v3770, %v3769
    %v4023 = vpack.c.bf16 %v3772, %v3771
    %v4024 = vpack.c.bf16 %v3774, %v3773
    %v4025 = vpack.c.bf16 %v3776, %v3775
    %v4026 = vpack.c.bf16 %v3778, %v3777
    %v4027 = vpack.c.bf16 %v3780, %v3779
    %v4028 = vpack.c.bf16 %v3782, %v3781
    %v4029 = vpack.c.bf16 %v3784, %v3783
    %v4030 = vpack.c.bf16 %v3786, %v3785
    %v4031 = vpack.c.bf16 %v3788, %v3787
    %v4032 = vpack.c.bf16 %v3790, %v3789
    %v4033 = vpack.c.bf16 %v3792, %v3791
    %v4034 = vpack.c.bf16 %v3794, %v3793
    %v4035 = vpack.c.bf16 %v3796, %v3795
    %v4036 = vpack.c.bf16 %v3798, %v3797
    %v4037 = vpack.c.bf16 %v3800, %v3799
    %v4038 = vpack.c.bf16 %v3802, %v3801
    %v4039 = vpack.c.bf16 %v3804, %v3803
    %v4040 = vpack.c.bf16 %v3806, %v3805
    %v4041 = vpack.c.bf16 %v3808, %v3807
    %v4042 = vpack.c.bf16 %v3810, %v3809
    %v4043 = vpack.c.bf16 %v3812, %v3811
    %v4044 = vpack.c.bf16 %v3814, %v3813
    %v4045 = vpack.c.bf16 %v3816, %v3815
    %v4046 = vpack.c.bf16 %v3818, %v3817
    %v4047 = vpack.c.bf16 %v3820, %v3819
    %v4048 = vpack.c.bf16 %v3822, %v3821
    %v4049 = vpack.c.bf16 %v3824, %v3823
    %v4050 = vpack.c.bf16 %v3826, %v3825
    %v4051 = vpack.c.bf16 %v3828, %v3827
    %v4052 = vpack.c.bf16 %v3830, %v3829
    %v4053 = vpack.c.bf16 %v3832, %v3831
    %v4054 = vpack.c.bf16 %v3834, %v3833
    %v4055 = vpack.c.bf16 %v3836, %v3835
    %v4056 = vpack.c.bf16 %v3838, %v3837
    %v4057 = vpack.c.bf16 %v3840, %v3839
    %v4058 = vpack.c.bf16 %v3842, %v3841
    %v4059 = vpack.c.bf16 %v3844, %v3843
    %v4060 = vpack.c.bf16 %v3846, %v3845
    %v4061 = vpack.c.bf16 %v3848, %v3847
    %v4062 = vpack.c.bf16 %v3850, %v3849
    %v4063 = vpack.c.bf16 %v3852, %v3851
    %v4064 = vpack.c.bf16 %v3854, %v3853
    %v4065 = vpack.c.bf16 %v3856, %v3855
    %v4066 = vpack.c.bf16 %v3858, %v3857
    %v4067 = vpack.c.bf16 %v3860, %v3859
    %v4068 = vpack.c.bf16 %v3862, %v3861
    %v4069 = vpack.c.bf16 %v3864, %v3863
    %v4070 = vpack.c.bf16 %v3866, %v3865
    %v4071 = vpack.c.bf16 %v3868, %v3867
    %v4072 = vpack.c.bf16 %v3870, %v3869
    %v4073 = vpack.c.bf16 %v3872, %v3871
    %v4074 = vpack.c.bf16 %v3874, %v3873
    %v4075 = vpack.c.bf16 %v3876, %v3875
    %v4076 = vpack.c.bf16 %v3878, %v3877
    %v4077 = vpack.c.bf16 %v3880, %v3879
    %v4078 = vpack.c.bf16 %v3882, %v3881
    %v4079 = vpack.c.bf16 %v3884, %v3883
    %v4080 = vpack.c.bf16 %v3886, %v3885
    %v4081 = vpack.c.bf16 %v3888, %v3887
    %v4082 = vpack.c.bf16 %v3890, %v3889
    %v4083 = vpack.c.bf16 %v3892, %v3891
    %v4084 = vpack.c.bf16 %v3894, %v3893
    %v4085 = vpack.c.bf16 %v3896, %v3895
    %v4086 = vpack.c.bf16 %v3898, %v3897
    %v4087 = vpack.c.bf16 %v3900, %v3899
    %v4088 = vpack.c.bf16 %v3902, %v3901
    %v4089 = vpack.c.bf16 %v3904, %v3903
    %v4090 = vpack.c.bf16 %v3906, %v3905
    %v4091 = vpack.c.bf16 %v3908, %v3907
    %v4092 = vpack.c.bf16 %v3910, %v3909
    %v4093 = vpack.c.bf16 %v3912, %v3911
    %v4094 = vpack.c.bf16 %v3914, %v3913
    %v4095 = vpack.c.bf16 %v3916, %v3915
    %v4096 = vpack.c.bf16 %v3918, %v3917
    %v4097 = vpack.c.bf16 %v3920, %v3919
    %v4098 = vpack.c.bf16 %v3922, %v3921
    %v4099 = vpack.c.bf16 %v3924, %v3923
    %v4100 = vpack.c.bf16 %v3926, %v3925
    %v4101 = vpack.c.bf16 %v3928, %v3927
    %v4102 = vpack.c.bf16 %v3930, %v3929
    %v4103 = vpack.c.bf16 %v3932, %v3931
    %v4104 = vpack.c.bf16 %v3934, %v3933
    %v4105 = vpack.c.bf16 %v3936, %v3935
    %v4106 = vpack.c.bf16 %v3938, %v3937
    %v4107 = vpack.c.bf16 %v3940, %v3939
    %v4108 = vpack.c.bf16 %v3942, %v3941
    %v4109 = vpack.c.bf16 %v3944, %v3943
    %v4110 = vpack.c.bf16 %v3946, %v3945
    %v4111 = vpack.c.bf16 %v3948, %v3947
    %v4112 = vpack.c.bf16 %v3950, %v3949
    %v4113 = vpack.c.bf16 %v3952, %v3951
    %v4114 = vpack.c.bf16 %v3954, %v3953
    %v4115 = vpack.c.bf16 %v3956, %v3955
    %v4116 = vpack.c.bf16 %v3958, %v3957
    %v4117 = vpack.c.bf16 %v3960, %v3959
    %v4118 = vpack.c.bf16 %v3962, %v3961
    %v4119 = vpack.c.bf16 %v3964, %v3963
    %v4120 = vpack.c.bf16 %v3966, %v3965
    %v4121 = vpack.c.bf16 %v3968, %v3967
    %v4122 = vpack.c.bf16 %v3970, %v3969
    %v4123 = vpack.c.bf16 %v3972, %v3971
    %v4124 = vpack.c.bf16 %v3974, %v3973
    %v4125 = vpack.c.bf16 %v3976, %v3975
    %v4126 = vpack.c.bf16 %v3978, %v3977
    %v4127 = vpack.c.bf16 %v3980, %v3979
    %v4128 = vpack.c.bf16 %v3982, %v3981
    %v4129 = vpack.c.bf16 %v3984, %v3983
    %v4130 = vpack.c.bf16 %v3986, %v3985
    %v4131 = vpack.c.bf16 %v3988, %v3987
    %v4132 = vpack.c.bf16 %v3990, %v3989
    %v4133 = vpack.c.bf16 %v3992, %v3991
    %v4134 = vpack.c.bf16 %v3994, %v3993
    %v4135 = vpack.c.bf16 %v3996, %v3995
    %v4136 = vpack.c.bf16 %v3998, %v3997
    %v4137 = vpack.c.bf16 %v4000, %v3999
    %v4138 = vpack.c.bf16 %v4002, %v4001
    %v4139 = vpack.c.bf16 %v4004, %v4003
    %v4140 = vpack.c.bf16 %v4006, %v4005
    %v4141 = vpack.c.bf16 %v4008, %v4007
    %v4142 = vpack.c.bf16 %v4010, %v4009
    %v4143 = vpack.c.bf16 %v4012, %v4011
    %v4144 = vpack.c.bf16 %v4014, %v4013
    %v4145 = vpack.c.bf16 %v4016, %v4015
    %v4146 = vpack.c.bf16 %v4018, %v4017
    %v4275 = vunpack.c.l.b16 %v4019
    %v4276 = vunpack.c.h.b16 %v4019
    %v4277 = vunpack.c.l.b16 %v4020
    %v4278 = vunpack.c.h.b16 %v4020
    %v4279 = vunpack.c.l.b16 %v4021
    %v4280 = vunpack.c.h.b16 %v4021
    %v4281 = vunpack.c.l.b16 %v4022
    %v4282 = vunpack.c.h.b16 %v4022
    %v4283 = vunpack.c.l.b16 %v4023
    %v4284 = vunpack.c.h.b16 %v4023
    %v4285 = vunpack.c.l.b16 %v4024
    %v4286 = vunpack.c.h.b16 %v4024
    %v4287 = vunpack.c.l.b16 %v4025
    %v4288 = vunpack.c.h.b16 %v4025
    %v4289 = vunpack.c.l.b16 %v4026
    %v4290 = vunpack.c.h.b16 %v4026
    %v4291 = vunpack.c.l.b16 %v4027
    %v4292 = vunpack.c.h.b16 %v4027
    %v4293 = vunpack.c.l.b16 %v4028
    %v4294 = vunpack.c.h.b16 %v4028
    %v4295 = vunpack.c.l.b16 %v4029
    %v4296 = vunpack.c.h.b16 %v4029
    %v4297 = vunpack.c.l.b16 %v4030
    %v4298 = vunpack.c.h.b16 %v4030
    %v4299 = vunpack.c.l.b16 %v4031
    %v4300 = vunpack.c.h.b16 %v4031
    %v4301 = vunpack.c.l.b16 %v4032
    %v4302 = vunpack.c.h.b16 %v4032
    %v4303 = vunpack.c.l.b16 %v4033
    %v4304 = vunpack.c.h.b16 %v4033
    %v4305 = vunpack.c.l.b16 %v4034
    %v4306 = vunpack.c.h.b16 %v4034
    %v4307 = vunpack.c.l.b16 %v4035
    %v4308 = vunpack.c.h.b16 %v4035
    %v4309 = vunpack.c.l.b16 %v4036
    %v4310 = vunpack.c.h.b16 %v4036
    %v4311 = vunpack.c.l.b16 %v4037
    %v4312 = vunpack.c.h.b16 %v4037
    %v4313 = vunpack.c.l.b16 %v4038
    %v4314 = vunpack.c.h.b16 %v4038
    %v4315 = vunpack.c.l.b16 %v4039
    %v4316 = vunpack.c.h.b16 %v4039
    %v4317 = vunpack.c.l.b16 %v4040
    %v4318 = vunpack.c.h.b16 %v4040
    %v4319 = vunpack.c.l.b16 %v4041
    %v4320 = vunpack.c.h.b16 %v4041
    %v4321 = vunpack.c.l.b16 %v4042
    %v4322 = vunpack.c.h.b16 %v4042
    %v4323 = vunpack.c.l.b16 %v4043
    %v4324 = vunpack.c.h.b16 %v4043
    %v4325 = vunpack.c.l.b16 %v4044
    %v4326 = vunpack.c.h.b16 %v4044
    %v4327 = vunpack.c.l.b16 %v4045
    %v4328 = vunpack.c.h.b16 %v4045
    %v4329 = vunpack.c.l.b16 %v4046
    %v4330 = vunpack.c.h.b16 %v4046
    %v4331 = vunpack.c.l.b16 %v4047
    %v4332 = vunpack.c.h.b16 %v4047
    %v4333 = vunpack.c.l.b16 %v4048
    %v4334 = vunpack.c.h.b16 %v4048
    %v4335 = vunpack.c.l.b16 %v4049
    %v4336 = vunpack.c.h.b16 %v4049
    %v4337 = vunpack.c.l.b16 %v4050
    %v4338 = vunpack.c.h.b16 %v4050
    %v4339 = vunpack.c.l.b16 %v4051
    %v4340 = vunpack.c.h.b16 %v4051
    %v4341 = vunpack.c.l.b16 %v4052
    %v4342 = vunpack.c.h.b16 %v4052
    %v4343 = vunpack.c.l.b16 %v4053
    %v4344 = vunpack.c.h.b16 %v4053
    %v4345 = vunpack.c.l.b16 %v4054
    %v4346 = vunpack.c.h.b16 %v4054
    %v4347 = vunpack.c.l.b16 %v4055
    %v4348 = vunpack.c.h.b16 %v4055
    %v4349 = vunpack.c.l.b16 %v4056
    %v4350 = vunpack.c.h.b16 %v4056
    %v4351 = vunpack.c.l.b16 %v4057
    %v4352 = vunpack.c.h.b16 %v4057
    %v4353 = vunpack.c.l.b16 %v4058
    %v4354 = vunpack.c.h.b16 %v4058
    %v4355 = vunpack.c.l.b16 %v4059
    %v4356 = vunpack.c.h.b16 %v4059
    %v4357 = vunpack.c.l.b16 %v4060
    %v4358 = vunpack.c.h.b16 %v4060
    %v4359 = vunpack.c.l.b16 %v4061
    %v4360 = vunpack.c.h.b16 %v4061
    %v4361 = vunpack.c.l.b16 %v4062
    %v4362 = vunpack.c.h.b16 %v4062
    %v4363 = vunpack.c.l.b16 %v4063
    %v4364 = vunpack.c.h.b16 %v4063
    %v4365 = vunpack.c.l.b16 %v4064
    %v4366 = vunpack.c.h.b16 %v4064
    %v4367 = vunpack.c.l.b16 %v4065
    %v4368 = vunpack.c.h.b16 %v4065
    %v4369 = vunpack.c.l.b16 %v4066
    %v4370 = vunpack.c.h.b16 %v4066
    %v4371 = vunpack.c.l.b16 %v4067
    %v4372 = vunpack.c.h.b16 %v4067
    %v4373 = vunpack.c.l.b16 %v4068
    %v4374 = vunpack.c.h.b16 %v4068
    %v4375 = vunpack.c.l.b16 %v4069
    %v4376 = vunpack.c.h.b16 %v4069
    %v4377 = vunpack.c.l.b16 %v4070
    %v4378 = vunpack.c.h.b16 %v4070
    %v4379 = vunpack.c.l.b16 %v4071
    %v4380 = vunpack.c.h.b16 %v4071
    %v4381 = vunpack.c.l.b16 %v4072
    %v4382 = vunpack.c.h.b16 %v4072
    %v4383 = vunpack.c.l.b16 %v4073
    %v4384 = vunpack.c.h.b16 %v4073
    %v4385 = vunpack.c.l.b16 %v4074
    %v4386 = vunpack.c.h.b16 %v4074
    %v4387 = vunpack.c.l.b16 %v4075
    %v4388 = vunpack.c.h.b16 %v4075
    %v4389 = vunpack.c.l.b16 %v4076
    %v4390 = vunpack.c.h.b16 %v4076
    %v4391 = vunpack.c.l.b16 %v4077
    %v4392 = vunpack.c.h.b16 %v4077
    %v4393 = vunpack.c.l.b16 %v4078
    %v4394 = vunpack.c.h.b16 %v4078
    %v4395 = vunpack.c.l.b16 %v4079
    %v4396 = vunpack.c.h.b16 %v4079
    %v4397 = vunpack.c.l.b16 %v4080
    %v4398 = vunpack.c.h.b16 %v4080
    %v4399 = vunpack.c.l.b16 %v4081
    %v4400 = vunpack.c.h.b16 %v4081
    %v4401 = vunpack.c.l.b16 %v4082
    %v4402 = vunpack.c.h.b16 %v4082
    %v4403 = vunpack.c.l.b16 %v4083
    %v4404 = vunpack.c.h.b16 %v4083
    %v4405 = vunpack.c.l.b16 %v4084
    %v4406 = vunpack.c.h.b16 %v4084
    %v4407 = vunpack.c.l.b16 %v4085
    %v4408 = vunpack.c.h.b16 %v4085
    %v4409 = vunpack.c.l.b16 %v4086
    %v4410 = vunpack.c.h.b16 %v4086
    %v4411 = vunpack.c.l.b16 %v4087
    %v4412 = vunpack.c.h.b16 %v4087
    %v4413 = vunpack.c.l.b16 %v4088
    %v4414 = vunpack.c.h.b16 %v4088
    %v4415 = vunpack.c.l.b16 %v4089
    %v4416 = vunpack.c.h.b16 %v4089
    %v4417 = vunpack.c.l.b16 %v4090
    %v4418 = vunpack.c.h.b16 %v4090
    %v4419 = vunpack.c.l.b16 %v4091
    %v4420 = vunpack.c.h.b16 %v4091
    %v4421 = vunpack.c.l.b16 %v4092
    %v4422 = vunpack.c.h.b16 %v4092
    %v4423 = vunpack.c.l.b16 %v4093
    %v4424 = vunpack.c.h.b16 %v4093
    %v4425 = vunpack.c.l.b16 %v4094
    %v4426 = vunpack.c.h.b16 %v4094
    %v4427 = vunpack.c.l.b16 %v4095
    %v4428 = vunpack.c.h.b16 %v4095
    %v4429 = vunpack.c.l.b16 %v4096
    %v4430 = vunpack.c.h.b16 %v4096
    %v4431 = vunpack.c.l.b16 %v4097
    %v4432 = vunpack.c.h.b16 %v4097
    %v4433 = vunpack.c.l.b16 %v4098
    %v4434 = vunpack.c.h.b16 %v4098
    %v4435 = vunpack.c.l.b16 %v4099
    %v4436 = vunpack.c.h.b16 %v4099
    %v4437 = vunpack.c.l.b16 %v4100
    %v4438 = vunpack.c.h.b16 %v4100
    %v4439 = vunpack.c.l.b16 %v4101
    %v4440 = vunpack.c.h.b16 %v4101
    %v4441 = vunpack.c.l.b16 %v4102
    %v4442 = vunpack.c.h.b16 %v4102
    %v4443 = vunpack.c.l.b16 %v4103
    %v4444 = vunpack.c.h.b16 %v4103
    %v4445 = vunpack.c.l.b16 %v4104
    %v4446 = vunpack.c.h.b16 %v4104
    %v4447 = vunpack.c.l.b16 %v4105
    %v4448 = vunpack.c.h.b16 %v4105
    %v4449 = vunpack.c.l.b16 %v4106
    %v4450 = vunpack.c.h.b16 %v4106
    %v4451 = vunpack.c.l.b16 %v4107
    %v4452 = vunpack.c.h.b16 %v4107
    %v4453 = vunpack.c.l.b16 %v4108
    %v4454 = vunpack.c.h.b16 %v4108
    %v4455 = vunpack.c.l.b16 %v4109
    %v4456 = vunpack.c.h.b16 %v4109
    %v4457 = vunpack.c.l.b16 %v4110
    %v4458 = vunpack.c.h.b16 %v4110
    %v4459 = vunpack.c.l.b16 %v4111
    %v4460 = vunpack.c.h.b16 %v4111
    %v4461 = vunpack.c.l.b16 %v4112
    %v4462 = vunpack.c.h.b16 %v4112
    %v4463 = vunpack.c.l.b16 %v4113
    %v4464 = vunpack.c.h.b16 %v4113
    %v4465 = vunpack.c.l.b16 %v4114
    %v4466 = vunpack.c.h.b16 %v4114
    %v4467 = vunpack.c.l.b16 %v4115
    %v4468 = vunpack.c.h.b16 %v4115
    %v4469 = vunpack.c.l.b16 %v4116
    %v4470 = vunpack.c.h.b16 %v4116
    %v4471 = vunpack.c.l.b16 %v4117
    %v4472 = vunpack.c.h.b16 %v4117
    %v4473 = vunpack.c.l.b16 %v4118
    %v4474 = vunpack.c.h.b16 %v4118
    %v4475 = vunpack.c.l.b16 %v4119
    %v4476 = vunpack.c.h.b16 %v4119
    %v4477 = vunpack.c.l.b16 %v4120
    %v4478 = vunpack.c.h.b16 %v4120
    %v4479 = vunpack.c.l.b16 %v4121
    %v4480 = vunpack.c.h.b16 %v4121
    %v4481 = vunpack.c.l.b16 %v4122
    %v4482 = vunpack.c.h.b16 %v4122
    %v4483 = vunpack.c.l.b16 %v4123
    %v4484 = vunpack.c.h.b16 %v4123
    %v4485 = vunpack.c.l.b16 %v4124
    %v4486 = vunpack.c.h.b16 %v4124
    %v4487 = vunpack.c.l.b16 %v4125
    %v4488 = vunpack.c.h.b16 %v4125
    %v4489 = vunpack.c.l.b16 %v4126
    %v4490 = vunpack.c.h.b16 %v4126
    %v4491 = vunpack.c.l.b16 %v4127
    %v4492 = vunpack.c.h.b16 %v4127
    %v4493 = vunpack.c.l.b16 %v4128
    %v4494 = vunpack.c.h.b16 %v4128
    %v4495 = vunpack.c.l.b16 %v4129
    %v4496 = vunpack.c.h.b16 %v4129
    %v4497 = vunpack.c.l.b16 %v4130
    %v4498 = vunpack.c.h.b16 %v4130
    %v4499 = vunpack.c.l.b16 %v4131
    %v4500 = vunpack.c.h.b16 %v4131
    %v4501 = vunpack.c.l.b16 %v4132
    %v4502 = vunpack.c.h.b16 %v4132
    %v4503 = vunpack.c.l.b16 %v4133
    %v4504 = vunpack.c.h.b16 %v4133
    %v4505 = vunpack.c.l.b16 %v4134
    %v4506 = vunpack.c.h.b16 %v4134
    %v4507 = vunpack.c.l.b16 %v4135
    %v4508 = vunpack.c.h.b16 %v4135
    %v4509 = vunpack.c.l.b16 %v4136
    %v4510 = vunpack.c.h.b16 %v4136
    %v4511 = vunpack.c.l.b16 %v4137
    %v4512 = vunpack.c.h.b16 %v4137
    %v4513 = vunpack.c.l.b16 %v4138
    %v4514 = vunpack.c.h.b16 %v4138
    %v4515 = vunpack.c.l.b16 %v4139
    %v4516 = vunpack.c.h.b16 %v4139
    %v4517 = vunpack.c.l.b16 %v4140
    %v4518 = vunpack.c.h.b16 %v4140
    %v4519 = vunpack.c.l.b16 %v4141
    %v4520 = vunpack.c.h.b16 %v4141
    %v4521 = vunpack.c.l.b16 %v4142
    %v4522 = vunpack.c.h.b16 %v4142
    %v4523 = vunpack.c.l.b16 %v4143
    %v4524 = vunpack.c.h.b16 %v4143
    %v4525 = vunpack.c.l.b16 %v4144
    %v4526 = vunpack.c.h.b16 %v4144
    %v4527 = vunpack.c.l.b16 %v4145
    %v4528 = vunpack.c.h.b16 %v4145
    %v4529 = vunpack.c.l.b16 %v4146
    %v4530 = vunpack.c.h.b16 %v4146
    %v4531 = vpack.c.b16 %v4275, %v4275
    %v4532 = vpack.c.b16 %v4276, %v4276
    %v4533 = vpack.c.b16 %v4277, %v4277
    %v4534 = vpack.c.b16 %v4278, %v4278
    %v4535 = vpack.c.b16 %v4279, %v4279
    %v4536 = vpack.c.b16 %v4280, %v4280
    %v4537 = vpack.c.b16 %v4281, %v4281
    %v4538 = vpack.c.b16 %v4282, %v4282
    %v4539 = vpack.c.b16 %v4283, %v4283
    %v4540 = vpack.c.b16 %v4284, %v4284
    %v4541 = vpack.c.b16 %v4285, %v4285
    %v4542 = vpack.c.b16 %v4286, %v4286
    %v4543 = vpack.c.b16 %v4287, %v4287
    %v4544 = vpack.c.b16 %v4288, %v4288
    %v4545 = vpack.c.b16 %v4289, %v4289
    %v4546 = vpack.c.b16 %v4290, %v4290
    %v4547 = vpack.c.b16 %v4291, %v4291
    %v4548 = vpack.c.b16 %v4292, %v4292
    %v4549 = vpack.c.b16 %v4293, %v4293
    %v4550 = vpack.c.b16 %v4294, %v4294
    %v4551 = vpack.c.b16 %v4295, %v4295
    %v4552 = vpack.c.b16 %v4296, %v4296
    %v4553 = vpack.c.b16 %v4297, %v4297
    %v4554 = vpack.c.b16 %v4298, %v4298
    %v4555 = vpack.c.b16 %v4299, %v4299
    %v4556 = vpack.c.b16 %v4300, %v4300
    %v4557 = vpack.c.b16 %v4301, %v4301
    %v4558 = vpack.c.b16 %v4302, %v4302
    %v4559 = vpack.c.b16 %v4303, %v4303
    %v4560 = vpack.c.b16 %v4304, %v4304
    %v4561 = vpack.c.b16 %v4305, %v4305
    %v4562 = vpack.c.b16 %v4306, %v4306
    %v4563 = vpack.c.b16 %v4307, %v4307
    %v4564 = vpack.c.b16 %v4308, %v4308
    %v4565 = vpack.c.b16 %v4309, %v4309
    %v4566 = vpack.c.b16 %v4310, %v4310
    %v4567 = vpack.c.b16 %v4311, %v4311
    %v4568 = vpack.c.b16 %v4312, %v4312
    %v4569 = vpack.c.b16 %v4313, %v4313
    %v4570 = vpack.c.b16 %v4314, %v4314
    %v4571 = vpack.c.b16 %v4315, %v4315
    %v4572 = vpack.c.b16 %v4316, %v4316
    %v4573 = vpack.c.b16 %v4317, %v4317
    %v4574 = vpack.c.b16 %v4318, %v4318
    %v4575 = vpack.c.b16 %v4319, %v4319
    %v4576 = vpack.c.b16 %v4320, %v4320
    %v4577 = vpack.c.b16 %v4321, %v4321
    %v4578 = vpack.c.b16 %v4322, %v4322
    %v4579 = vpack.c.b16 %v4323, %v4323
    %v4580 = vpack.c.b16 %v4324, %v4324
    %v4581 = vpack.c.b16 %v4325, %v4325
    %v4582 = vpack.c.b16 %v4326, %v4326
    %v4583 = vpack.c.b16 %v4327, %v4327
    %v4584 = vpack.c.b16 %v4328, %v4328
    %v4585 = vpack.c.b16 %v4329, %v4329
    %v4586 = vpack.c.b16 %v4330, %v4330
    %v4587 = vpack.c.b16 %v4331, %v4331
    %v4588 = vpack.c.b16 %v4332, %v4332
    %v4589 = vpack.c.b16 %v4333, %v4333
    %v4590 = vpack.c.b16 %v4334, %v4334
    %v4591 = vpack.c.b16 %v4335, %v4335
    %v4592 = vpack.c.b16 %v4336, %v4336
    %v4593 = vpack.c.b16 %v4337, %v4337
    %v4594 = vpack.c.b16 %v4338, %v4338
    %v4595 = vpack.c.b16 %v4339, %v4339
    %v4596 = vpack.c.b16 %v4340, %v4340
    %v4597 = vpack.c.b16 %v4341, %v4341
    %v4598 = vpack.c.b16 %v4342, %v4342
    %v4599 = vpack.c.b16 %v4343, %v4343
    %v4600 = vpack.c.b16 %v4344, %v4344
    %v4601 = vpack.c.b16 %v4345, %v4345
    %v4602 = vpack.c.b16 %v4346, %v4346
    %v4603 = vpack.c.b16 %v4347, %v4347
    %v4604 = vpack.c.b16 %v4348, %v4348
    %v4605 = vpack.c.b16 %v4349, %v4349
    %v4606 = vpack.c.b16 %v4350, %v4350
    %v4607 = vpack.c.b16 %v4351, %v4351
    %v4608 = vpack.c.b16 %v4352, %v4352
    %v4609 = vpack.c.b16 %v4353, %v4353
    %v4610 = vpack.c.b16 %v4354, %v4354
    %v4611 = vpack.c.b16 %v4355, %v4355
    %v4612 = vpack.c.b16 %v4356, %v4356
    %v4613 = vpack.c.b16 %v4357, %v4357
    %v4614 = vpack.c.b16 %v4358, %v4358
    %v4615 = vpack.c.b16 %v4359, %v4359
    %v4616 = vpack.c.b16 %v4360, %v4360
    %v4617 = vpack.c.b16 %v4361, %v4361
    %v4618 = vpack.c.b16 %v4362, %v4362
    %v4619 = vpack.c.b16 %v4363, %v4363
    %v4620 = vpack.c.b16 %v4364, %v4364
    %v4621 = vpack.c.b16 %v4365, %v4365
    %v4622 = vpack.c.b16 %v4366, %v4366
    %v4623 = vpack.c.b16 %v4367, %v4367
    %v4624 = vpack.c.b16 %v4368, %v4368
    %v4625 = vpack.c.b16 %v4369, %v4369
    %v4626 = vpack.c.b16 %v4370, %v4370
    %v4627 = vpack.c.b16 %v4371, %v4371
    %v4628 = vpack.c.b16 %v4372, %v4372
    %v4629 = vpack.c.b16 %v4373, %v4373
    %v4630 = vpack.c.b16 %v4374, %v4374
    %v4631 = vpack.c.b16 %v4375, %v4375
    %v4632 = vpack.c.b16 %v4376, %v4376
    %v4633 = vpack.c.b16 %v4377, %v4377
    %v4634 = vpack.c.b16 %v4378, %v4378
    %v4635 = vpack.c.b16 %v4379, %v4379
    %v4636 = vpack.c.b16 %v4380, %v4380
    %v4637 = vpack.c.b16 %v4381, %v4381
    %v4638 = vpack.c.b16 %v4382, %v4382
    %v4639 = vpack.c.b16 %v4383, %v4383
    %v4640 = vpack.c.b16 %v4384, %v4384
    %v4641 = vpack.c.b16 %v4385, %v4385
    %v4642 = vpack.c.b16 %v4386, %v4386
    %v4643 = vpack.c.b16 %v4387, %v4387
    %v4644 = vpack.c.b16 %v4388, %v4388
    %v4645 = vpack.c.b16 %v4389, %v4389
    %v4646 = vpack.c.b16 %v4390, %v4390
    %v4647 = vpack.c.b16 %v4391, %v4391
    %v4648 = vpack.c.b16 %v4392, %v4392
    %v4649 = vpack.c.b16 %v4393, %v4393
    %v4650 = vpack.c.b16 %v4394, %v4394
    %v4651 = vpack.c.b16 %v4395, %v4395
    %v4652 = vpack.c.b16 %v4396, %v4396
    %v4653 = vpack.c.b16 %v4397, %v4397
    %v4654 = vpack.c.b16 %v4398, %v4398
    %v4655 = vpack.c.b16 %v4399, %v4399
    %v4656 = vpack.c.b16 %v4400, %v4400
    %v4657 = vpack.c.b16 %v4401, %v4401
    %v4658 = vpack.c.b16 %v4402, %v4402
    %v4659 = vpack.c.b16 %v4403, %v4403
    %v4660 = vpack.c.b16 %v4404, %v4404
    %v4661 = vpack.c.b16 %v4405, %v4405
    %v4662 = vpack.c.b16 %v4406, %v4406
    %v4663 = vpack.c.b16 %v4407, %v4407
    %v4664 = vpack.c.b16 %v4408, %v4408
    %v4665 = vpack.c.b16 %v4409, %v4409
    %v4666 = vpack.c.b16 %v4410, %v4410
    %v4667 = vpack.c.b16 %v4411, %v4411
    %v4668 = vpack.c.b16 %v4412, %v4412
    %v4669 = vpack.c.b16 %v4413, %v4413
    %v4670 = vpack.c.b16 %v4414, %v4414
    %v4671 = vpack.c.b16 %v4415, %v4415
    %v4672 = vpack.c.b16 %v4416, %v4416
    %v4673 = vpack.c.b16 %v4417, %v4417
    %v4674 = vpack.c.b16 %v4418, %v4418
    %v4675 = vpack.c.b16 %v4419, %v4419
    %v4676 = vpack.c.b16 %v4420, %v4420
    %v4677 = vpack.c.b16 %v4421, %v4421
    %v4678 = vpack.c.b16 %v4422, %v4422
    %v4679 = vpack.c.b16 %v4423, %v4423
    %v4680 = vpack.c.b16 %v4424, %v4424
    %v4681 = vpack.c.b16 %v4425, %v4425
    %v4682 = vpack.c.b16 %v4426, %v4426
    %v4683 = vpack.c.b16 %v4427, %v4427
    %v4684 = vpack.c.b16 %v4428, %v4428
    %v4685 = vpack.c.b16 %v4429, %v4429
    %v4686 = vpack.c.b16 %v4430, %v4430
    %v4687 = vpack.c.b16 %v4431, %v4431
    %v4688 = vpack.c.b16 %v4432, %v4432
    %v4689 = vpack.c.b16 %v4433, %v4433
    %v4690 = vpack.c.b16 %v4434, %v4434
    %v4691 = vpack.c.b16 %v4435, %v4435
    %v4692 = vpack.c.b16 %v4436, %v4436
    %v4693 = vpack.c.b16 %v4437, %v4437
    %v4694 = vpack.c.b16 %v4438, %v4438
    %v4695 = vpack.c.b16 %v4439, %v4439
    %v4696 = vpack.c.b16 %v4440, %v4440
    %v4697 = vpack.c.b16 %v4441, %v4441
    %v4698 = vpack.c.b16 %v4442, %v4442
    %v4699 = vpack.c.b16 %v4443, %v4443
    %v4700 = vpack.c.b16 %v4444, %v4444
    %v4701 = vpack.c.b16 %v4445, %v4445
    %v4702 = vpack.c.b16 %v4446, %v4446
    %v4703 = vpack.c.b16 %v4447, %v4447
    %v4704 = vpack.c.b16 %v4448, %v4448
    %v4705 = vpack.c.b16 %v4449, %v4449
    %v4706 = vpack.c.b16 %v4450, %v4450
    %v4707 = vpack.c.b16 %v4451, %v4451
    %v4708 = vpack.c.b16 %v4452, %v4452
    %v4709 = vpack.c.b16 %v4453, %v4453
    %v4710 = vpack.c.b16 %v4454, %v4454
    %v4711 = vpack.c.b16 %v4455, %v4455
    %v4712 = vpack.c.b16 %v4456, %v4456
    %v4713 = vpack.c.b16 %v4457, %v4457
    %v4714 = vpack.c.b16 %v4458, %v4458
    %v4715 = vpack.c.b16 %v4459, %v4459
    %v4716 = vpack.c.b16 %v4460, %v4460
    %v4717 = vpack.c.b16 %v4461, %v4461
    %v4718 = vpack.c.b16 %v4462, %v4462
    %v4719 = vpack.c.b16 %v4463, %v4463
    %v4720 = vpack.c.b16 %v4464, %v4464
    %v4721 = vpack.c.b16 %v4465, %v4465
    %v4722 = vpack.c.b16 %v4466, %v4466
    %v4723 = vpack.c.b16 %v4467, %v4467
    %v4724 = vpack.c.b16 %v4468, %v4468
    %v4725 = vpack.c.b16 %v4469, %v4469
    %v4726 = vpack.c.b16 %v4470, %v4470
    %v4727 = vpack.c.b16 %v4471, %v4471
    %v4728 = vpack.c.b16 %v4472, %v4472
    %v4729 = vpack.c.b16 %v4473, %v4473
    %v4730 = vpack.c.b16 %v4474, %v4474
    %v4731 = vpack.c.b16 %v4475, %v4475
    %v4732 = vpack.c.b16 %v4476, %v4476
    %v4733 = vpack.c.b16 %v4477, %v4477
    %v4734 = vpack.c.b16 %v4478, %v4478
    %v4735 = vpack.c.b16 %v4479, %v4479
    %v4736 = vpack.c.b16 %v4480, %v4480
    %v4737 = vpack.c.b16 %v4481, %v4481
    %v4738 = vpack.c.b16 %v4482, %v4482
    %v4739 = vpack.c.b16 %v4483, %v4483
    %v4740 = vpack.c.b16 %v4484, %v4484
    %v4741 = vpack.c.b16 %v4485, %v4485
    %v4742 = vpack.c.b16 %v4486, %v4486
    %v4743 = vpack.c.b16 %v4487, %v4487
    %v4744 = vpack.c.b16 %v4488, %v4488
    %v4745 = vpack.c.b16 %v4489, %v4489
    %v4746 = vpack.c.b16 %v4490, %v4490
    %v4747 = vpack.c.b16 %v4491, %v4491
    %v4748 = vpack.c.b16 %v4492, %v4492
    %v4749 = vpack.c.b16 %v4493, %v4493
    %v4750 = vpack.c.b16 %v4494, %v4494
    %v4751 = vpack.c.b16 %v4495, %v4495
    %v4752 = vpack.c.b16 %v4496, %v4496
    %v4753 = vpack.c.b16 %v4497, %v4497
    %v4754 = vpack.c.b16 %v4498, %v4498
    %v4755 = vpack.c.b16 %v4499, %v4499
    %v4756 = vpack.c.b16 %v4500, %v4500
    %v4757 = vpack.c.b16 %v4501, %v4501
    %v4758 = vpack.c.b16 %v4502, %v4502
    %v4759 = vpack.c.b16 %v4503, %v4503
    %v4760 = vpack.c.b16 %v4504, %v4504
    %v4761 = vpack.c.b16 %v4505, %v4505
    %v4762 = vpack.c.b16 %v4506, %v4506
    %v4763 = vpack.c.b16 %v4507, %v4507
    %v4764 = vpack.c.b16 %v4508, %v4508
    %v4765 = vpack.c.b16 %v4509, %v4509
    %v4766 = vpack.c.b16 %v4510, %v4510
    %v4767 = vpack.c.b16 %v4511, %v4511
    %v4768 = vpack.c.b16 %v4512, %v4512
    %v4769 = vpack.c.b16 %v4513, %v4513
    %v4770 = vpack.c.b16 %v4514, %v4514
    %v4771 = vpack.c.b16 %v4515, %v4515
    %v4772 = vpack.c.b16 %v4516, %v4516
    %v4773 = vpack.c.b16 %v4517, %v4517
    %v4774 = vpack.c.b16 %v4518, %v4518
    %v4775 = vpack.c.b16 %v4519, %v4519
    %v4776 = vpack.c.b16 %v4520, %v4520
    %v4777 = vpack.c.b16 %v4521, %v4521
    %v4778 = vpack.c.b16 %v4522, %v4522
    %v4779 = vpack.c.b16 %v4523, %v4523
    %v4780 = vpack.c.b16 %v4524, %v4524
    %v4781 = vpack.c.b16 %v4525, %v4525
    %v4782 = vpack.c.b16 %v4526, %v4526
    %v4783 = vpack.c.b16 %v4527, %v4527
    %v4784 = vpack.c.b16 %v4528, %v4528
    %v4785 = vpack.c.b16 %v4529, %v4529
    %v4786 = vpack.c.b16 %v4530, %v4530
    %5043 = vst [vmem:[#allocation7] sm:$0xf] %v4531
    %5044 = vst [vmem:[#allocation7 + $0x4] sm:$0xf] %v4532
    %5045 = vst [vmem:[#allocation7 + $0x8] sm:$0xf] %v4533
    %5046 = vst [vmem:[#allocation7 + $0xc] sm:$0xf] %v4534
    %5047 = vst [vmem:[#allocation7 + $0x10] sm:$0xf] %v4535
    %5048 = vst [vmem:[#allocation7 + $0x14] sm:$0xf] %v4536
    %5049 = vst [vmem:[#allocation7 + $0x18] sm:$0xf] %v4537
    %5050 = vst [vmem:[#allocation7 + $0x1c] sm:$0xf] %v4538
    %5051 = vst [vmem:[#allocation7 + $0x20] sm:$0xf] %v4539
    %5052 = vst [vmem:[#allocation7 + $0x24] sm:$0xf] %v4540
    %5053 = vst [vmem:[#allocation7 + $0x28] sm:$0xf] %v4541
    %5054 = vst [vmem:[#allocation7 + $0x2c] sm:$0xf] %v4542
    %5055 = vst [vmem:[#allocation7 + $0x30] sm:$0xf] %v4543
    %5056 = vst [vmem:[#allocation7 + $0x34] sm:$0xf] %v4544
    %5057 = vst [vmem:[#allocation7 + $0x38] sm:$0xf] %v4545
    %5058 = vst [vmem:[#allocation7 + $0x3c] sm:$0xf] %v4546
    %5059 = vst [vmem:[#allocation7 + $0x40] sm:$0xf] %v4547
    %5060 = vst [vmem:[#allocation7 + $0x44] sm:$0xf] %v4548
    %5061 = vst [vmem:[#allocation7 + $0x48] sm:$0xf] %v4549
    %5062 = vst [vmem:[#allocation7 + $0x4c] sm:$0xf] %v4550
    %5063 = vst [vmem:[#allocation7 + $0x50] sm:$0xf] %v4551
    %5064 = vst [vmem:[#allocation7 + $0x54] sm:$0xf] %v4552
    %5065 = vst [vmem:[#allocation7 + $0x58] sm:$0xf] %v4553
    %5066 = vst [vmem:[#allocation7 + $0x5c] sm:$0xf] %v4554
    %5067 = vst [vmem:[#allocation7 + $0x60] sm:$0xf] %v4555
    %5068 = vst [vmem:[#allocation7 + $0x64] sm:$0xf] %v4556
    %5069 = vst [vmem:[#allocation7 + $0x68] sm:$0xf] %v4557
    %5070 = vst [vmem:[#allocation7 + $0x6c] sm:$0xf] %v4558
    %5071 = vst [vmem:[#allocation7 + $0x70] sm:$0xf] %v4559
    %5072 = vst [vmem:[#allocation7 + $0x74] sm:$0xf] %v4560
    %5073 = vst [vmem:[#allocation7 + $0x78] sm:$0xf] %v4561
    %5074 = vst [vmem:[#allocation7 + $0x7c] sm:$0xf] %v4562
    %5075 = vst [vmem:[#allocation7 + $0x80] sm:$0xf] %v4563
    %5076 = vst [vmem:[#allocation7 + $0x84] sm:$0xf] %v4564
    %5077 = vst [vmem:[#allocation7 + $0x88] sm:$0xf] %v4565
    %5078 = vst [vmem:[#allocation7 + $0x8c] sm:$0xf] %v4566
    %5079 = vst [vmem:[#allocation7 + $0x90] sm:$0xf] %v4567
    %5080 = vst [vmem:[#allocation7 + $0x94] sm:$0xf] %v4568
    %5081 = vst [vmem:[#allocation7 + $0x98] sm:$0xf] %v4569
    %5082 = vst [vmem:[#allocation7 + $0x9c] sm:$0xf] %v4570
    %5083 = vst [vmem:[#allocation7 + $0xa0] sm:$0xf] %v4571
    %5084 = vst [vmem:[#allocation7 + $0xa4] sm:$0xf] %v4572
    %5085 = vst [vmem:[#allocation7 + $0xa8] sm:$0xf] %v4573
    %5086 = vst [vmem:[#allocation7 + $0xac] sm:$0xf] %v4574
    %5087 = vst [vmem:[#allocation7 + $0xb0] sm:$0xf] %v4575
    %5088 = vst [vmem:[#allocation7 + $0xb4] sm:$0xf] %v4576
    %5089 = vst [vmem:[#allocation7 + $0xb8] sm:$0xf] %v4577
    %5090 = vst [vmem:[#allocation7 + $0xbc] sm:$0xf] %v4578
    %5091 = vst [vmem:[#allocation7 + $0xc0] sm:$0xf] %v4579
    %5092 = vst [vmem:[#allocation7 + $0xc4] sm:$0xf] %v4580
    %5093 = vst [vmem:[#allocation7 + $0xc8] sm:$0xf] %v4581
    %5094 = vst [vmem:[#allocation7 + $0xcc] sm:$0xf] %v4582
    %5095 = vst [vmem:[#allocation7 + $0xd0] sm:$0xf] %v4583
    %5096 = vst [vmem:[#allocation7 + $0xd4] sm:$0xf] %v4584
    %5097 = vst [vmem:[#allocation7 + $0xd8] sm:$0xf] %v4585
    %5098 = vst [vmem:[#allocation7 + $0xdc] sm:$0xf] %v4586
    %5099 = vst [vmem:[#allocation7 + $0xe0] sm:$0xf] %v4587
    %5100 = vst [vmem:[#allocation7 + $0xe4] sm:$0xf] %v4588
    %5101 = vst [vmem:[#allocation7 + $0xe8] sm:$0xf] %v4589
    %5102 = vst [vmem:[#allocation7 + $0xec] sm:$0xf] %v4590
    %5103 = vst [vmem:[#allocation7 + $0xf0] sm:$0xf] %v4591
    %5104 = vst [vmem:[#allocation7 + $0xf4] sm:$0xf] %v4592
    %5105 = vst [vmem:[#allocation7 + $0xf8] sm:$0xf] %v4593
    %5106 = vst [vmem:[#allocation7 + $0xfc] sm:$0xf] %v4594
    %5107 = vst [vmem:[#allocation7 + $0x100] sm:$0xf] %v4595
    %5108 = vst [vmem:[#allocation7 + $0x104] sm:$0xf] %v4596
    %5109 = vst [vmem:[#allocation7 + $0x108] sm:$0xf] %v4597
    %5110 = vst [vmem:[#allocation7 + $0x10c] sm:$0xf] %v4598
    %5111 = vst [vmem:[#allocation7 + $0x110] sm:$0xf] %v4599
    %5112 = vst [vmem:[#allocation7 + $0x114] sm:$0xf] %v4600
    %5113 = vst [vmem:[#allocation7 + $0x118] sm:$0xf] %v4601
    %5114 = vst [vmem:[#allocation7 + $0x11c] sm:$0xf] %v4602
    %5115 = vst [vmem:[#allocation7 + $0x120] sm:$0xf] %v4603
    %5116 = vst [vmem:[#allocation7 + $0x124] sm:$0xf] %v4604
    %5117 = vst [vmem:[#allocation7 + $0x128] sm:$0xf] %v4605
    %5118 = vst [vmem:[#allocation7 + $0x12c] sm:$0xf] %v4606
    %5119 = vst [vmem:[#allocation7 + $0x130] sm:$0xf] %v4607
    %5120 = vst [vmem:[#allocation7 + $0x134] sm:$0xf] %v4608
    %5121 = vst [vmem:[#allocation7 + $0x138] sm:$0xf] %v4609
    %5122 = vst [vmem:[#allocation7 + $0x13c] sm:$0xf] %v4610
    %5123 = vst [vmem:[#allocation7 + $0x140] sm:$0xf] %v4611
    %5124 = vst [vmem:[#allocation7 + $0x144] sm:$0xf] %v4612
    %5125 = vst [vmem:[#allocation7 + $0x148] sm:$0xf] %v4613
    %5126 = vst [vmem:[#allocation7 + $0x14c] sm:$0xf] %v4614
    %5127 = vst [vmem:[#allocation7 + $0x150] sm:$0xf] %v4615
    %5128 = vst [vmem:[#allocation7 + $0x154] sm:$0xf] %v4616
    %5129 = vst [vmem:[#allocation7 + $0x158] sm:$0xf] %v4617
    %5130 = vst [vmem:[#allocation7 + $0x15c] sm:$0xf] %v4618
    %5131 = vst [vmem:[#allocation7 + $0x160] sm:$0xf] %v4619
    %5132 = vst [vmem:[#allocation7 + $0x164] sm:$0xf] %v4620
    %5133 = vst [vmem:[#allocation7 + $0x168] sm:$0xf] %v4621
    %5134 = vst [vmem:[#allocation7 + $0x16c] sm:$0xf] %v4622
    %5135 = vst [vmem:[#allocation7 + $0x170] sm:$0xf] %v4623
    %5136 = vst [vmem:[#allocation7 + $0x174] sm:$0xf] %v4624
    %5137 = vst [vmem:[#allocation7 + $0x178] sm:$0xf] %v4625
    %5138 = vst [vmem:[#allocation7 + $0x17c] sm:$0xf] %v4626
    %5139 = vst [vmem:[#allocation7 + $0x180] sm:$0xf] %v4627
    %5140 = vst [vmem:[#allocation7 + $0x184] sm:$0xf] %v4628
    %5141 = vst [vmem:[#allocation7 + $0x188] sm:$0xf] %v4629
    %5142 = vst [vmem:[#allocation7 + $0x18c] sm:$0xf] %v4630
    %5143 = vst [vmem:[#allocation7 + $0x190] sm:$0xf] %v4631
    %5144 = vst [vmem:[#allocation7 + $0x194] sm:$0xf] %v4632
    %5145 = vst [vmem:[#allocation7 + $0x198] sm:$0xf] %v4633
    %5146 = vst [vmem:[#allocation7 + $0x19c] sm:$0xf] %v4634
    %5147 = vst [vmem:[#allocation7 + $0x1a0] sm:$0xf] %v4635
    %5148 = vst [vmem:[#allocation7 + $0x1a4] sm:$0xf] %v4636
    %5149 = vst [vmem:[#allocation7 + $0x1a8] sm:$0xf] %v4637
    %5150 = vst [vmem:[#allocation7 + $0x1ac] sm:$0xf] %v4638
    %5151 = vst [vmem:[#allocation7 + $0x1b0] sm:$0xf] %v4639
    %5152 = vst [vmem:[#allocation7 + $0x1b4] sm:$0xf] %v4640
    %5153 = vst [vmem:[#allocation7 + $0x1b8] sm:$0xf] %v4641
    %5154 = vst [vmem:[#allocation7 + $0x1bc] sm:$0xf] %v4642
    %5155 = vst [vmem:[#allocation7 + $0x1c0] sm:$0xf] %v4643
    %5156 = vst [vmem:[#allocation7 + $0x1c4] sm:$0xf] %v4644
    %5157 = vst [vmem:[#allocation7 + $0x1c8] sm:$0xf] %v4645
    %5158 = vst [vmem:[#allocation7 + $0x1cc] sm:$0xf] %v4646
    %5159 = vst [vmem:[#allocation7 + $0x1d0] sm:$0xf] %v4647
    %5160 = vst [vmem:[#allocation7 + $0x1d4] sm:$0xf] %v4648
    %5161 = vst [vmem:[#allocation7 + $0x1d8] sm:$0xf] %v4649
    %5162 = vst [vmem:[#allocation7 + $0x1dc] sm:$0xf] %v4650
    %5163 = vst [vmem:[#allocation7 + $0x1e0] sm:$0xf] %v4651
    %5164 = vst [vmem:[#allocation7 + $0x1e4] sm:$0xf] %v4652
    %5165 = vst [vmem:[#allocation7 + $0x1e8] sm:$0xf] %v4653
    %5166 = vst [vmem:[#allocation7 + $0x1ec] sm:$0xf] %v4654
    %5167 = vst [vmem:[#allocation7 + $0x1f0] sm:$0xf] %v4655
    %5168 = vst [vmem:[#allocation7 + $0x1f4] sm:$0xf] %v4656
    %5169 = vst [vmem:[#allocation7 + $0x1f8] sm:$0xf] %v4657
    %5170 = vst [vmem:[#allocation7 + $0x1fc] sm:$0xf] %v4658
    %5171 = vst [vmem:[#allocation7 + $0x200] sm:$0xf] %v4659
    %5172 = vst [vmem:[#allocation7 + $0x204] sm:$0xf] %v4660
    %5173 = vst [vmem:[#allocation7 + $0x208] sm:$0xf] %v4661
    %5174 = vst [vmem:[#allocation7 + $0x20c] sm:$0xf] %v4662
    %5175 = vst [vmem:[#allocation7 + $0x210] sm:$0xf] %v4663
    %5176 = vst [vmem:[#allocation7 + $0x214] sm:$0xf] %v4664
    %5177 = vst [vmem:[#allocation7 + $0x218] sm:$0xf] %v4665
    %5178 = vst [vmem:[#allocation7 + $0x21c] sm:$0xf] %v4666
    %5179 = vst [vmem:[#allocation7 + $0x220] sm:$0xf] %v4667
    %5180 = vst [vmem:[#allocation7 + $0x224] sm:$0xf] %v4668
    %5181 = vst [vmem:[#allocation7 + $0x228] sm:$0xf] %v4669
    %5182 = vst [vmem:[#allocation7 + $0x22c] sm:$0xf] %v4670
    %5183 = vst [vmem:[#allocation7 + $0x230] sm:$0xf] %v4671
    %5184 = vst [vmem:[#allocation7 + $0x234] sm:$0xf] %v4672
    %5185 = vst [vmem:[#allocation7 + $0x238] sm:$0xf] %v4673
    %5186 = vst [vmem:[#allocation7 + $0x23c] sm:$0xf] %v4674
    %5187 = vst [vmem:[#allocation7 + $0x240] sm:$0xf] %v4675
    %5188 = vst [vmem:[#allocation7 + $0x244] sm:$0xf] %v4676
    %5189 = vst [vmem:[#allocation7 + $0x248] sm:$0xf] %v4677
    %5190 = vst [vmem:[#allocation7 + $0x24c] sm:$0xf] %v4678
    %5191 = vst [vmem:[#allocation7 + $0x250] sm:$0xf] %v4679
    %5192 = vst [vmem:[#allocation7 + $0x254] sm:$0xf] %v4680
    %5193 = vst [vmem:[#allocation7 + $0x258] sm:$0xf] %v4681
    %5194 = vst [vmem:[#allocation7 + $0x25c] sm:$0xf] %v4682
    %5195 = vst [vmem:[#allocation7 + $0x260] sm:$0xf] %v4683
    %5196 = vst [vmem:[#allocation7 + $0x264] sm:$0xf] %v4684
    %5197 = vst [vmem:[#allocation7 + $0x268] sm:$0xf] %v4685
    %5198 = vst [vmem:[#allocation7 + $0x26c] sm:$0xf] %v4686
    %5199 = vst [vmem:[#allocation7 + $0x270] sm:$0xf] %v4687
    %5200 = vst [vmem:[#allocation7 + $0x274] sm:$0xf] %v4688
    %5201 = vst [vmem:[#allocation7 + $0x278] sm:$0xf] %v4689
    %5202 = vst [vmem:[#allocation7 + $0x27c] sm:$0xf] %v4690
    %5203 = vst [vmem:[#allocation7 + $0x280] sm:$0xf] %v4691
    %5204 = vst [vmem:[#allocation7 + $0x284] sm:$0xf] %v4692
    %5205 = vst [vmem:[#allocation7 + $0x288] sm:$0xf] %v4693
    %5206 = vst [vmem:[#allocation7 + $0x28c] sm:$0xf] %v4694
    %5207 = vst [vmem:[#allocation7 + $0x290] sm:$0xf] %v4695
    %5208 = vst [vmem:[#allocation7 + $0x294] sm:$0xf] %v4696
    %5209 = vst [vmem:[#allocation7 + $0x298] sm:$0xf] %v4697
    %5210 = vst [vmem:[#allocation7 + $0x29c] sm:$0xf] %v4698
    %5211 = vst [vmem:[#allocation7 + $0x2a0] sm:$0xf] %v4699
    %5212 = vst [vmem:[#allocation7 + $0x2a4] sm:$0xf] %v4700
    %5213 = vst [vmem:[#allocation7 + $0x2a8] sm:$0xf] %v4701
    %5214 = vst [vmem:[#allocation7 + $0x2ac] sm:$0xf] %v4702
    %5215 = vst [vmem:[#allocation7 + $0x2b0] sm:$0xf] %v4703
    %5216 = vst [vmem:[#allocation7 + $0x2b4] sm:$0xf] %v4704
    %5217 = vst [vmem:[#allocation7 + $0x2b8] sm:$0xf] %v4705
    %5218 = vst [vmem:[#allocation7 + $0x2bc] sm:$0xf] %v4706
    %5219 = vst [vmem:[#allocation7 + $0x2c0] sm:$0xf] %v4707
    %5220 = vst [vmem:[#allocation7 + $0x2c4] sm:$0xf] %v4708
    %5221 = vst [vmem:[#allocation7 + $0x2c8] sm:$0xf] %v4709
    %5222 = vst [vmem:[#allocation7 + $0x2cc] sm:$0xf] %v4710
    %5223 = vst [vmem:[#allocation7 + $0x2d0] sm:$0xf] %v4711
    %5224 = vst [vmem:[#allocation7 + $0x2d4] sm:$0xf] %v4712
    %5225 = vst [vmem:[#allocation7 + $0x2d8] sm:$0xf] %v4713
    %5226 = vst [vmem:[#allocation7 + $0x2dc] sm:$0xf] %v4714
    %5227 = vst [vmem:[#allocation7 + $0x2e0] sm:$0xf] %v4715
    %5228 = vst [vmem:[#allocation7 + $0x2e4] sm:$0xf] %v4716
    %5229 = vst [vmem:[#allocation7 + $0x2e8] sm:$0xf] %v4717
    %5230 = vst [vmem:[#allocation7 + $0x2ec] sm:$0xf] %v4718
    %5231 = vst [vmem:[#allocation7 + $0x2f0] sm:$0xf] %v4719
    %5232 = vst [vmem:[#allocation7 + $0x2f4] sm:$0xf] %v4720
    %5233 = vst [vmem:[#allocation7 + $0x2f8] sm:$0xf] %v4721
    %5234 = vst [vmem:[#allocation7 + $0x2fc] sm:$0xf] %v4722
    %5235 = vst [vmem:[#allocation7 + $0x300] sm:$0xf] %v4723
    %5236 = vst [vmem:[#allocation7 + $0x304] sm:$0xf] %v4724
    %5237 = vst [vmem:[#allocation7 + $0x308] sm:$0xf] %v4725
    %5238 = vst [vmem:[#allocation7 + $0x30c] sm:$0xf] %v4726
    %5239 = vst [vmem:[#allocation7 + $0x310] sm:$0xf] %v4727
    %5240 = vst [vmem:[#allocation7 + $0x314] sm:$0xf] %v4728
    %5241 = vst [vmem:[#allocation7 + $0x318] sm:$0xf] %v4729
    %5242 = vst [vmem:[#allocation7 + $0x31c] sm:$0xf] %v4730
    %5243 = vst [vmem:[#allocation7 + $0x320] sm:$0xf] %v4731
    %5244 = vst [vmem:[#allocation7 + $0x324] sm:$0xf] %v4732
    %5245 = vst [vmem:[#allocation7 + $0x328] sm:$0xf] %v4733
    %5246 = vst [vmem:[#allocation7 + $0x32c] sm:$0xf] %v4734
    %5247 = vst [vmem:[#allocation7 + $0x330] sm:$0xf] %v4735
    %5248 = vst [vmem:[#allocation7 + $0x334] sm:$0xf] %v4736
    %5249 = vst [vmem:[#allocation7 + $0x338] sm:$0xf] %v4737
    %5250 = vst [vmem:[#allocation7 + $0x33c] sm:$0xf] %v4738
    %5251 = vst [vmem:[#allocation7 + $0x340] sm:$0xf] %v4739
    %5252 = vst [vmem:[#allocation7 + $0x344] sm:$0xf] %v4740
    %5253 = vst [vmem:[#allocation7 + $0x348] sm:$0xf] %v4741
    %5254 = vst [vmem:[#allocation7 + $0x34c] sm:$0xf] %v4742
    %5255 = vst [vmem:[#allocation7 + $0x350] sm:$0xf] %v4743
    %5256 = vst [vmem:[#allocation7 + $0x354] sm:$0xf] %v4744
    %5257 = vst [vmem:[#allocation7 + $0x358] sm:$0xf] %v4745
    %5258 = vst [vmem:[#allocation7 + $0x35c] sm:$0xf] %v4746
    %5259 = vst [vmem:[#allocation7 + $0x360] sm:$0xf] %v4747
    %5260 = vst [vmem:[#allocation7 + $0x364] sm:$0xf] %v4748
    %5261 = vst [vmem:[#allocation7 + $0x368] sm:$0xf] %v4749
    %5262 = vst [vmem:[#allocation7 + $0x36c] sm:$0xf] %v4750
    %5263 = vst [vmem:[#allocation7 + $0x370] sm:$0xf] %v4751
    %5264 = vst [vmem:[#allocation7 + $0x374] sm:$0xf] %v4752
    %5265 = vst [vmem:[#allocation7 + $0x378] sm:$0xf] %v4753
    %5266 = vst [vmem:[#allocation7 + $0x37c] sm:$0xf] %v4754
    %5267 = vst [vmem:[#allocation7 + $0x380] sm:$0xf] %v4755
    %5268 = vst [vmem:[#allocation7 + $0x384] sm:$0xf] %v4756
    %5269 = vst [vmem:[#allocation7 + $0x388] sm:$0xf] %v4757
    %5270 = vst [vmem:[#allocation7 + $0x38c] sm:$0xf] %v4758
    %5271 = vst [vmem:[#allocation7 + $0x390] sm:$0xf] %v4759
    %5272 = vst [vmem:[#allocation7 + $0x394] sm:$0xf] %v4760
    %5273 = vst [vmem:[#allocation7 + $0x398] sm:$0xf] %v4761
    %5274 = vst [vmem:[#allocation7 + $0x39c] sm:$0xf] %v4762
    %5275 = vst [vmem:[#allocation7 + $0x3a0] sm:$0xf] %v4763
    %5276 = vst [vmem:[#allocation7 + $0x3a4] sm:$0xf] %v4764
    %5277 = vst [vmem:[#allocation7 + $0x3a8] sm:$0xf] %v4765
    %5278 = vst [vmem:[#allocation7 + $0x3ac] sm:$0xf] %v4766
    %5279 = vst [vmem:[#allocation7 + $0x3b0] sm:$0xf] %v4767
    %5280 = vst [vmem:[#allocation7 + $0x3b4] sm:$0xf] %v4768
    %5281 = vst [vmem:[#allocation7 + $0x3b8] sm:$0xf] %v4769
    %5282 = vst [vmem:[#allocation7 + $0x3bc] sm:$0xf] %v4770
    %5283 = vst [vmem:[#allocation7 + $0x3c0] sm:$0xf] %v4771
    %5284 = vst [vmem:[#allocation7 + $0x3c4] sm:$0xf] %v4772
    %5285 = vst [vmem:[#allocation7 + $0x3c8] sm:$0xf] %v4773
    %5286 = vst [vmem:[#allocation7 + $0x3cc] sm:$0xf] %v4774
    %5287 = vst [vmem:[#allocation7 + $0x3d0] sm:$0xf] %v4775
    %5288 = vst [vmem:[#allocation7 + $0x3d4] sm:$0xf] %v4776
    %5289 = vst [vmem:[#allocation7 + $0x3d8] sm:$0xf] %v4777
    %5290 = vst [vmem:[#allocation7 + $0x3dc] sm:$0xf] %v4778
    %5291 = vst [vmem:[#allocation7 + $0x3e0] sm:$0xf] %v4779
    %5292 = vst [vmem:[#allocation7 + $0x3e4] sm:$0xf] %v4780
    %5293 = vst [vmem:[#allocation7 + $0x3e8] sm:$0xf] %v4781
    %5294 = vst [vmem:[#allocation7 + $0x3ec] sm:$0xf] %v4782
    %5295 = vst [vmem:[#allocation7 + $0x3f0] sm:$0xf] %v4783
    %5296 = vst [vmem:[#allocation7 + $0x3f4] sm:$0xf] %v4784
    %5297 = vst [vmem:[#allocation7 + $0x3f8] sm:$0xf] %v4785
    %5298 = vst [vmem:[#allocation7 + $0x3fc] sm:$0xf] %v4786
    // Predicated region
    $region26: #{tpu_custom_call.1} parent=1 // pred_check
      _
    $region27: #{tpu_custom_call.1} parent=1 // pred_check_branch
      %5300 = sbr.rel (0) target = $region29
    $region28: #{tpu_custom_call.1} parent=1 // pred_region
      %s5302 = ssub.s32 16384, 16384
      %5303 = vsyncadd [#allocation4], %s5302
      %s5304 = sshll.u32 [#allocation7], 4
      %s5305 = int_to_ptr.vmem [resolvable:$true] %s5304
      %5310 = dma.vmem_to_hbm [thread:$0]  %s5305, 16384, %s4, [#allocation4], 64, 64, 4
    $region29: #{tpu_custom_call.1} parent=1 // pred_fallthru
      _
    // Predicated region
    $region30: #{tpu_custom_call.1} parent=1 // pred_check
      _
    $region31: #{tpu_custom_call.1} parent=1 // pred_check_branch
      %5312 = sbr.rel (0) target = $region33
    $region32: #{tpu_custom_call.1} parent=1 // pred_region
      %5313 = dma.done [#allocation4], 16384
    $region33: #{tpu_custom_call.1} parent=1 // pred_fallthru
      _
    %5314 = vsyncpa [#allocation3], 1
    %5315 = vsyncpa [#allocation6], 1
    %5316 = vsyncpa [#allocation4], 1

</llo_original>
